<compile_context>
chip_gen: v5e
topology: v5e:2x2
jax: 0.10.0
libtpu: 0.0.40
codegen_flags: <defaults>
</compile_context>

<pallas_src>
import functools
import math

import jax
import jax.numpy as jnp
from jax.experimental import pallas as pl
from jax.experimental.pallas import tpu as pltpu


def encoder_layer_kernel(src_ref, mask_ref,
                         wqkv_ref, bqkv_ref,
                         wo_ref, bo_ref,
                         ln1_g_ref, ln1_b_ref,
                         w1_ref, b1_ref, w2_ref, b2_ref,
                         ln2_g_ref, ln2_b_ref,
                         out_ref,
                         *, n_heads, head_dim, eps, batch_block,
                         mxu_dtype, approx_recip):
    H = n_heads * head_dim
    inv_scale = jnp.float32(1.0 / math.sqrt(head_dim))

    # Hoist constant weight / bias loads out of the per-batch loop.
    wqkv = wqkv_ref[...]                         # (H, 3H)  mxu_dtype
    bqkv = bqkv_ref[...]                         # (1, 3H)  f32
    wo = wo_ref[...]                             # (H, H)   mxu_dtype
    bo = bo_ref[...]                             # (1, H)   f32
    g1, be1 = ln1_g_ref[...], ln1_b_ref[...]     # (1, H)
    w1, bf1 = w1_ref[...], b1_ref[...]           # (H, pf), (1, pf)
    w2, bf2 = w2_ref[...], b2_ref[...]           # (pf, H), (1, H)
    g2, be2 = ln2_g_ref[...], ln2_b_ref[...]     # (1, H)

    def layer_norm(x, g, b):
        mean = jnp.mean(x, axis=-1, keepdims=True)
        var = jnp.mean((x - mean) ** 2, axis=-1, keepdims=True)
        return (x - mean) * jax.lax.rsqrt(var + eps) * g + b

    for bidx in range(batch_block):
        src = src_ref[bidx].astype(jnp.float32)                      # (S, H)

        # Additive key bias (hoisted off the O(nh*S^2) tensor).
        key_bias = jnp.where(mask_ref[bidx] == 0.0,
                             jnp.float32(-1e10), jnp.float32(0.0))   # (1, S)

        # --- fused QKV projection (one MXU weight push, lane-dense 3H output) ---
        qkv = jnp.dot(src.astype(mxu_dtype), wqkv,
                      preferred_element_type=jnp.float32) + bqkv     # (S, 3H)
        q = qkv[:, :H] * inv_scale         # fold 1/sqrt(head_dim) into q
        k = qkv[:, H:2 * H]
        v = qkv[:, 2 * H:]

        # --- per-head attention via static lane slices (no transposes) ---
        ctx_heads = []
        for h in range(n_heads):
            sl = slice(h * head_dim, (h + 1) * head_dim)
            qh = q[:, sl].astype(mxu_dtype)
            kh = k[:, sl].astype(mxu_dtype)
            vh = v[:, sl].astype(mxu_dtype)
            # q @ k.T : contraction on the trailing axis of both operands.
            energy = jax.lax.dot_general(
                qh, kh, dimension_numbers=(((1,), (1,)), ((), ())),
                preferred_element_type=jnp.float32)                  # (S, S)
            energy = energy + key_bias
            m = jnp.max(energy, axis=-1, keepdims=True)
            p = jnp.exp(energy - m)
            denom = jnp.sum(p, axis=-1, keepdims=True)
            attn = p * pl.reciprocal(denom, approx=approx_recip)
            ctx_heads.append(jnp.dot(attn.astype(mxu_dtype), vh,
                                     preferred_element_type=jnp.float32))
        ctx = jnp.concatenate(ctx_heads, axis=-1)                    # (S, H)

        attn_out = jnp.dot(ctx.astype(mxu_dtype), wo,
                           preferred_element_type=jnp.float32) + bo

        # --- residual + LayerNorm 1 (dropout = identity) ---
        y = layer_norm(src + attn_out, g1, be1)

        # --- positionwise feedforward ---
        h1 = jnp.dot(y.astype(mxu_dtype), w1,
                     preferred_element_type=jnp.float32) + bf1
        h1 = jnp.maximum(h1, 0.0)
        ff = jnp.dot(h1.astype(mxu_dtype), w2,
                     preferred_element_type=jnp.float32) + bf2

        # --- residual + LayerNorm 2 ---
        z = layer_norm(y + ff, g2, be2)

        out_ref[bidx] = z.astype(out_ref.dtype)


def encoder_layer(src, src_mask, params, *, n_heads, mxu_dtype=jnp.bfloat16,
                  batch_block=None, eps=1e-5):
    """src: (B, S, H) float32; src_mask: (B, 1, S) float (nonzero = keep)."""
    B, S, H = src.shape
    assert H % n_heads == 0, "hid_dim must be divisible by n_heads"
    head_dim = H // n_heads
    pf_dim = params['w1'].shape[1]

    if batch_block is None:
        batch_block = 2 if (B % 2 == 0) else 1
    assert B % batch_block == 0, "batch_block must divide batch size"
    Bb = batch_block

    f32 = jnp.float32
    mxu = jnp.dtype(mxu_dtype)

    # Fused QKV weight/bias. Matmul weights stored in MXU dtype; biases / LN params stay
    # f32 (added to f32 accumulators) and are reshaped to (1, X) for lane broadcast.
    wqkv = jnp.concatenate([params['wq'], params['wk'], params['wv']], axis=1).astype(mxu)
    bqkv = jnp.concatenate([params['bq'], params['bk'], params['bv']]).reshape(1, 3 * H).astype(f32)
    wo = params['wo'].astype(mxu)
    bo = params['bo'].reshape(1, H).astype(f32)
    w1 = params['w1'].astype(mxu)
    b1 = params['b1'].reshape(1, pf_dim).astype(f32)
    w2 = params['w2'].astype(mxu)
    b2 = params['b2'].reshape(1, H).astype(f32)
    ln1_g = params['ln1_g'].reshape(1, H).astype(f32)
    ln1_b = params['ln1_b'].reshape(1, H).astype(f32)
    ln2_g = params['ln2_g'].reshape(1, H).astype(f32)
    ln2_b = params['ln2_b'].reshape(1, H).astype(f32)

    kernel = functools.partial(
        encoder_layer_kernel,
        n_heads=n_heads, head_dim=head_dim, eps=eps, batch_block=Bb,
        mxu_dtype=mxu, approx_recip=(mxu == jnp.dtype(jnp.bfloat16)))

    # Rough VMEM budget (weights single-buffered + activations), with headroom.
    w_bytes = (wqkv.size + wo.size + w1.size + w2.size) * mxu.itemsize \
        + (bqkv.size + bo.size + b1.size + b2.size
           + ln1_g.size + ln1_b.size + ln2_g.size + ln2_b.size) * 4
    act_bytes = Bb * 4 * (2 * S * H          # in/out blocks
                          + 3 * S * H        # qkv
                          + 2 * S * S        # per-head scores / probs
                          + 2 * S * H        # ctx / normed
                          + S * pf_dim)      # ffn hidden
    vmem_limit = int(min(64 << 20, max(16 << 20, 2 * (2 * w_bytes + 2 * act_bytes))))

    def run(single_buffer_weights):
        if single_buffer_weights:
            # Constant index_map across the grid -> single buffer is enough.
            def wspec(shape):
                return pl.BlockSpec(shape, lambda i: (0,) * len(shape),
                                    pipeline_mode=pl.Buffered(1))
        else:
            def wspec(shape):
                return pl.BlockSpec(shape, lambda i: (0,) * len(shape))

        in_specs = [
            pl.BlockSpec((Bb, S, H), lambda i: (i, 0, 0)),   # src
            pl.BlockSpec((Bb, 1, S), lambda i: (i, 0, 0)),   # mask
            wspec((H, 3 * H)), wspec((1, 3 * H)),            # wqkv, bqkv
            wspec((H, H)), wspec((1, H)),                    # wo, bo
            wspec((1, H)), wspec((1, H)),                    # ln1 gamma, beta
            wspec((H, pf_dim)), wspec((1, pf_dim)),          # w1, b1
            wspec((pf_dim, H)), wspec((1, H)),               # w2, b2
            wspec((1, H)), wspec((1, H)),                    # ln2 gamma, beta
        ]

        out = pl.pallas_call(
            kernel,
            out_shape=jax.ShapeDtypeStruct((B, S, H), src.dtype),
            grid_spec=pltpu.PrefetchScalarGridSpec(
                num_scalar_prefetch=0,
                grid=(B // Bb,),
                in_specs=in_specs,
                out_specs=pl.BlockSpec((Bb, S, H), lambda i: (i, 0, 0)),
            ),
            compiler_params=pltpu.CompilerParams(
                dimension_semantics=("parallel",),
                vmem_limit_bytes=vmem_limit),
        )(src, src_mask,
          wqkv, bqkv, wo, bo, ln1_g, ln1_b, w1, b1, w2, b2, ln2_g, ln2_b)
        return jax.block_until_ready(out)

    try:
        return run(single_buffer_weights=True)
    except Exception:
        # pl.Buffered(1) not supported by this jax version -> default double buffering.
        return run(single_buffer_weights=False)


def reference_encoder_layer(src, src_mask, params, *, n_heads):
    """Pure-JAX reference mirroring the PyTorch forward (dropout = identity)."""
    B, S, H = src.shape
    hd = H // n_heads
    q = src @ params['wq'] + params['bq']
    k = src @ params['wk'] + params['bk']
    v = src @ params['wv'] + params['bv']
    q = q.reshape(B, S, n_heads, hd).transpose(0, 2, 1, 3)
    k = k.reshape(B, S, n_heads, hd).transpose(0, 2, 1, 3)
    v = v.reshape(B, S, n_heads, hd).transpose(0, 2, 1, 3)
    energy = jnp.einsum('bhqd,bhkd->bhqk', q, k) / jnp.sqrt(jnp.float32(hd))
    energy = jnp.where(src_mask[:, None, :, :] == 0, -1e10, energy)
    attn = jax.nn.softmax(energy, axis=-1)
    x = jnp.einsum('bhqk,bhkd->bhqd', attn, v)
    x = x.transpose(0, 2, 1, 3).reshape(B, S, H)
    x = x @ params['wo'] + params['bo']

    def ln(y, g, b):
        m = y.mean(-1, keepdims=True)
        var = ((y - m) ** 2).mean(-1, keepdims=True)
        return (y - m) / jnp.sqrt(var + 1e-5) * g + b

    y = ln(src + x, params['ln1_g'], params['ln1_b'])
    f = jnp.maximum(y @ params['w1'] + params['b1'], 0.0) @ params['w2'] + params['b2']
    return ln(y + f, params['ln2_g'], params['ln2_b'])


if __name__ == "__main__":
    B, S, H = 2, 8, 32
    n_heads, pf_dim = 4, 64

    key = jax.random.PRNGKey(0)
    ks = jax.random.split(key, 12)

    def lin(k, fan_in, fan_out):
        return jax.random.normal(k, (fan_in, fan_out), jnp.float32) * 0.05

    params = {
        'wq': lin(ks[0], H, H), 'bq': jnp.zeros((H,), jnp.float32),
        'wk': lin(ks[1], H, H), 'bk': jnp.zeros((H,), jnp.float32),
        'wv': lin(ks[2], H, H), 'bv': jnp.zeros((H,), jnp.float32),
        'wo': lin(ks[3], H, H), 'bo': jnp.zeros((H,), jnp.float32),
        'ln1_g': jnp.ones((H,), jnp.float32), 'ln1_b': jnp.zeros((H,), jnp.float32),
        'w1': lin(ks[4], H, pf_dim), 'b1': jnp.zeros((pf_dim,), jnp.float32),
        'w2': lin(ks[5], pf_dim, H), 'b2': jnp.zeros((H,), jnp.float32),
        'ln2_g': jnp.ones((H,), jnp.float32), 'ln2_b': jnp.zeros((H,), jnp.float32),
    }

    src = jax.random.normal(ks[6], (B, S, H), jnp.float32)
    # mask out the last 2 key positions of batch element 1
    src_mask = jnp.ones((B, 1, S), jnp.float32)
    src_mask = src_mask.at[1, 0, -2:].set(0.0)

    ref = reference_encoder_layer(src, src_mask, params, n_heads=n_heads)

    # Strict structural check with f32 MXU operands.
    out_f32 = encoder_layer(src, src_mask, params, n_heads=n_heads,
                            mxu_dtype=jnp.float32)
    assert jnp.allclose(out_f32, ref, atol=1e-4, rtol=1e-4), "f32 kernel mismatch vs reference"

    # Fast path: bf16 MXU operands with f32 accumulation (looser tolerance).
    out_bf16 = encoder_layer(src, src_mask, params, n_heads=n_heads,
                             mxu_dtype=jnp.bfloat16)
    assert jnp.allclose(out_bf16, ref, atol=3e-2, rtol=3e-2), "bf16 kernel mismatch vs reference"

    print("KERNEL_OK")
</pallas_src>

<mosaic_0001>
module attributes {stable_mosaic.version = 11 : i64} {
  func.func @encoder_layer_kernel(%arg0: i32, %arg1: memref<2x8x32xf32, #tpu.memory_space<vmem>>, %arg2: memref<2x1x8xf32, #tpu.memory_space<vmem>>, %arg3: memref<32x96xf32, #tpu.memory_space<vmem>>, %arg4: memref<1x96xf32, #tpu.memory_space<vmem>>, %arg5: memref<32x32xf32, #tpu.memory_space<vmem>>, %arg6: memref<1x32xf32, #tpu.memory_space<vmem>>, %arg7: memref<1x32xf32, #tpu.memory_space<vmem>>, %arg8: memref<1x32xf32, #tpu.memory_space<vmem>>, %arg9: memref<32x64xf32, #tpu.memory_space<vmem>>, %arg10: memref<1x64xf32, #tpu.memory_space<vmem>>, %arg11: memref<64x32xf32, #tpu.memory_space<vmem>>, %arg12: memref<1x32xf32, #tpu.memory_space<vmem>>, %arg13: memref<1x32xf32, #tpu.memory_space<vmem>>, %arg14: memref<1x32xf32, #tpu.memory_space<vmem>>, %arg15: memref<2x8x32xf32, #tpu.memory_space<vmem>>) attributes {dimension_semantics = [#tpu.dimension_semantics<parallel>], iteration_bounds = array<i64: 1>, scalar_prefetch = 0 : i64, scratch_operands = 0 : i64, tpu.core_type = #tpu.core_type<tc>, window_params = [{transform_indices = @transform_0, window_bounds = array<i64: 2, 8, 32>}, {transform_indices = @transform_1, window_bounds = array<i64: 2, 1, 8>}, {pipeline_mode = #tpu.pipeline_mode<synchronous>, transform_indices = @transform_2, window_bounds = array<i64: 32, 96>}, {pipeline_mode = #tpu.pipeline_mode<synchronous>, transform_indices = @transform_3, window_bounds = array<i64: 1, 96>}, {pipeline_mode = #tpu.pipeline_mode<synchronous>, transform_indices = @transform_4, window_bounds = array<i64: 32, 32>}, {pipeline_mode = #tpu.pipeline_mode<synchronous>, transform_indices = @transform_5, window_bounds = array<i64: 1, 32>}, {pipeline_mode = #tpu.pipeline_mode<synchronous>, transform_indices = @transform_6, window_bounds = array<i64: 1, 32>}, {pipeline_mode = #tpu.pipeline_mode<synchronous>, transform_indices = @transform_7, window_bounds = array<i64: 1, 32>}, {pipeline_mode = #tpu.pipeline_mode<synchronous>, transform_indices = @transform_8, window_bounds = array<i64: 32, 64>}, {pipeline_mode = #tpu.pipeline_mode<synchronous>, transform_indices = @transform_9, window_bounds = array<i64: 1, 64>}, {pipeline_mode = #tpu.pipeline_mode<synchronous>, transform_indices = @transform_10, window_bounds = array<i64: 64, 32>}, {pipeline_mode = #tpu.pipeline_mode<synchronous>, transform_indices = @transform_11, window_bounds = array<i64: 1, 32>}, {pipeline_mode = #tpu.pipeline_mode<synchronous>, transform_indices = @transform_12, window_bounds = array<i64: 1, 32>}, {pipeline_mode = #tpu.pipeline_mode<synchronous>, transform_indices = @transform_13, window_bounds = array<i64: 1, 32>}, {transform_indices = @transform_14, window_bounds = array<i64: 2, 8, 32>}]} {
    %c0 = arith.constant 0 : index
    %c0_0 = arith.constant 0 : index
    %0 = vector.load %arg3[%c0, %c0_0] : memref<32x96xf32, #tpu.memory_space<vmem>>, vector<32x96xf32>
    %c0_1 = arith.constant 0 : index
    %c0_2 = arith.constant 0 : index
    %1 = vector.load %arg4[%c0_1, %c0_2] : memref<1x96xf32, #tpu.memory_space<vmem>>, vector<1x96xf32>
    %c0_3 = arith.constant 0 : index
    %c0_4 = arith.constant 0 : index
    %2 = vector.load %arg5[%c0_3, %c0_4] : memref<32x32xf32, #tpu.memory_space<vmem>>, vector<32x32xf32>
    %c0_5 = arith.constant 0 : index
    %c0_6 = arith.constant 0 : index
    %3 = vector.load %arg6[%c0_5, %c0_6] : memref<1x32xf32, #tpu.memory_space<vmem>>, vector<1x32xf32>
    %c0_7 = arith.constant 0 : index
    %c0_8 = arith.constant 0 : index
    %4 = vector.load %arg7[%c0_7, %c0_8] : memref<1x32xf32, #tpu.memory_space<vmem>>, vector<1x32xf32>
    %c0_9 = arith.constant 0 : index
    %c0_10 = arith.constant 0 : index
    %5 = vector.load %arg8[%c0_9, %c0_10] : memref<1x32xf32, #tpu.memory_space<vmem>>, vector<1x32xf32>
    %c0_11 = arith.constant 0 : index
    %c0_12 = arith.constant 0 : index
    %6 = vector.load %arg9[%c0_11, %c0_12] : memref<32x64xf32, #tpu.memory_space<vmem>>, vector<32x64xf32>
    %c0_13 = arith.constant 0 : index
    %c0_14 = arith.constant 0 : index
    %7 = vector.load %arg10[%c0_13, %c0_14] : memref<1x64xf32, #tpu.memory_space<vmem>>, vector<1x64xf32>
    %c0_15 = arith.constant 0 : index
    %c0_16 = arith.constant 0 : index
    %8 = vector.load %arg11[%c0_15, %c0_16] : memref<64x32xf32, #tpu.memory_space<vmem>>, vector<64x32xf32>
    %c0_17 = arith.constant 0 : index
    %c0_18 = arith.constant 0 : index
    %9 = vector.load %arg12[%c0_17, %c0_18] : memref<1x32xf32, #tpu.memory_space<vmem>>, vector<1x32xf32>
    %c0_19 = arith.constant 0 : index
    %c0_20 = arith.constant 0 : index
    %10 = vector.load %arg13[%c0_19, %c0_20] : memref<1x32xf32, #tpu.memory_space<vmem>>, vector<1x32xf32>
    %c0_21 = arith.constant 0 : index
    %c0_22 = arith.constant 0 : index
    %11 = vector.load %arg14[%c0_21, %c0_22] : memref<1x32xf32, #tpu.memory_space<vmem>>, vector<1x32xf32>
    %c0_23 = arith.constant 0 : index
    %c0_24 = arith.constant 0 : index
    %c0_25 = arith.constant 0 : index
    %12 = vector.load %arg1[%c0_23, %c0_24, %c0_25] : memref<2x8x32xf32, #tpu.memory_space<vmem>>, vector<1x8x32xf32>
    %13 = vector.shape_cast %12 : vector<1x8x32xf32> to vector<8x32xf32>
    %c0_26 = arith.constant 0 : index
    %c0_27 = arith.constant 0 : index
    %c0_28 = arith.constant 0 : index
    %14 = vector.load %arg2[%c0_26, %c0_27, %c0_28] : memref<2x1x8xf32, #tpu.memory_space<vmem>>, vector<1x1x8xf32>
    %15 = vector.shape_cast %14 : vector<1x1x8xf32> to vector<1x8xf32>
    %cst = arith.constant 0.000000e+00 : f32
    %16 = vector.broadcast %cst : f32 to vector<1x8xf32>
    %17 = arith.cmpf oeq, %15, %16 : vector<1x8xf32>
    %cst_29 = arith.constant -1.000000e+10 : f32
    %cst_30 = arith.constant 0.000000e+00 : f32
    %18 = vector.broadcast %cst_29 : f32 to vector<1x8xf32>
    %19 = vector.broadcast %cst_30 : f32 to vector<1x8xf32>
    %20 = arith.select %17, %18, %19 : vector<1x8xi1>, vector<1x8xf32>
    %cst_31 = arith.constant dense<0.000000e+00> : vector<8x96xf32>
    %21 = tpu.matmul %13, %0, %cst_31 {dimension_numbers = #tpu.dot_dimension_numbers<[1], [0], [0], [1], [0, 0, 1, 1], [], []>} : vector<8x32xf32>, vector<32x96xf32>, vector<8x96xf32> -> vector<8x96xf32>
    %22 = vector.broadcast %1 : vector<1x96xf32> to vector<8x96xf32>
    %23 = arith.addf %21, %22 : vector<8x96xf32>
    %24 = vector.extract_strided_slice %23 {offsets = [0, 0], sizes = [8, 32], strides = [1, 1]} : vector<8x96xf32> to vector<8x32xf32>
    %cst_32 = arith.constant 0.353553385 : f32
    %25 = vector.broadcast %cst_32 : f32 to vector<8x32xf32>
    %26 = arith.mulf %24, %25 : vector<8x32xf32>
    %27 = vector.extract_strided_slice %23 {offsets = [0, 32], sizes = [8, 32], strides = [1, 1]} : vector<8x96xf32> to vector<8x32xf32>
    %28 = vector.extract_strided_slice %23 {offsets = [0, 64], sizes = [8, 32], strides = [1, 1]} : vector<8x96xf32> to vector<8x32xf32>
    %29 = vector.extract_strided_slice %26 {offsets = [0, 0], sizes = [8, 8], strides = [1, 1]} : vector<8x32xf32> to vector<8x8xf32>
    %30 = vector.extract_strided_slice %27 {offsets = [0, 0], sizes = [8, 8], strides = [1, 1]} : vector<8x32xf32> to vector<8x8xf32>
    %31 = vector.extract_strided_slice %28 {offsets = [0, 0], sizes = [8, 8], strides = [1, 1]} : vector<8x32xf32> to vector<8x8xf32>
    %cst_33 = arith.constant dense<0.000000e+00> : vector<8x8xf32>
    %32 = tpu.matmul %29, %30, %cst_33 {dimension_numbers = #tpu.dot_dimension_numbers<[1], [1], [0], [0], [0, 0, 1, 0], [], []>} : vector<8x8xf32>, vector<8x8xf32>, vector<8x8xf32> -> vector<8x8xf32>
    %33 = vector.broadcast %20 : vector<1x8xf32> to vector<8x8xf32>
    %34 = arith.addf %32, %33 : vector<8x8xf32>
    %cst_34 = arith.constant dense<0xFF800000> : vector<8xf32>
    %35 = vector.multi_reduction <maximumf>, %34, %cst_34 [1] : vector<8x8xf32> to vector<8xf32>
    %36 = vector.shape_cast %35 : vector<8xf32> to vector<8x1xf32>
    %37 = vector.broadcast %36 : vector<8x1xf32> to vector<8x8xf32>
    %38 = arith.subf %34, %37 : vector<8x8xf32>
    %39 = math.exp %38 : vector<8x8xf32>
    %cst_35 = arith.constant dense<0.000000e+00> : vector<8xf32>
    %40 = vector.multi_reduction <add>, %39, %cst_35 [1] : vector<8x8xf32> to vector<8xf32>
    %41 = vector.shape_cast %40 : vector<8xf32> to vector<8x1xf32>
    %42 = tpu.reciprocal %41 : vector<8x1xf32> -> vector<8x1xf32>
    %43 = vector.broadcast %42 : vector<8x1xf32> to vector<8x8xf32>
    %44 = arith.mulf %39, %43 : vector<8x8xf32>
    %cst_36 = arith.constant dense<0.000000e+00> : vector<8x8xf32>
    %45 = tpu.matmul %44, %31, %cst_36 {dimension_numbers = #tpu.dot_dimension_numbers<[1], [0], [0], [1], [0, 0, 1, 1], [], []>} : vector<8x8xf32>, vector<8x8xf32>, vector<8x8xf32> -> vector<8x8xf32>
    %46 = vector.extract_strided_slice %26 {offsets = [0, 8], sizes = [8, 8], strides = [1, 1]} : vector<8x32xf32> to vector<8x8xf32>
    %47 = vector.extract_strided_slice %27 {offsets = [0, 8], sizes = [8, 8], strides = [1, 1]} : vector<8x32xf32> to vector<8x8xf32>
    %48 = vector.extract_strided_slice %28 {offsets = [0, 8], sizes = [8, 8], strides = [1, 1]} : vector<8x32xf32> to vector<8x8xf32>
    %cst_37 = arith.constant dense<0.000000e+00> : vector<8x8xf32>
    %49 = tpu.matmul %46, %47, %cst_37 {dimension_numbers = #tpu.dot_dimension_numbers<[1], [1], [0], [0], [0, 0, 1, 0], [], []>} : vector<8x8xf32>, vector<8x8xf32>, vector<8x8xf32> -> vector<8x8xf32>
    %50 = vector.broadcast %20 : vector<1x8xf32> to vector<8x8xf32>
    %51 = arith.addf %49, %50 : vector<8x8xf32>
    %cst_38 = arith.constant dense<0xFF800000> : vector<8xf32>
    %52 = vector.multi_reduction <maximumf>, %51, %cst_38 [1] : vector<8x8xf32> to vector<8xf32>
    %53 = vector.shape_cast %52 : vector<8xf32> to vector<8x1xf32>
    %54 = vector.broadcast %53 : vector<8x1xf32> to vector<8x8xf32>
    %55 = arith.subf %51, %54 : vector<8x8xf32>
    %56 = math.exp %55 : vector<8x8xf32>
    %cst_39 = arith.constant dense<0.000000e+00> : vector<8xf32>
    %57 = vector.multi_reduction <add>, %56, %cst_39 [1] : vector<8x8xf32> to vector<8xf32>
    %58 = vector.shape_cast %57 : vector<8xf32> to vector<8x1xf32>
    %59 = tpu.reciprocal %58 : vector<8x1xf32> -> vector<8x1xf32>
    %60 = vector.broadcast %59 : vector<8x1xf32> to vector<8x8xf32>
    %61 = arith.mulf %56, %60 : vector<8x8xf32>
    %cst_40 = arith.constant dense<0.000000e+00> : vector<8x8xf32>
    %62 = tpu.matmul %61, %48, %cst_40 {dimension_numbers = #tpu.dot_dimension_numbers<[1], [0], [0], [1], [0, 0, 1, 1], [], []>} : vector<8x8xf32>, vector<8x8xf32>, vector<8x8xf32> -> vector<8x8xf32>
    %63 = vector.extract_strided_slice %26 {offsets = [0, 16], sizes = [8, 8], strides = [1, 1]} : vector<8x32xf32> to vector<8x8xf32>
    %64 = vector.extract_strided_slice %27 {offsets = [0, 16], sizes = [8, 8], strides = [1, 1]} : vector<8x32xf32> to vector<8x8xf32>
    %65 = vector.extract_strided_slice %28 {offsets = [0, 16], sizes = [8, 8], strides = [1, 1]} : vector<8x32xf32> to vector<8x8xf32>
    %cst_41 = arith.constant dense<0.000000e+00> : vector<8x8xf32>
    %66 = tpu.matmul %63, %64, %cst_41 {dimension_numbers = #tpu.dot_dimension_numbers<[1], [1], [0], [0], [0, 0, 1, 0], [], []>} : vector<8x8xf32>, vector<8x8xf32>, vector<8x8xf32> -> vector<8x8xf32>
    %67 = vector.broadcast %20 : vector<1x8xf32> to vector<8x8xf32>
    %68 = arith.addf %66, %67 : vector<8x8xf32>
    %cst_42 = arith.constant dense<0xFF800000> : vector<8xf32>
    %69 = vector.multi_reduction <maximumf>, %68, %cst_42 [1] : vector<8x8xf32> to vector<8xf32>
    %70 = vector.shape_cast %69 : vector<8xf32> to vector<8x1xf32>
    %71 = vector.broadcast %70 : vector<8x1xf32> to vector<8x8xf32>
    %72 = arith.subf %68, %71 : vector<8x8xf32>
    %73 = math.exp %72 : vector<8x8xf32>
    %cst_43 = arith.constant dense<0.000000e+00> : vector<8xf32>
    %74 = vector.multi_reduction <add>, %73, %cst_43 [1] : vector<8x8xf32> to vector<8xf32>
    %75 = vector.shape_cast %74 : vector<8xf32> to vector<8x1xf32>
    %76 = tpu.reciprocal %75 : vector<8x1xf32> -> vector<8x1xf32>
    %77 = vector.broadcast %76 : vector<8x1xf32> to vector<8x8xf32>
    %78 = arith.mulf %73, %77 : vector<8x8xf32>
    %cst_44 = arith.constant dense<0.000000e+00> : vector<8x8xf32>
    %79 = tpu.matmul %78, %65, %cst_44 {dimension_numbers = #tpu.dot_dimension_numbers<[1], [0], [0], [1], [0, 0, 1, 1], [], []>} : vector<8x8xf32>, vector<8x8xf32>, vector<8x8xf32> -> vector<8x8xf32>
    %80 = vector.extract_strided_slice %26 {offsets = [0, 24], sizes = [8, 8], strides = [1, 1]} : vector<8x32xf32> to vector<8x8xf32>
    %81 = vector.extract_strided_slice %27 {offsets = [0, 24], sizes = [8, 8], strides = [1, 1]} : vector<8x32xf32> to vector<8x8xf32>
    %82 = vector.extract_strided_slice %28 {offsets = [0, 24], sizes = [8, 8], strides = [1, 1]} : vector<8x32xf32> to vector<8x8xf32>
    %cst_45 = arith.constant dense<0.000000e+00> : vector<8x8xf32>
    %83 = tpu.matmul %80, %81, %cst_45 {dimension_numbers = #tpu.dot_dimension_numbers<[1], [1], [0], [0], [0, 0, 1, 0], [], []>} : vector<8x8xf32>, vector<8x8xf32>, vector<8x8xf32> -> vector<8x8xf32>
    %84 = vector.broadcast %20 : vector<1x8xf32> to vector<8x8xf32>
    %85 = arith.addf %83, %84 : vector<8x8xf32>
    %cst_46 = arith.constant dense<0xFF800000> : vector<8xf32>
    %86 = vector.multi_reduction <maximumf>, %85, %cst_46 [1] : vector<8x8xf32> to vector<8xf32>
    %87 = vector.shape_cast %86 : vector<8xf32> to vector<8x1xf32>
    %88 = vector.broadcast %87 : vector<8x1xf32> to vector<8x8xf32>
    %89 = arith.subf %85, %88 : vector<8x8xf32>
    %90 = math.exp %89 : vector<8x8xf32>
    %cst_47 = arith.constant dense<0.000000e+00> : vector<8xf32>
    %91 = vector.multi_reduction <add>, %90, %cst_47 [1] : vector<8x8xf32> to vector<8xf32>
    %92 = vector.shape_cast %91 : vector<8xf32> to vector<8x1xf32>
    %93 = tpu.reciprocal %92 : vector<8x1xf32> -> vector<8x1xf32>
    %94 = vector.broadcast %93 : vector<8x1xf32> to vector<8x8xf32>
    %95 = arith.mulf %90, %94 : vector<8x8xf32>
    %cst_48 = arith.constant dense<0.000000e+00> : vector<8x8xf32>
    %96 = tpu.matmul %95, %82, %cst_48 {dimension_numbers = #tpu.dot_dimension_numbers<[1], [0], [0], [1], [0, 0, 1, 1], [], []>} : vector<8x8xf32>, vector<8x8xf32>, vector<8x8xf32> -> vector<8x8xf32>
    %97 = tpu.concatenate %45, %62, %79, %96 in 1 : vector<8x8xf32>, vector<8x8xf32>, vector<8x8xf32>, vector<8x8xf32> -> vector<8x32xf32>
    %cst_49 = arith.constant dense<0.000000e+00> : vector<8x32xf32>
    %98 = tpu.matmul %97, %2, %cst_49 {dimension_numbers = #tpu.dot_dimension_numbers<[1], [0], [0], [1], [0, 0, 1, 1], [], []>} : vector<8x32xf32>, vector<32x32xf32>, vector<8x32xf32> -> vector<8x32xf32>
    %99 = vector.broadcast %3 : vector<1x32xf32> to vector<8x32xf32>
    %100 = arith.addf %98, %99 : vector<8x32xf32>
    %101 = arith.addf %13, %100 : vector<8x32xf32>
    %cst_50 = arith.constant dense<0.000000e+00> : vector<8xf32>
    %102 = vector.multi_reduction <add>, %101, %cst_50 [1] : vector<8x32xf32> to vector<8xf32>
    %103 = vector.shape_cast %102 : vector<8xf32> to vector<8x1xf32>
    %cst_51 = arith.constant 3.200000e+01 : f32
    %104 = vector.broadcast %cst_51 : f32 to vector<8x1xf32>
    %105 = arith.divf %103, %104 : vector<8x1xf32>
    %106 = vector.broadcast %105 : vector<8x1xf32> to vector<8x32xf32>
    %107 = arith.subf %101, %106 : vector<8x32xf32>
    %108 = arith.mulf %107, %107 : vector<8x32xf32>
    %cst_52 = arith.constant dense<0.000000e+00> : vector<8xf32>
    %109 = vector.multi_reduction <add>, %108, %cst_52 [1] : vector<8x32xf32> to vector<8xf32>
    %110 = vector.shape_cast %109 : vector<8xf32> to vector<8x1xf32>
    %cst_53 = arith.constant 3.200000e+01 : f32
    %111 = vector.broadcast %cst_53 : f32 to vector<8x1xf32>
    %112 = arith.divf %110, %111 : vector<8x1xf32>
    %113 = vector.broadcast %105 : vector<8x1xf32> to vector<8x32xf32>
    %114 = arith.subf %101, %113 : vector<8x32xf32>
    %cst_54 = arith.constant 9.99999974E-6 : f32
    %115 = vector.broadcast %cst_54 : f32 to vector<8x1xf32>
    %116 = arith.addf %112, %115 : vector<8x1xf32>
    %117 = math.rsqrt %116 : vector<8x1xf32>
    %118 = vector.broadcast %117 : vector<8x1xf32> to vector<8x32xf32>
    %119 = arith.mulf %114, %118 : vector<8x32xf32>
    %120 = vector.broadcast %4 : vector<1x32xf32> to vector<8x32xf32>
    %121 = arith.mulf %119, %120 : vector<8x32xf32>
    %122 = vector.broadcast %5 : vector<1x32xf32> to vector<8x32xf32>
    %123 = arith.addf %121, %122 : vector<8x32xf32>
    %cst_55 = arith.constant dense<0.000000e+00> : vector<8x64xf32>
    %124 = tpu.matmul %123, %6, %cst_55 {dimension_numbers = #tpu.dot_dimension_numbers<[1], [0], [0], [1], [0, 0, 1, 1], [], []>} : vector<8x32xf32>, vector<32x64xf32>, vector<8x64xf32> -> vector<8x64xf32>
    %125 = vector.broadcast %7 : vector<1x64xf32> to vector<8x64xf32>
    %126 = arith.addf %124, %125 : vector<8x64xf32>
    %cst_56 = arith.constant 0.000000e+00 : f32
    %127 = vector.broadcast %cst_56 : f32 to vector<8x64xf32>
    %128 = arith.maximumf %126, %127 : vector<8x64xf32>
    %cst_57 = arith.constant dense<0.000000e+00> : vector<8x32xf32>
    %129 = tpu.matmul %128, %8, %cst_57 {dimension_numbers = #tpu.dot_dimension_numbers<[1], [0], [0], [1], [0, 0, 1, 1], [], []>} : vector<8x64xf32>, vector<64x32xf32>, vector<8x32xf32> -> vector<8x32xf32>
    %130 = vector.broadcast %9 : vector<1x32xf32> to vector<8x32xf32>
    %131 = arith.addf %129, %130 : vector<8x32xf32>
    %132 = arith.addf %123, %131 : vector<8x32xf32>
    %cst_58 = arith.constant dense<0.000000e+00> : vector<8xf32>
    %133 = vector.multi_reduction <add>, %132, %cst_58 [1] : vector<8x32xf32> to vector<8xf32>
    %134 = vector.shape_cast %133 : vector<8xf32> to vector<8x1xf32>
    %cst_59 = arith.constant 3.200000e+01 : f32
    %135 = vector.broadcast %cst_59 : f32 to vector<8x1xf32>
    %136 = arith.divf %134, %135 : vector<8x1xf32>
    %137 = vector.broadcast %136 : vector<8x1xf32> to vector<8x32xf32>
    %138 = arith.subf %132, %137 : vector<8x32xf32>
    %139 = arith.mulf %138, %138 : vector<8x32xf32>
    %cst_60 = arith.constant dense<0.000000e+00> : vector<8xf32>
    %140 = vector.multi_reduction <add>, %139, %cst_60 [1] : vector<8x32xf32> to vector<8xf32>
    %141 = vector.shape_cast %140 : vector<8xf32> to vector<8x1xf32>
    %cst_61 = arith.constant 3.200000e+01 : f32
    %142 = vector.broadcast %cst_61 : f32 to vector<8x1xf32>
    %143 = arith.divf %141, %142 : vector<8x1xf32>
    %144 = vector.broadcast %136 : vector<8x1xf32> to vector<8x32xf32>
    %145 = arith.subf %132, %144 : vector<8x32xf32>
    %cst_62 = arith.constant 9.99999974E-6 : f32
    %146 = vector.broadcast %cst_62 : f32 to vector<8x1xf32>
    %147 = arith.addf %143, %146 : vector<8x1xf32>
    %148 = math.rsqrt %147 : vector<8x1xf32>
    %149 = vector.broadcast %148 : vector<8x1xf32> to vector<8x32xf32>
    %150 = arith.mulf %145, %149 : vector<8x32xf32>
    %151 = vector.broadcast %10 : vector<1x32xf32> to vector<8x32xf32>
    %152 = arith.mulf %150, %151 : vector<8x32xf32>
    %153 = vector.broadcast %11 : vector<1x32xf32> to vector<8x32xf32>
    %154 = arith.addf %152, %153 : vector<8x32xf32>
    %c0_63 = arith.constant 0 : index
    %c0_64 = arith.constant 0 : index
    %c0_65 = arith.constant 0 : index
    %155 = vector.load %arg15[%c0_63, %c0_64, %c0_65] : memref<2x8x32xf32, #tpu.memory_space<vmem>>, vector<1x8x32xf32>
    %156 = vector.shape_cast %155 : vector<1x8x32xf32> to vector<8x32xf32>
    %157 = vector.shape_cast %154 : vector<8x32xf32> to vector<1x8x32xf32>
    tpu.vector_store %arg15[%c0_63, %c0_64, %c0_65], %157 {strides = array<i32>} : memref<2x8x32xf32, #tpu.memory_space<vmem>>, vector<1x8x32xf32>,
    %c1 = arith.constant 1 : index
    %c0_66 = arith.constant 0 : index
    %c0_67 = arith.constant 0 : index
    %158 = vector.load %arg1[%c1, %c0_66, %c0_67] : memref<2x8x32xf32, #tpu.memory_space<vmem>>, vector<1x8x32xf32>
    %159 = vector.shape_cast %158 : vector<1x8x32xf32> to vector<8x32xf32>
    %c1_68 = arith.constant 1 : index
    %c0_69 = arith.constant 0 : index
    %c0_70 = arith.constant 0 : index
    %160 = vector.load %arg2[%c1_68, %c0_69, %c0_70] : memref<2x1x8xf32, #tpu.memory_space<vmem>>, vector<1x1x8xf32>
    %161 = vector.shape_cast %160 : vector<1x1x8xf32> to vector<1x8xf32>
    %cst_71 = arith.constant 0.000000e+00 : f32
    %162 = vector.broadcast %cst_71 : f32 to vector<1x8xf32>
    %163 = arith.cmpf oeq, %161, %162 : vector<1x8xf32>
    %cst_72 = arith.constant -1.000000e+10 : f32
    %cst_73 = arith.constant 0.000000e+00 : f32
    %164 = vector.broadcast %cst_72 : f32 to vector<1x8xf32>
    %165 = vector.broadcast %cst_73 : f32 to vector<1x8xf32>
    %166 = arith.select %163, %164, %165 : vector<1x8xi1>, vector<1x8xf32>
    %cst_74 = arith.constant dense<0.000000e+00> : vector<8x96xf32>
    %167 = tpu.matmul %159, %0, %cst_74 {dimension_numbers = #tpu.dot_dimension_numbers<[1], [0], [0], [1], [0, 0, 1, 1], [], []>} : vector<8x32xf32>, vector<32x96xf32>, vector<8x96xf32> -> vector<8x96xf32>
    %168 = vector.broadcast %1 : vector<1x96xf32> to vector<8x96xf32>
    %169 = arith.addf %167, %168 : vector<8x96xf32>
    %170 = vector.extract_strided_slice %169 {offsets = [0, 0], sizes = [8, 32], strides = [1, 1]} : vector<8x96xf32> to vector<8x32xf32>
    %cst_75 = arith.constant 0.353553385 : f32
    %171 = vector.broadcast %cst_75 : f32 to vector<8x32xf32>
    %172 = arith.mulf %170, %171 : vector<8x32xf32>
    %173 = vector.extract_strided_slice %169 {offsets = [0, 32], sizes = [8, 32], strides = [1, 1]} : vector<8x96xf32> to vector<8x32xf32>
    %174 = vector.extract_strided_slice %169 {offsets = [0, 64], sizes = [8, 32], strides = [1, 1]} : vector<8x96xf32> to vector<8x32xf32>
    %175 = vector.extract_strided_slice %172 {offsets = [0, 0], sizes = [8, 8], strides = [1, 1]} : vector<8x32xf32> to vector<8x8xf32>
    %176 = vector.extract_strided_slice %173 {offsets = [0, 0], sizes = [8, 8], strides = [1, 1]} : vector<8x32xf32> to vector<8x8xf32>
    %177 = vector.extract_strided_slice %174 {offsets = [0, 0], sizes = [8, 8], strides = [1, 1]} : vector<8x32xf32> to vector<8x8xf32>
    %cst_76 = arith.constant dense<0.000000e+00> : vector<8x8xf32>
    %178 = tpu.matmul %175, %176, %cst_76 {dimension_numbers = #tpu.dot_dimension_numbers<[1], [1], [0], [0], [0, 0, 1, 0], [], []>} : vector<8x8xf32>, vector<8x8xf32>, vector<8x8xf32> -> vector<8x8xf32>
    %179 = vector.broadcast %166 : vector<1x8xf32> to vector<8x8xf32>
    %180 = arith.addf %178, %179 : vector<8x8xf32>
    %cst_77 = arith.constant dense<0xFF800000> : vector<8xf32>
    %181 = vector.multi_reduction <maximumf>, %180, %cst_77 [1] : vector<8x8xf32> to vector<8xf32>
    %182 = vector.shape_cast %181 : vector<8xf32> to vector<8x1xf32>
    %183 = vector.broadcast %182 : vector<8x1xf32> to vector<8x8xf32>
    %184 = arith.subf %180, %183 : vector<8x8xf32>
    %185 = math.exp %184 : vector<8x8xf32>
    %cst_78 = arith.constant dense<0.000000e+00> : vector<8xf32>
    %186 = vector.multi_reduction <add>, %185, %cst_78 [1] : vector<8x8xf32> to vector<8xf32>
    %187 = vector.shape_cast %186 : vector<8xf32> to vector<8x1xf32>
    %188 = tpu.reciprocal %187 : vector<8x1xf32> -> vector<8x1xf32>
    %189 = vector.broadcast %188 : vector<8x1xf32> to vector<8x8xf32>
    %190 = arith.mulf %185, %189 : vector<8x8xf32>
    %cst_79 = arith.constant dense<0.000000e+00> : vector<8x8xf32>
    %191 = tpu.matmul %190, %177, %cst_79 {dimension_numbers = #tpu.dot_dimension_numbers<[1], [0], [0], [1], [0, 0, 1, 1], [], []>} : vector<8x8xf32>, vector<8x8xf32>, vector<8x8xf32> -> vector<8x8xf32>
    %192 = vector.extract_strided_slice %172 {offsets = [0, 8], sizes = [8, 8], strides = [1, 1]} : vector<8x32xf32> to vector<8x8xf32>
    %193 = vector.extract_strided_slice %173 {offsets = [0, 8], sizes = [8, 8], strides = [1, 1]} : vector<8x32xf32> to vector<8x8xf32>
    %194 = vector.extract_strided_slice %174 {offsets = [0, 8], sizes = [8, 8], strides = [1, 1]} : vector<8x32xf32> to vector<8x8xf32>
    %cst_80 = arith.constant dense<0.000000e+00> : vector<8x8xf32>
    %195 = tpu.matmul %192, %193, %cst_80 {dimension_numbers = #tpu.dot_dimension_numbers<[1], [1], [0], [0], [0, 0, 1, 0], [], []>} : vector<8x8xf32>, vector<8x8xf32>, vector<8x8xf32> -> vector<8x8xf32>
    %196 = vector.broadcast %166 : vector<1x8xf32> to vector<8x8xf32>
    %197 = arith.addf %195, %196 : vector<8x8xf32>
    %cst_81 = arith.constant dense<0xFF800000> : vector<8xf32>
    %198 = vector.multi_reduction <maximumf>, %197, %cst_81 [1] : vector<8x8xf32> to vector<8xf32>
    %199 = vector.shape_cast %198 : vector<8xf32> to vector<8x1xf32>
    %200 = vector.broadcast %199 : vector<8x1xf32> to vector<8x8xf32>
    %201 = arith.subf %197, %200 : vector<8x8xf32>
    %202 = math.exp %201 : vector<8x8xf32>
    %cst_82 = arith.constant dense<0.000000e+00> : vector<8xf32>
    %203 = vector.multi_reduction <add>, %202, %cst_82 [1] : vector<8x8xf32> to vector<8xf32>
    %204 = vector.shape_cast %203 : vector<8xf32> to vector<8x1xf32>
    %205 = tpu.reciprocal %204 : vector<8x1xf32> -> vector<8x1xf32>
    %206 = vector.broadcast %205 : vector<8x1xf32> to vector<8x8xf32>
    %207 = arith.mulf %202, %206 : vector<8x8xf32>
    %cst_83 = arith.constant dense<0.000000e+00> : vector<8x8xf32>
    %208 = tpu.matmul %207, %194, %cst_83 {dimension_numbers = #tpu.dot_dimension_numbers<[1], [0], [0], [1], [0, 0, 1, 1], [], []>} : vector<8x8xf32>, vector<8x8xf32>, vector<8x8xf32> -> vector<8x8xf32>
    %209 = vector.extract_strided_slice %172 {offsets = [0, 16], sizes = [8, 8], strides = [1, 1]} : vector<8x32xf32> to vector<8x8xf32>
    %210 = vector.extract_strided_slice %173 {offsets = [0, 16], sizes = [8, 8], strides = [1, 1]} : vector<8x32xf32> to vector<8x8xf32>
    %211 = vector.extract_strided_slice %174 {offsets = [0, 16], sizes = [8, 8], strides = [1, 1]} : vector<8x32xf32> to vector<8x8xf32>
    %cst_84 = arith.constant dense<0.000000e+00> : vector<8x8xf32>
    %212 = tpu.matmul %209, %210, %cst_84 {dimension_numbers = #tpu.dot_dimension_numbers<[1], [1], [0], [0], [0, 0, 1, 0], [], []>} : vector<8x8xf32>, vector<8x8xf32>, vector<8x8xf32> -> vector<8x8xf32>
    %213 = vector.broadcast %166 : vector<1x8xf32> to vector<8x8xf32>
    %214 = arith.addf %212, %213 : vector<8x8xf32>
    %cst_85 = arith.constant dense<0xFF800000> : vector<8xf32>
    %215 = vector.multi_reduction <maximumf>, %214, %cst_85 [1] : vector<8x8xf32> to vector<8xf32>
    %216 = vector.shape_cast %215 : vector<8xf32> to vector<8x1xf32>
    %217 = vector.broadcast %216 : vector<8x1xf32> to vector<8x8xf32>
    %218 = arith.subf %214, %217 : vector<8x8xf32>
    %219 = math.exp %218 : vector<8x8xf32>
    %cst_86 = arith.constant dense<0.000000e+00> : vector<8xf32>
    %220 = vector.multi_reduction <add>, %219, %cst_86 [1] : vector<8x8xf32> to vector<8xf32>
    %221 = vector.shape_cast %220 : vector<8xf32> to vector<8x1xf32>
    %222 = tpu.reciprocal %221 : vector<8x1xf32> -> vector<8x1xf32>
    %223 = vector.broadcast %222 : vector<8x1xf32> to vector<8x8xf32>
    %224 = arith.mulf %219, %223 : vector<8x8xf32>
    %cst_87 = arith.constant dense<0.000000e+00> : vector<8x8xf32>
    %225 = tpu.matmul %224, %211, %cst_87 {dimension_numbers = #tpu.dot_dimension_numbers<[1], [0], [0], [1], [0, 0, 1, 1], [], []>} : vector<8x8xf32>, vector<8x8xf32>, vector<8x8xf32> -> vector<8x8xf32>
    %226 = vector.extract_strided_slice %172 {offsets = [0, 24], sizes = [8, 8], strides = [1, 1]} : vector<8x32xf32> to vector<8x8xf32>
    %227 = vector.extract_strided_slice %173 {offsets = [0, 24], sizes = [8, 8], strides = [1, 1]} : vector<8x32xf32> to vector<8x8xf32>
    %228 = vector.extract_strided_slice %174 {offsets = [0, 24], sizes = [8, 8], strides = [1, 1]} : vector<8x32xf32> to vector<8x8xf32>
    %cst_88 = arith.constant dense<0.000000e+00> : vector<8x8xf32>
    %229 = tpu.matmul %226, %227, %cst_88 {dimension_numbers = #tpu.dot_dimension_numbers<[1], [1], [0], [0], [0, 0, 1, 0], [], []>} : vector<8x8xf32>, vector<8x8xf32>, vector<8x8xf32> -> vector<8x8xf32>
    %230 = vector.broadcast %166 : vector<1x8xf32> to vector<8x8xf32>
    %231 = arith.addf %229, %230 : vector<8x8xf32>
    %cst_89 = arith.constant dense<0xFF800000> : vector<8xf32>
    %232 = vector.multi_reduction <maximumf>, %231, %cst_89 [1] : vector<8x8xf32> to vector<8xf32>
    %233 = vector.shape_cast %232 : vector<8xf32> to vector<8x1xf32>
    %234 = vector.broadcast %233 : vector<8x1xf32> to vector<8x8xf32>
    %235 = arith.subf %231, %234 : vector<8x8xf32>
    %236 = math.exp %235 : vector<8x8xf32>
    %cst_90 = arith.constant dense<0.000000e+00> : vector<8xf32>
    %237 = vector.multi_reduction <add>, %236, %cst_90 [1] : vector<8x8xf32> to vector<8xf32>
    %238 = vector.shape_cast %237 : vector<8xf32> to vector<8x1xf32>
    %239 = tpu.reciprocal %238 : vector<8x1xf32> -> vector<8x1xf32>
    %240 = vector.broadcast %239 : vector<8x1xf32> to vector<8x8xf32>
    %241 = arith.mulf %236, %240 : vector<8x8xf32>
    %cst_91 = arith.constant dense<0.000000e+00> : vector<8x8xf32>
    %242 = tpu.matmul %241, %228, %cst_91 {dimension_numbers = #tpu.dot_dimension_numbers<[1], [0], [0], [1], [0, 0, 1, 1], [], []>} : vector<8x8xf32>, vector<8x8xf32>, vector<8x8xf32> -> vector<8x8xf32>
    %243 = tpu.concatenate %191, %208, %225, %242 in 1 : vector<8x8xf32>, vector<8x8xf32>, vector<8x8xf32>, vector<8x8xf32> -> vector<8x32xf32>
    %cst_92 = arith.constant dense<0.000000e+00> : vector<8x32xf32>
    %244 = tpu.matmul %243, %2, %cst_92 {dimension_numbers = #tpu.dot_dimension_numbers<[1], [0], [0], [1], [0, 0, 1, 1], [], []>} : vector<8x32xf32>, vector<32x32xf32>, vector<8x32xf32> -> vector<8x32xf32>
    %245 = vector.broadcast %3 : vector<1x32xf32> to vector<8x32xf32>
    %246 = arith.addf %244, %245 : vector<8x32xf32>
    %247 = arith.addf %159, %246 : vector<8x32xf32>
    %cst_93 = arith.constant dense<0.000000e+00> : vector<8xf32>
    %248 = vector.multi_reduction <add>, %247, %cst_93 [1] : vector<8x32xf32> to vector<8xf32>
    %249 = vector.shape_cast %248 : vector<8xf32> to vector<8x1xf32>
    %cst_94 = arith.constant 3.200000e+01 : f32
    %250 = vector.broadcast %cst_94 : f32 to vector<8x1xf32>
    %251 = arith.divf %249, %250 : vector<8x1xf32>
    %252 = vector.broadcast %251 : vector<8x1xf32> to vector<8x32xf32>
    %253 = arith.subf %247, %252 : vector<8x32xf32>
    %254 = arith.mulf %253, %253 : vector<8x32xf32>
    %cst_95 = arith.constant dense<0.000000e+00> : vector<8xf32>
    %255 = vector.multi_reduction <add>, %254, %cst_95 [1] : vector<8x32xf32> to vector<8xf32>
    %256 = vector.shape_cast %255 : vector<8xf32> to vector<8x1xf32>
    %cst_96 = arith.constant 3.200000e+01 : f32
    %257 = vector.broadcast %cst_96 : f32 to vector<8x1xf32>
    %258 = arith.divf %256, %257 : vector<8x1xf32>
    %259 = vector.broadcast %251 : vector<8x1xf32> to vector<8x32xf32>
    %260 = arith.subf %247, %259 : vector<8x32xf32>
    %cst_97 = arith.constant 9.99999974E-6 : f32
    %261 = vector.broadcast %cst_97 : f32 to vector<8x1xf32>
    %262 = arith.addf %258, %261 : vector<8x1xf32>
    %263 = math.rsqrt %262 : vector<8x1xf32>
    %264 = vector.broadcast %263 : vector<8x1xf32> to vector<8x32xf32>
    %265 = arith.mulf %260, %264 : vector<8x32xf32>
    %266 = vector.broadcast %4 : vector<1x32xf32> to vector<8x32xf32>
    %267 = arith.mulf %265, %266 : vector<8x32xf32>
    %268 = vector.broadcast %5 : vector<1x32xf32> to vector<8x32xf32>
    %269 = arith.addf %267, %268 : vector<8x32xf32>
    %cst_98 = arith.constant dense<0.000000e+00> : vector<8x64xf32>
    %270 = tpu.matmul %269, %6, %cst_98 {dimension_numbers = #tpu.dot_dimension_numbers<[1], [0], [0], [1], [0, 0, 1, 1], [], []>} : vector<8x32xf32>, vector<32x64xf32>, vector<8x64xf32> -> vector<8x64xf32>
    %271 = vector.broadcast %7 : vector<1x64xf32> to vector<8x64xf32>
    %272 = arith.addf %270, %271 : vector<8x64xf32>
    %cst_99 = arith.constant 0.000000e+00 : f32
    %273 = vector.broadcast %cst_99 : f32 to vector<8x64xf32>
    %274 = arith.maximumf %272, %273 : vector<8x64xf32>
    %cst_100 = arith.constant dense<0.000000e+00> : vector<8x32xf32>
    %275 = tpu.matmul %274, %8, %cst_100 {dimension_numbers = #tpu.dot_dimension_numbers<[1], [0], [0], [1], [0, 0, 1, 1], [], []>} : vector<8x64xf32>, vector<64x32xf32>, vector<8x32xf32> -> vector<8x32xf32>
    %276 = vector.broadcast %9 : vector<1x32xf32> to vector<8x32xf32>
    %277 = arith.addf %275, %276 : vector<8x32xf32>
    %278 = arith.addf %269, %277 : vector<8x32xf32>
    %cst_101 = arith.constant dense<0.000000e+00> : vector<8xf32>
    %279 = vector.multi_reduction <add>, %278, %cst_101 [1] : vector<8x32xf32> to vector<8xf32>
    %280 = vector.shape_cast %279 : vector<8xf32> to vector<8x1xf32>
    %cst_102 = arith.constant 3.200000e+01 : f32
    %281 = vector.broadcast %cst_102 : f32 to vector<8x1xf32>
    %282 = arith.divf %280, %281 : vector<8x1xf32>
    %283 = vector.broadcast %282 : vector<8x1xf32> to vector<8x32xf32>
    %284 = arith.subf %278, %283 : vector<8x32xf32>
    %285 = arith.mulf %284, %284 : vector<8x32xf32>
    %cst_103 = arith.constant dense<0.000000e+00> : vector<8xf32>
    %286 = vector.multi_reduction <add>, %285, %cst_103 [1] : vector<8x32xf32> to vector<8xf32>
    %287 = vector.shape_cast %286 : vector<8xf32> to vector<8x1xf32>
    %cst_104 = arith.constant 3.200000e+01 : f32
    %288 = vector.broadcast %cst_104 : f32 to vector<8x1xf32>
    %289 = arith.divf %287, %288 : vector<8x1xf32>
    %290 = vector.broadcast %282 : vector<8x1xf32> to vector<8x32xf32>
    %291 = arith.subf %278, %290 : vector<8x32xf32>
    %cst_105 = arith.constant 9.99999974E-6 : f32
    %292 = vector.broadcast %cst_105 : f32 to vector<8x1xf32>
    %293 = arith.addf %289, %292 : vector<8x1xf32>
    %294 = math.rsqrt %293 : vector<8x1xf32>
    %295 = vector.broadcast %294 : vector<8x1xf32> to vector<8x32xf32>
    %296 = arith.mulf %291, %295 : vector<8x32xf32>
    %297 = vector.broadcast %10 : vector<1x32xf32> to vector<8x32xf32>
    %298 = arith.mulf %296, %297 : vector<8x32xf32>
    %299 = vector.broadcast %11 : vector<1x32xf32> to vector<8x32xf32>
    %300 = arith.addf %298, %299 : vector<8x32xf32>
    %c1_106 = arith.constant 1 : index
    %c0_107 = arith.constant 0 : index
    %c0_108 = arith.constant 0 : index
    %301 = vector.load %arg15[%c1_106, %c0_107, %c0_108] : memref<2x8x32xf32, #tpu.memory_space<vmem>>, vector<1x8x32xf32>
    %302 = vector.shape_cast %301 : vector<1x8x32xf32> to vector<8x32xf32>
    %303 = vector.shape_cast %300 : vector<8x32xf32> to vector<1x8x32xf32>
    tpu.vector_store %arg15[%c1_106, %c0_107, %c0_108], %303 {strides = array<i32>} : memref<2x8x32xf32, #tpu.memory_space<vmem>>, vector<1x8x32xf32>,
    return
  }
  func.func @transform_0(%arg0: i32) -> (i32, i32, i32) {
    %c0_i32 = arith.constant 0 : i32
    %c0_i32_0 = arith.constant 0 : i32
    %c0_i32_1 = arith.constant 0 : i32
    return %arg0, %c0_i32, %c0_i32_0 : i32, i32, i32
  }
  func.func @transform_1(%arg0: i32) -> (i32, i32, i32) {
    %c0_i32 = arith.constant 0 : i32
    %c0_i32_0 = arith.constant 0 : i32
    %c0_i32_1 = arith.constant 0 : i32
    return %arg0, %c0_i32, %c0_i32_0 : i32, i32, i32
  }
  func.func @transform_2(%arg0: i32) -> (i32, i32) {
    %c0_i32 = arith.constant 0 : i32
    %c0_i32_0 = arith.constant 0 : i32
    %c0_i32_1 = arith.constant 0 : i32
    return %c0_i32, %c0_i32_0 : i32, i32
  }
  func.func @transform_3(%arg0: i32) -> (i32, i32) {
    %c0_i32 = arith.constant 0 : i32
    %c0_i32_0 = arith.constant 0 : i32
    %c0_i32_1 = arith.constant 0 : i32
    return %c0_i32, %c0_i32_0 : i32, i32
  }
  func.func @transform_4(%arg0: i32) -> (i32, i32) {
    %c0_i32 = arith.constant 0 : i32
    %c0_i32_0 = arith.constant 0 : i32
    %c0_i32_1 = arith.constant 0 : i32
    return %c0_i32, %c0_i32_0 : i32, i32
  }
  func.func @transform_5(%arg0: i32) -> (i32, i32) {
    %c0_i32 = arith.constant 0 : i32
    %c0_i32_0 = arith.constant 0 : i32
    %c0_i32_1 = arith.constant 0 : i32
    return %c0_i32, %c0_i32_0 : i32, i32
  }
  func.func @transform_6(%arg0: i32) -> (i32, i32) {
    %c0_i32 = arith.constant 0 : i32
    %c0_i32_0 = arith.constant 0 : i32
    %c0_i32_1 = arith.constant 0 : i32
    return %c0_i32, %c0_i32_0 : i32, i32
  }
  func.func @transform_7(%arg0: i32) -> (i32, i32) {
    %c0_i32 = arith.constant 0 : i32
    %c0_i32_0 = arith.constant 0 : i32
    %c0_i32_1 = arith.constant 0 : i32
    return %c0_i32, %c0_i32_0 : i32, i32
  }
  func.func @transform_8(%arg0: i32) -> (i32, i32) {
    %c0_i32 = arith.constant 0 : i32
    %c0_i32_0 = arith.constant 0 : i32
    %c0_i32_1 = arith.constant 0 : i32
    return %c0_i32, %c0_i32_0 : i32, i32
  }
  func.func @transform_9(%arg0: i32) -> (i32, i32) {
    %c0_i32 = arith.constant 0 : i32
    %c0_i32_0 = arith.constant 0 : i32
    %c0_i32_1 = arith.constant 0 : i32
    return %c0_i32, %c0_i32_0 : i32, i32
  }
  func.func @transform_10(%arg0: i32) -> (i32, i32) {
    %c0_i32 = arith.constant 0 : i32
    %c0_i32_0 = arith.constant 0 : i32
    %c0_i32_1 = arith.constant 0 : i32
    return %c0_i32, %c0_i32_0 : i32, i32
  }
  func.func @transform_11(%arg0: i32) -> (i32, i32) {
    %c0_i32 = arith.constant 0 : i32
    %c0_i32_0 = arith.constant 0 : i32
    %c0_i32_1 = arith.constant 0 : i32
    return %c0_i32, %c0_i32_0 : i32, i32
  }
  func.func @transform_12(%arg0: i32) -> (i32, i32) {
    %c0_i32 = arith.constant 0 : i32
    %c0_i32_0 = arith.constant 0 : i32
    %c0_i32_1 = arith.constant 0 : i32
    return %c0_i32, %c0_i32_0 : i32, i32
  }
  func.func @transform_13(%arg0: i32) -> (i32, i32) {
    %c0_i32 = arith.constant 0 : i32
    %c0_i32_0 = arith.constant 0 : i32
    %c0_i32_1 = arith.constant 0 : i32
    return %c0_i32, %c0_i32_0 : i32, i32
  }
  func.func @transform_14(%arg0: i32) -> (i32, i32, i32) {
    %c0_i32 = arith.constant 0 : i32
    %c0_i32_0 = arith.constant 0 : i32
    %c0_i32_1 = arith.constant 0 : i32
    return %arg0, %c0_i32, %c0_i32_0 : i32, i32, i32
  }
}

module attributes {stable_mosaic.version = 11 : i64} {
  func.func @encoder_layer_kernel(%arg0: i32, %arg1: memref<2x8x32xf32, #tpu.memory_space<vmem>>, %arg2: memref<2x1x8xf32, #tpu.memory_space<vmem>>, %arg3: memref<32x96xf32, #tpu.memory_space<vmem>>, %arg4: memref<1x96xf32, #tpu.memory_space<vmem>>, %arg5: memref<32x32xf32, #tpu.memory_space<vmem>>, %arg6: memref<1x32xf32, #tpu.memory_space<vmem>>, %arg7: memref<1x32xf32, #tpu.memory_space<vmem>>, %arg8: memref<1x32xf32, #tpu.memory_space<vmem>>, %arg9: memref<32x64xf32, #tpu.memory_space<vmem>>, %arg10: memref<1x64xf32, #tpu.memory_space<vmem>>, %arg11: memref<64x32xf32, #tpu.memory_space<vmem>>, %arg12: memref<1x32xf32, #tpu.memory_space<vmem>>, %arg13: memref<1x32xf32, #tpu.memory_space<vmem>>, %arg14: memref<1x32xf32, #tpu.memory_space<vmem>>, %arg15: memref<2x8x32xf32, #tpu.memory_space<vmem>>) attributes {dimension_semantics = [#tpu.dimension_semantics<parallel>], iteration_bounds = array<i64: 1>, scalar_prefetch = 0 : i64, scratch_operands = 0 : i64, tpu.core_type = #tpu.core_type<tc>, window_params = [{transform_indices = @transform_0, window_bounds = array<i64: 2, 8, 32>}, {transform_indices = @transform_1, window_bounds = array<i64: 2, 1, 8>}, {pipeline_mode = #tpu.pipeline_mode<synchronous>, transform_indices = @transform_2, window_bounds = array<i64: 32, 96>}, {pipeline_mode = #tpu.pipeline_mode<synchronous>, transform_indices = @transform_3, window_bounds = array<i64: 1, 96>}, {pipeline_mode = #tpu.pipeline_mode<synchronous>, transform_indices = @transform_4, window_bounds = array<i64: 32, 32>}, {pipeline_mode = #tpu.pipeline_mode<synchronous>, transform_indices = @transform_5, window_bounds = array<i64: 1, 32>}, {pipeline_mode = #tpu.pipeline_mode<synchronous>, transform_indices = @transform_6, window_bounds = array<i64: 1, 32>}, {pipeline_mode = #tpu.pipeline_mode<synchronous>, transform_indices = @transform_7, window_bounds = array<i64: 1, 32>}, {pipeline_mode = #tpu.pipeline_mode<synchronous>, transform_indices = @transform_8, window_bounds = array<i64: 32, 64>}, {pipeline_mode = #tpu.pipeline_mode<synchronous>, transform_indices = @transform_9, window_bounds = array<i64: 1, 64>}, {pipeline_mode = #tpu.pipeline_mode<synchronous>, transform_indices = @transform_10, window_bounds = array<i64: 64, 32>}, {pipeline_mode = #tpu.pipeline_mode<synchronous>, transform_indices = @transform_11, window_bounds = array<i64: 1, 32>}, {pipeline_mode = #tpu.pipeline_mode<synchronous>, transform_indices = @transform_12, window_bounds = array<i64: 1, 32>}, {pipeline_mode = #tpu.pipeline_mode<synchronous>, transform_indices = @transform_13, window_bounds = array<i64: 1, 32>}, {transform_indices = @transform_14, window_bounds = array<i64: 2, 8, 32>}]} {
    %c0 = arith.constant 0 : index
    %c0_0 = arith.constant 0 : index
    %0 = vector.load %arg3[%c0, %c0_0] : memref<32x96xf32, #tpu.memory_space<vmem>>, vector<32x96xf32>
    %c0_1 = arith.constant 0 : index
    %c0_2 = arith.constant 0 : index
    %1 = vector.load %arg4[%c0_1, %c0_2] : memref<1x96xf32, #tpu.memory_space<vmem>>, vector<1x96xf32>
    %c0_3 = arith.constant 0 : index
    %c0_4 = arith.constant 0 : index
    %2 = vector.load %arg5[%c0_3, %c0_4] : memref<32x32xf32, #tpu.memory_space<vmem>>, vector<32x32xf32>
    %c0_5 = arith.constant 0 : index
    %c0_6 = arith.constant 0 : index
    %3 = vector.load %arg6[%c0_5, %c0_6] : memref<1x32xf32, #tpu.memory_space<vmem>>, vector<1x32xf32>
    %c0_7 = arith.constant 0 : index
    %c0_8 = arith.constant 0 : index
    %4 = vector.load %arg7[%c0_7, %c0_8] : memref<1x32xf32, #tpu.memory_space<vmem>>, vector<1x32xf32>
    %c0_9 = arith.constant 0 : index
    %c0_10 = arith.constant 0 : index
    %5 = vector.load %arg8[%c0_9, %c0_10] : memref<1x32xf32, #tpu.memory_space<vmem>>, vector<1x32xf32>
    %c0_11 = arith.constant 0 : index
    %c0_12 = arith.constant 0 : index
    %6 = vector.load %arg9[%c0_11, %c0_12] : memref<32x64xf32, #tpu.memory_space<vmem>>, vector<32x64xf32>
    %c0_13 = arith.constant 0 : index
    %c0_14 = arith.constant 0 : index
    %7 = vector.load %arg10[%c0_13, %c0_14] : memref<1x64xf32, #tpu.memory_space<vmem>>, vector<1x64xf32>
    %c0_15 = arith.constant 0 : index
    %c0_16 = arith.constant 0 : index
    %8 = vector.load %arg11[%c0_15, %c0_16] : memref<64x32xf32, #tpu.memory_space<vmem>>, vector<64x32xf32>
    %c0_17 = arith.constant 0 : index
    %c0_18 = arith.constant 0 : index
    %9 = vector.load %arg12[%c0_17, %c0_18] : memref<1x32xf32, #tpu.memory_space<vmem>>, vector<1x32xf32>
    %c0_19 = arith.constant 0 : index
    %c0_20 = arith.constant 0 : index
    %10 = vector.load %arg13[%c0_19, %c0_20] : memref<1x32xf32, #tpu.memory_space<vmem>>, vector<1x32xf32>
    %c0_21 = arith.constant 0 : index
    %c0_22 = arith.constant 0 : index
    %11 = vector.load %arg14[%c0_21, %c0_22] : memref<1x32xf32, #tpu.memory_space<vmem>>, vector<1x32xf32>
    %c0_23 = arith.constant 0 : index
    %c0_24 = arith.constant 0 : index
    %c0_25 = arith.constant 0 : index
    %12 = vector.load %arg1[%c0_23, %c0_24, %c0_25] : memref<2x8x32xf32, #tpu.memory_space<vmem>>, vector<1x8x32xf32>
    %13 = vector.shape_cast %12 : vector<1x8x32xf32> to vector<8x32xf32>
    %c0_26 = arith.constant 0 : index
    %c0_27 = arith.constant 0 : index
    %c0_28 = arith.constant 0 : index
    %14 = vector.load %arg2[%c0_26, %c0_27, %c0_28] : memref<2x1x8xf32, #tpu.memory_space<vmem>>, vector<1x1x8xf32>
    %15 = vector.shape_cast %14 : vector<1x1x8xf32> to vector<1x8xf32>
    %cst = arith.constant 0.000000e+00 : f32
    %16 = vector.broadcast %cst : f32 to vector<1x8xf32>
    %17 = arith.cmpf oeq, %15, %16 : vector<1x8xf32>
    %cst_29 = arith.constant -1.000000e+10 : f32
    %cst_30 = arith.constant 0.000000e+00 : f32
    %18 = vector.broadcast %cst_29 : f32 to vector<1x8xf32>
    %19 = vector.broadcast %cst_30 : f32 to vector<1x8xf32>
    %20 = arith.select %17, %18, %19 : vector<1x8xi1>, vector<1x8xf32>
    %cst_31 = arith.constant dense<0.000000e+00> : vector<8x96xf32>
    %21 = tpu.matmul %13, %0, %cst_31 {dimension_numbers = #tpu.dot_dimension_numbers<[1], [0], [0], [1], [0, 0, 1, 1], [], []>} : vector<8x32xf32>, vector<32x96xf32>, vector<8x96xf32> -> vector<8x96xf32>
    %22 = vector.broadcast %1 : vector<1x96xf32> to vector<8x96xf32>
    %23 = arith.addf %21, %22 : vector<8x96xf32>
    %24 = vector.extract_strided_slice %23 {offsets = [0, 0], sizes = [8, 32], strides = [1, 1]} : vector<8x96xf32> to vector<8x32xf32>
    %cst_32 = arith.constant 0.353553385 : f32
    %25 = vector.broadcast %cst_32 : f32 to vector<8x32xf32>
    %26 = arith.mulf %24, %25 : vector<8x32xf32>
    %27 = vector.extract_strided_slice %23 {offsets = [0, 32], sizes = [8, 32], strides = [1, 1]} : vector<8x96xf32> to vector<8x32xf32>
    %28 = vector.extract_strided_slice %23 {offsets = [0, 64], sizes = [8, 32], strides = [1, 1]} : vector<8x96xf32> to vector<8x32xf32>
    %29 = vector.extract_strided_slice %26 {offsets = [0, 0], sizes = [8, 8], strides = [1, 1]} : vector<8x32xf32> to vector<8x8xf32>
    %30 = vector.extract_strided_slice %27 {offsets = [0, 0], sizes = [8, 8], strides = [1, 1]} : vector<8x32xf32> to vector<8x8xf32>
    %31 = vector.extract_strided_slice %28 {offsets = [0, 0], sizes = [8, 8], strides = [1, 1]} : vector<8x32xf32> to vector<8x8xf32>
    %cst_33 = arith.constant dense<0.000000e+00> : vector<8x8xf32>
    %32 = tpu.matmul %29, %30, %cst_33 {dimension_numbers = #tpu.dot_dimension_numbers<[1], [1], [0], [0], [0, 0, 1, 0], [], []>} : vector<8x8xf32>, vector<8x8xf32>, vector<8x8xf32> -> vector<8x8xf32>
    %33 = vector.broadcast %20 : vector<1x8xf32> to vector<8x8xf32>
    %34 = arith.addf %32, %33 : vector<8x8xf32>
    %cst_34 = arith.constant dense<0xFF800000> : vector<8xf32>
    %35 = vector.multi_reduction <maximumf>, %34, %cst_34 [1] : vector<8x8xf32> to vector<8xf32>
    %36 = vector.shape_cast %35 : vector<8xf32> to vector<8x1xf32>
    %37 = vector.broadcast %36 : vector<8x1xf32> to vector<8x8xf32>
    %38 = arith.subf %34, %37 : vector<8x8xf32>
    %39 = math.exp %38 : vector<8x8xf32>
    %cst_35 = arith.constant dense<0.000000e+00> : vector<8xf32>
    %40 = vector.multi_reduction <add>, %39, %cst_35 [1] : vector<8x8xf32> to vector<8xf32>
    %41 = vector.shape_cast %40 : vector<8xf32> to vector<8x1xf32>
    %42 = tpu.reciprocal %41 : vector<8x1xf32> -> vector<8x1xf32>
    %43 = vector.broadcast %42 : vector<8x1xf32> to vector<8x8xf32>
    %44 = arith.mulf %39, %43 : vector<8x8xf32>
    %cst_36 = arith.constant dense<0.000000e+00> : vector<8x8xf32>
    %45 = tpu.matmul %44, %31, %cst_36 {dimension_numbers = #tpu.dot_dimension_numbers<[1], [0], [0], [1], [0, 0, 1, 1], [], []>} : vector<8x8xf32>, vector<8x8xf32>, vector<8x8xf32> -> vector<8x8xf32>
    %46 = vector.extract_strided_slice %26 {offsets = [0, 8], sizes = [8, 8], strides = [1, 1]} : vector<8x32xf32> to vector<8x8xf32>
    %47 = vector.extract_strided_slice %27 {offsets = [0, 8], sizes = [8, 8], strides = [1, 1]} : vector<8x32xf32> to vector<8x8xf32>
    %48 = vector.extract_strided_slice %28 {offsets = [0, 8], sizes = [8, 8], strides = [1, 1]} : vector<8x32xf32> to vector<8x8xf32>
    %cst_37 = arith.constant dense<0.000000e+00> : vector<8x8xf32>
    %49 = tpu.matmul %46, %47, %cst_37 {dimension_numbers = #tpu.dot_dimension_numbers<[1], [1], [0], [0], [0, 0, 1, 0], [], []>} : vector<8x8xf32>, vector<8x8xf32>, vector<8x8xf32> -> vector<8x8xf32>
    %50 = vector.broadcast %20 : vector<1x8xf32> to vector<8x8xf32>
    %51 = arith.addf %49, %50 : vector<8x8xf32>
    %cst_38 = arith.constant dense<0xFF800000> : vector<8xf32>
    %52 = vector.multi_reduction <maximumf>, %51, %cst_38 [1] : vector<8x8xf32> to vector<8xf32>
    %53 = vector.shape_cast %52 : vector<8xf32> to vector<8x1xf32>
    %54 = vector.broadcast %53 : vector<8x1xf32> to vector<8x8xf32>
    %55 = arith.subf %51, %54 : vector<8x8xf32>
    %56 = math.exp %55 : vector<8x8xf32>
    %cst_39 = arith.constant dense<0.000000e+00> : vector<8xf32>
    %57 = vector.multi_reduction <add>, %56, %cst_39 [1] : vector<8x8xf32> to vector<8xf32>
    %58 = vector.shape_cast %57 : vector<8xf32> to vector<8x1xf32>
    %59 = tpu.reciprocal %58 : vector<8x1xf32> -> vector<8x1xf32>
    %60 = vector.broadcast %59 : vector<8x1xf32> to vector<8x8xf32>
    %61 = arith.mulf %56, %60 : vector<8x8xf32>
    %cst_40 = arith.constant dense<0.000000e+00> : vector<8x8xf32>
    %62 = tpu.matmul %61, %48, %cst_40 {dimension_numbers = #tpu.dot_dimension_numbers<[1], [0], [0], [1], [0, 0, 1, 1], [], []>} : vector<8x8xf32>, vector<8x8xf32>, vector<8x8xf32> -> vector<8x8xf32>
    %63 = vector.extract_strided_slice %26 {offsets = [0, 16], sizes = [8, 8], strides = [1, 1]} : vector<8x32xf32> to vector<8x8xf32>
    %64 = vector.extract_strided_slice %27 {offsets = [0, 16], sizes = [8, 8], strides = [1, 1]} : vector<8x32xf32> to vector<8x8xf32>
    %65 = vector.extract_strided_slice %28 {offsets = [0, 16], sizes = [8, 8], strides = [1, 1]} : vector<8x32xf32> to vector<8x8xf32>
    %cst_41 = arith.constant dense<0.000000e+00> : vector<8x8xf32>
    %66 = tpu.matmul %63, %64, %cst_41 {dimension_numbers = #tpu.dot_dimension_numbers<[1], [1], [0], [0], [0, 0, 1, 0], [], []>} : vector<8x8xf32>, vector<8x8xf32>, vector<8x8xf32> -> vector<8x8xf32>
    %67 = vector.broadcast %20 : vector<1x8xf32> to vector<8x8xf32>
    %68 = arith.addf %66, %67 : vector<8x8xf32>
    %cst_42 = arith.constant dense<0xFF800000> : vector<8xf32>
    %69 = vector.multi_reduction <maximumf>, %68, %cst_42 [1] : vector<8x8xf32> to vector<8xf32>
    %70 = vector.shape_cast %69 : vector<8xf32> to vector<8x1xf32>
    %71 = vector.broadcast %70 : vector<8x1xf32> to vector<8x8xf32>
    %72 = arith.subf %68, %71 : vector<8x8xf32>
    %73 = math.exp %72 : vector<8x8xf32>
    %cst_43 = arith.constant dense<0.000000e+00> : vector<8xf32>
    %74 = vector.multi_reduction <add>, %73, %cst_43 [1] : vector<8x8xf32> to vector<8xf32>
    %75 = vector.shape_cast %74 : vector<8xf32> to vector<8x1xf32>
    %76 = tpu.reciprocal %75 : vector<8x1xf32> -> vector<8x1xf32>
    %77 = vector.broadcast %76 : vector<8x1xf32> to vector<8x8xf32>
    %78 = arith.mulf %73, %77 : vector<8x8xf32>
    %cst_44 = arith.constant dense<0.000000e+00> : vector<8x8xf32>
    %79 = tpu.matmul %78, %65, %cst_44 {dimension_numbers = #tpu.dot_dimension_numbers<[1], [0], [0], [1], [0, 0, 1, 1], [], []>} : vector<8x8xf32>, vector<8x8xf32>, vector<8x8xf32> -> vector<8x8xf32>
    %80 = vector.extract_strided_slice %26 {offsets = [0, 24], sizes = [8, 8], strides = [1, 1]} : vector<8x32xf32> to vector<8x8xf32>
    %81 = vector.extract_strided_slice %27 {offsets = [0, 24], sizes = [8, 8], strides = [1, 1]} : vector<8x32xf32> to vector<8x8xf32>
    %82 = vector.extract_strided_slice %28 {offsets = [0, 24], sizes = [8, 8], strides = [1, 1]} : vector<8x32xf32> to vector<8x8xf32>
    %cst_45 = arith.constant dense<0.000000e+00> : vector<8x8xf32>
    %83 = tpu.matmul %80, %81, %cst_45 {dimension_numbers = #tpu.dot_dimension_numbers<[1], [1], [0], [0], [0, 0, 1, 0], [], []>} : vector<8x8xf32>, vector<8x8xf32>, vector<8x8xf32> -> vector<8x8xf32>
    %84 = vector.broadcast %20 : vector<1x8xf32> to vector<8x8xf32>
    %85 = arith.addf %83, %84 : vector<8x8xf32>
    %cst_46 = arith.constant dense<0xFF800000> : vector<8xf32>
    %86 = vector.multi_reduction <maximumf>, %85, %cst_46 [1] : vector<8x8xf32> to vector<8xf32>
    %87 = vector.shape_cast %86 : vector<8xf32> to vector<8x1xf32>
    %88 = vector.broadcast %87 : vector<8x1xf32> to vector<8x8xf32>
    %89 = arith.subf %85, %88 : vector<8x8xf32>
    %90 = math.exp %89 : vector<8x8xf32>
    %cst_47 = arith.constant dense<0.000000e+00> : vector<8xf32>
    %91 = vector.multi_reduction <add>, %90, %cst_47 [1] : vector<8x8xf32> to vector<8xf32>
    %92 = vector.shape_cast %91 : vector<8xf32> to vector<8x1xf32>
    %93 = tpu.reciprocal %92 : vector<8x1xf32> -> vector<8x1xf32>
    %94 = vector.broadcast %93 : vector<8x1xf32> to vector<8x8xf32>
    %95 = arith.mulf %90, %94 : vector<8x8xf32>
    %cst_48 = arith.constant dense<0.000000e+00> : vector<8x8xf32>
    %96 = tpu.matmul %95, %82, %cst_48 {dimension_numbers = #tpu.dot_dimension_numbers<[1], [0], [0], [1], [0, 0, 1, 1], [], []>} : vector<8x8xf32>, vector<8x8xf32>, vector<8x8xf32> -> vector<8x8xf32>
    %97 = tpu.concatenate %45, %62, %79, %96 in 1 : vector<8x8xf32>, vector<8x8xf32>, vector<8x8xf32>, vector<8x8xf32> -> vector<8x32xf32>
    %cst_49 = arith.constant dense<0.000000e+00> : vector<8x32xf32>
    %98 = tpu.matmul %97, %2, %cst_49 {dimension_numbers = #tpu.dot_dimension_numbers<[1], [0], [0], [1], [0, 0, 1, 1], [], []>} : vector<8x32xf32>, vector<32x32xf32>, vector<8x32xf32> -> vector<8x32xf32>
    %99 = vector.broadcast %3 : vector<1x32xf32> to vector<8x32xf32>
    %100 = arith.addf %98, %99 : vector<8x32xf32>
    %101 = arith.addf %13, %100 : vector<8x32xf32>
    %cst_50 = arith.constant dense<0.000000e+00> : vector<8xf32>
    %102 = vector.multi_reduction <add>, %101, %cst_50 [1] : vector<8x32xf32> to vector<8xf32>
    %103 = vector.shape_cast %102 : vector<8xf32> to vector<8x1xf32>
    %cst_51 = arith.constant 3.200000e+01 : f32
    %104 = vector.broadcast %cst_51 : f32 to vector<8x1xf32>
    %105 = arith.divf %103, %104 : vector<8x1xf32>
    %106 = vector.broadcast %105 : vector<8x1xf32> to vector<8x32xf32>
    %107 = arith.subf %101, %106 : vector<8x32xf32>
    %108 = arith.mulf %107, %107 : vector<8x32xf32>
    %cst_52 = arith.constant dense<0.000000e+00> : vector<8xf32>
    %109 = vector.multi_reduction <add>, %108, %cst_52 [1] : vector<8x32xf32> to vector<8xf32>
    %110 = vector.shape_cast %109 : vector<8xf32> to vector<8x1xf32>
    %cst_53 = arith.constant 3.200000e+01 : f32
    %111 = vector.broadcast %cst_53 : f32 to vector<8x1xf32>
    %112 = arith.divf %110, %111 : vector<8x1xf32>
    %113 = vector.broadcast %105 : vector<8x1xf32> to vector<8x32xf32>
    %114 = arith.subf %101, %113 : vector<8x32xf32>
    %cst_54 = arith.constant 9.99999974E-6 : f32
    %115 = vector.broadcast %cst_54 : f32 to vector<8x1xf32>
    %116 = arith.addf %112, %115 : vector<8x1xf32>
    %117 = math.rsqrt %116 : vector<8x1xf32>
    %118 = vector.broadcast %117 : vector<8x1xf32> to vector<8x32xf32>
    %119 = arith.mulf %114, %118 : vector<8x32xf32>
    %120 = vector.broadcast %4 : vector<1x32xf32> to vector<8x32xf32>
    %121 = arith.mulf %119, %120 : vector<8x32xf32>
    %122 = vector.broadcast %5 : vector<1x32xf32> to vector<8x32xf32>
    %123 = arith.addf %121, %122 : vector<8x32xf32>
    %cst_55 = arith.constant dense<0.000000e+00> : vector<8x64xf32>
    %124 = tpu.matmul %123, %6, %cst_55 {dimension_numbers = #tpu.dot_dimension_numbers<[1], [0], [0], [1], [0, 0, 1, 1], [], []>} : vector<8x32xf32>, vector<32x64xf32>, vector<8x64xf32> -> vector<8x64xf32>
    %125 = vector.broadcast %7 : vector<1x64xf32> to vector<8x64xf32>
    %126 = arith.addf %124, %125 : vector<8x64xf32>
    %cst_56 = arith.constant 0.000000e+00 : f32
    %127 = vector.broadcast %cst_56 : f32 to vector<8x64xf32>
    %128 = arith.maximumf %126, %127 : vector<8x64xf32>
    %cst_57 = arith.constant dense<0.000000e+00> : vector<8x32xf32>
    %129 = tpu.matmul %128, %8, %cst_57 {dimension_numbers = #tpu.dot_dimension_numbers<[1], [0], [0], [1], [0, 0, 1, 1], [], []>} : vector<8x64xf32>, vector<64x32xf32>, vector<8x32xf32> -> vector<8x32xf32>
    %130 = vector.broadcast %9 : vector<1x32xf32> to vector<8x32xf32>
    %131 = arith.addf %129, %130 : vector<8x32xf32>
    %132 = arith.addf %123, %131 : vector<8x32xf32>
    %cst_58 = arith.constant dense<0.000000e+00> : vector<8xf32>
    %133 = vector.multi_reduction <add>, %132, %cst_58 [1] : vector<8x32xf32> to vector<8xf32>
    %134 = vector.shape_cast %133 : vector<8xf32> to vector<8x1xf32>
    %cst_59 = arith.constant 3.200000e+01 : f32
    %135 = vector.broadcast %cst_59 : f32 to vector<8x1xf32>
    %136 = arith.divf %134, %135 : vector<8x1xf32>
    %137 = vector.broadcast %136 : vector<8x1xf32> to vector<8x32xf32>
    %138 = arith.subf %132, %137 : vector<8x32xf32>
    %139 = arith.mulf %138, %138 : vector<8x32xf32>
    %cst_60 = arith.constant dense<0.000000e+00> : vector<8xf32>
    %140 = vector.multi_reduction <add>, %139, %cst_60 [1] : vector<8x32xf32> to vector<8xf32>
    %141 = vector.shape_cast %140 : vector<8xf32> to vector<8x1xf32>
    %cst_61 = arith.constant 3.200000e+01 : f32
    %142 = vector.broadcast %cst_61 : f32 to vector<8x1xf32>
    %143 = arith.divf %141, %142 : vector<8x1xf32>
    %144 = vector.broadcast %136 : vector<8x1xf32> to vector<8x32xf32>
    %145 = arith.subf %132, %144 : vector<8x32xf32>
    %cst_62 = arith.constant 9.99999974E-6 : f32
    %146 = vector.broadcast %cst_62 : f32 to vector<8x1xf32>
    %147 = arith.addf %143, %146 : vector<8x1xf32>
    %148 = math.rsqrt %147 : vector<8x1xf32>
    %149 = vector.broadcast %148 : vector<8x1xf32> to vector<8x32xf32>
    %150 = arith.mulf %145, %149 : vector<8x32xf32>
    %151 = vector.broadcast %10 : vector<1x32xf32> to vector<8x32xf32>
    %152 = arith.mulf %150, %151 : vector<8x32xf32>
    %153 = vector.broadcast %11 : vector<1x32xf32> to vector<8x32xf32>
    %154 = arith.addf %152, %153 : vector<8x32xf32>
    %c0_63 = arith.constant 0 : index
    %c0_64 = arith.constant 0 : index
    %c0_65 = arith.constant 0 : index
    %155 = vector.load %arg15[%c0_63, %c0_64, %c0_65] : memref<2x8x32xf32, #tpu.memory_space<vmem>>, vector<1x8x32xf32>
    %156 = vector.shape_cast %155 : vector<1x8x32xf32> to vector<8x32xf32>
    %157 = vector.shape_cast %154 : vector<8x32xf32> to vector<1x8x32xf32>
    tpu.vector_store %arg15[%c0_63, %c0_64, %c0_65], %157 {strides = array<i32>} : memref<2x8x32xf32, #tpu.memory_space<vmem>>, vector<1x8x32xf32>,
    %c1 = arith.constant 1 : index
    %c0_66 = arith.constant 0 : index
    %c0_67 = arith.constant 0 : index
    %158 = vector.load %arg1[%c1, %c0_66, %c0_67] : memref<2x8x32xf32, #tpu.memory_space<vmem>>, vector<1x8x32xf32>
    %159 = vector.shape_cast %158 : vector<1x8x32xf32> to vector<8x32xf32>
    %c1_68 = arith.constant 1 : index
    %c0_69 = arith.constant 0 : index
    %c0_70 = arith.constant 0 : index
    %160 = vector.load %arg2[%c1_68, %c0_69, %c0_70] : memref<2x1x8xf32, #tpu.memory_space<vmem>>, vector<1x1x8xf32>
    %161 = vector.shape_cast %160 : vector<1x1x8xf32> to vector<1x8xf32>
    %cst_71 = arith.constant 0.000000e+00 : f32
    %162 = vector.broadcast %cst_71 : f32 to vector<1x8xf32>
    %163 = arith.cmpf oeq, %161, %162 : vector<1x8xf32>
    %cst_72 = arith.constant -1.000000e+10 : f32
    %cst_73 = arith.constant 0.000000e+00 : f32
    %164 = vector.broadcast %cst_72 : f32 to vector<1x8xf32>
    %165 = vector.broadcast %cst_73 : f32 to vector<1x8xf32>
    %166 = arith.select %163, %164, %165 : vector<1x8xi1>, vector<1x8xf32>
    %cst_74 = arith.constant dense<0.000000e+00> : vector<8x96xf32>
    %167 = tpu.matmul %159, %0, %cst_74 {dimension_numbers = #tpu.dot_dimension_numbers<[1], [0], [0], [1], [0, 0, 1, 1], [], []>} : vector<8x32xf32>, vector<32x96xf32>, vector<8x96xf32> -> vector<8x96xf32>
    %168 = vector.broadcast %1 : vector<1x96xf32> to vector<8x96xf32>
    %169 = arith.addf %167, %168 : vector<8x96xf32>
    %170 = vector.extract_strided_slice %169 {offsets = [0, 0], sizes = [8, 32], strides = [1, 1]} : vector<8x96xf32> to vector<8x32xf32>
    %cst_75 = arith.constant 0.353553385 : f32
    %171 = vector.broadcast %cst_75 : f32 to vector<8x32xf32>
    %172 = arith.mulf %170, %171 : vector<8x32xf32>
    %173 = vector.extract_strided_slice %169 {offsets = [0, 32], sizes = [8, 32], strides = [1, 1]} : vector<8x96xf32> to vector<8x32xf32>
    %174 = vector.extract_strided_slice %169 {offsets = [0, 64], sizes = [8, 32], strides = [1, 1]} : vector<8x96xf32> to vector<8x32xf32>
    %175 = vector.extract_strided_slice %172 {offsets = [0, 0], sizes = [8, 8], strides = [1, 1]} : vector<8x32xf32> to vector<8x8xf32>
    %176 = vector.extract_strided_slice %173 {offsets = [0, 0], sizes = [8, 8], strides = [1, 1]} : vector<8x32xf32> to vector<8x8xf32>
    %177 = vector.extract_strided_slice %174 {offsets = [0, 0], sizes = [8, 8], strides = [1, 1]} : vector<8x32xf32> to vector<8x8xf32>
    %cst_76 = arith.constant dense<0.000000e+00> : vector<8x8xf32>
    %178 = tpu.matmul %175, %176, %cst_76 {dimension_numbers = #tpu.dot_dimension_numbers<[1], [1], [0], [0], [0, 0, 1, 0], [], []>} : vector<8x8xf32>, vector<8x8xf32>, vector<8x8xf32> -> vector<8x8xf32>
    %179 = vector.broadcast %166 : vector<1x8xf32> to vector<8x8xf32>
    %180 = arith.addf %178, %179 : vector<8x8xf32>
    %cst_77 = arith.constant dense<0xFF800000> : vector<8xf32>
    %181 = vector.multi_reduction <maximumf>, %180, %cst_77 [1] : vector<8x8xf32> to vector<8xf32>
    %182 = vector.shape_cast %181 : vector<8xf32> to vector<8x1xf32>
    %183 = vector.broadcast %182 : vector<8x1xf32> to vector<8x8xf32>
    %184 = arith.subf %180, %183 : vector<8x8xf32>
    %185 = math.exp %184 : vector<8x8xf32>
    %cst_78 = arith.constant dense<0.000000e+00> : vector<8xf32>
    %186 = vector.multi_reduction <add>, %185, %cst_78 [1] : vector<8x8xf32> to vector<8xf32>
    %187 = vector.shape_cast %186 : vector<8xf32> to vector<8x1xf32>
    %188 = tpu.reciprocal %187 : vector<8x1xf32> -> vector<8x1xf32>
    %189 = vector.broadcast %188 : vector<8x1xf32> to vector<8x8xf32>
    %190 = arith.mulf %185, %189 : vector<8x8xf32>
    %cst_79 = arith.constant dense<0.000000e+00> : vector<8x8xf32>
    %191 = tpu.matmul %190, %177, %cst_79 {dimension_numbers = #tpu.dot_dimension_numbers<[1], [0], [0], [1], [0, 0, 1, 1], [], []>} : vector<8x8xf32>, vector<8x8xf32>, vector<8x8xf32> -> vector<8x8xf32>
    %192 = vector.extract_strided_slice %172 {offsets = [0, 8], sizes = [8, 8], strides = [1, 1]} : vector<8x32xf32> to vector<8x8xf32>
    %193 = vector.extract_strided_slice %173 {offsets = [0, 8], sizes = [8, 8], strides = [1, 1]} : vector<8x32xf32> to vector<8x8xf32>
    %194 = vector.extract_strided_slice %174 {offsets = [0, 8], sizes = [8, 8], strides = [1, 1]} : vector<8x32xf32> to vector<8x8xf32>
    %cst_80 = arith.constant dense<0.000000e+00> : vector<8x8xf32>
    %195 = tpu.matmul %192, %193, %cst_80 {dimension_numbers = #tpu.dot_dimension_numbers<[1], [1], [0], [0], [0, 0, 1, 0], [], []>} : vector<8x8xf32>, vector<8x8xf32>, vector<8x8xf32> -> vector<8x8xf32>
    %196 = vector.broadcast %166 : vector<1x8xf32> to vector<8x8xf32>
    %197 = arith.addf %195, %196 : vector<8x8xf32>
    %cst_81 = arith.constant dense<0xFF800000> : vector<8xf32>
    %198 = vector.multi_reduction <maximumf>, %197, %cst_81 [1] : vector<8x8xf32> to vector<8xf32>
    %199 = vector.shape_cast %198 : vector<8xf32> to vector<8x1xf32>
    %200 = vector.broadcast %199 : vector<8x1xf32> to vector<8x8xf32>
    %201 = arith.subf %197, %200 : vector<8x8xf32>
    %202 = math.exp %201 : vector<8x8xf32>
    %cst_82 = arith.constant dense<0.000000e+00> : vector<8xf32>
    %203 = vector.multi_reduction <add>, %202, %cst_82 [1] : vector<8x8xf32> to vector<8xf32>
    %204 = vector.shape_cast %203 : vector<8xf32> to vector<8x1xf32>
    %205 = tpu.reciprocal %204 : vector<8x1xf32> -> vector<8x1xf32>
    %206 = vector.broadcast %205 : vector<8x1xf32> to vector<8x8xf32>
    %207 = arith.mulf %202, %206 : vector<8x8xf32>
    %cst_83 = arith.constant dense<0.000000e+00> : vector<8x8xf32>
    %208 = tpu.matmul %207, %194, %cst_83 {dimension_numbers = #tpu.dot_dimension_numbers<[1], [0], [0], [1], [0, 0, 1, 1], [], []>} : vector<8x8xf32>, vector<8x8xf32>, vector<8x8xf32> -> vector<8x8xf32>
    %209 = vector.extract_strided_slice %172 {offsets = [0, 16], sizes = [8, 8], strides = [1, 1]} : vector<8x32xf32> to vector<8x8xf32>
    %210 = vector.extract_strided_slice %173 {offsets = [0, 16], sizes = [8, 8], strides = [1, 1]} : vector<8x32xf32> to vector<8x8xf32>
    %211 = vector.extract_strided_slice %174 {offsets = [0, 16], sizes = [8, 8], strides = [1, 1]} : vector<8x32xf32> to vector<8x8xf32>
    %cst_84 = arith.constant dense<0.000000e+00> : vector<8x8xf32>
    %212 = tpu.matmul %209, %210, %cst_84 {dimension_numbers = #tpu.dot_dimension_numbers<[1], [1], [0], [0], [0, 0, 1, 0], [], []>} : vector<8x8xf32>, vector<8x8xf32>, vector<8x8xf32> -> vector<8x8xf32>
    %213 = vector.broadcast %166 : vector<1x8xf32> to vector<8x8xf32>
    %214 = arith.addf %212, %213 : vector<8x8xf32>
    %cst_85 = arith.constant dense<0xFF800000> : vector<8xf32>
    %215 = vector.multi_reduction <maximumf>, %214, %cst_85 [1] : vector<8x8xf32> to vector<8xf32>
    %216 = vector.shape_cast %215 : vector<8xf32> to vector<8x1xf32>
    %217 = vector.broadcast %216 : vector<8x1xf32> to vector<8x8xf32>
    %218 = arith.subf %214, %217 : vector<8x8xf32>
    %219 = math.exp %218 : vector<8x8xf32>
    %cst_86 = arith.constant dense<0.000000e+00> : vector<8xf32>
    %220 = vector.multi_reduction <add>, %219, %cst_86 [1] : vector<8x8xf32> to vector<8xf32>
    %221 = vector.shape_cast %220 : vector<8xf32> to vector<8x1xf32>
    %222 = tpu.reciprocal %221 : vector<8x1xf32> -> vector<8x1xf32>
    %223 = vector.broadcast %222 : vector<8x1xf32> to vector<8x8xf32>
    %224 = arith.mulf %219, %223 : vector<8x8xf32>
    %cst_87 = arith.constant dense<0.000000e+00> : vector<8x8xf32>
    %225 = tpu.matmul %224, %211, %cst_87 {dimension_numbers = #tpu.dot_dimension_numbers<[1], [0], [0], [1], [0, 0, 1, 1], [], []>} : vector<8x8xf32>, vector<8x8xf32>, vector<8x8xf32> -> vector<8x8xf32>
    %226 = vector.extract_strided_slice %172 {offsets = [0, 24], sizes = [8, 8], strides = [1, 1]} : vector<8x32xf32> to vector<8x8xf32>
    %227 = vector.extract_strided_slice %173 {offsets = [0, 24], sizes = [8, 8], strides = [1, 1]} : vector<8x32xf32> to vector<8x8xf32>
    %228 = vector.extract_strided_slice %174 {offsets = [0, 24], sizes = [8, 8], strides = [1, 1]} : vector<8x32xf32> to vector<8x8xf32>
    %cst_88 = arith.constant dense<0.000000e+00> : vector<8x8xf32>
    %229 = tpu.matmul %226, %227, %cst_88 {dimension_numbers = #tpu.dot_dimension_numbers<[1], [1], [0], [0], [0, 0, 1, 0], [], []>} : vector<8x8xf32>, vector<8x8xf32>, vector<8x8xf32> -> vector<8x8xf32>
    %230 = vector.broadcast %166 : vector<1x8xf32> to vector<8x8xf32>
    %231 = arith.addf %229, %230 : vector<8x8xf32>
    %cst_89 = arith.constant dense<0xFF800000> : vector<8xf32>
    %232 = vector.multi_reduction <maximumf>, %231, %cst_89 [1] : vector<8x8xf32> to vector<8xf32>
    %233 = vector.shape_cast %232 : vector<8xf32> to vector<8x1xf32>
    %234 = vector.broadcast %233 : vector<8x1xf32> to vector<8x8xf32>
    %235 = arith.subf %231, %234 : vector<8x8xf32>
    %236 = math.exp %235 : vector<8x8xf32>
    %cst_90 = arith.constant dense<0.000000e+00> : vector<8xf32>
    %237 = vector.multi_reduction <add>, %236, %cst_90 [1] : vector<8x8xf32> to vector<8xf32>
    %238 = vector.shape_cast %237 : vector<8xf32> to vector<8x1xf32>
    %239 = tpu.reciprocal %238 : vector<8x1xf32> -> vector<8x1xf32>
    %240 = vector.broadcast %239 : vector<8x1xf32> to vector<8x8xf32>
    %241 = arith.mulf %236, %240 : vector<8x8xf32>
    %cst_91 = arith.constant dense<0.000000e+00> : vector<8x8xf32>
    %242 = tpu.matmul %241, %228, %cst_91 {dimension_numbers = #tpu.dot_dimension_numbers<[1], [0], [0], [1], [0, 0, 1, 1], [], []>} : vector<8x8xf32>, vector<8x8xf32>, vector<8x8xf32> -> vector<8x8xf32>
    %243 = tpu.concatenate %191, %208, %225, %242 in 1 : vector<8x8xf32>, vector<8x8xf32>, vector<8x8xf32>, vector<8x8xf32> -> vector<8x32xf32>
    %cst_92 = arith.constant dense<0.000000e+00> : vector<8x32xf32>
    %244 = tpu.matmul %243, %2, %cst_92 {dimension_numbers = #tpu.dot_dimension_numbers<[1], [0], [0], [1], [0, 0, 1, 1], [], []>} : vector<8x32xf32>, vector<32x32xf32>, vector<8x32xf32> -> vector<8x32xf32>
    %245 = vector.broadcast %3 : vector<1x32xf32> to vector<8x32xf32>
    %246 = arith.addf %244, %245 : vector<8x32xf32>
    %247 = arith.addf %159, %246 : vector<8x32xf32>
    %cst_93 = arith.constant dense<0.000000e+00> : vector<8xf32>
    %248 = vector.multi_reduction <add>, %247, %cst_93 [1] : vector<8x32xf32> to vector<8xf32>
    %249 = vector.shape_cast %248 : vector<8xf32> to vector<8x1xf32>
    %cst_94 = arith.constant 3.200000e+01 : f32
    %250 = vector.broadcast %cst_94 : f32 to vector<8x1xf32>
    %251 = arith.divf %249, %250 : vector<8x1xf32>
    %252 = vector.broadcast %251 : vector<8x1xf32> to vector<8x32xf32>
    %253 = arith.subf %247, %252 : vector<8x32xf32>
    %254 = arith.mulf %253, %253 : vector<8x32xf32>
    %cst_95 = arith.constant dense<0.000000e+00> : vector<8xf32>
    %255 = vector.multi_reduction <add>, %254, %cst_95 [1] : vector<8x32xf32> to vector<8xf32>
    %256 = vector.shape_cast %255 : vector<8xf32> to vector<8x1xf32>
    %cst_96 = arith.constant 3.200000e+01 : f32
    %257 = vector.broadcast %cst_96 : f32 to vector<8x1xf32>
    %258 = arith.divf %256, %257 : vector<8x1xf32>
    %259 = vector.broadcast %251 : vector<8x1xf32> to vector<8x32xf32>
    %260 = arith.subf %247, %259 : vector<8x32xf32>
    %cst_97 = arith.constant 9.99999974E-6 : f32
    %261 = vector.broadcast %cst_97 : f32 to vector<8x1xf32>
    %262 = arith.addf %258, %261 : vector<8x1xf32>
    %263 = math.rsqrt %262 : vector<8x1xf32>
    %264 = vector.broadcast %263 : vector<8x1xf32> to vector<8x32xf32>
    %265 = arith.mulf %260, %264 : vector<8x32xf32>
    %266 = vector.broadcast %4 : vector<1x32xf32> to vector<8x32xf32>
    %267 = arith.mulf %265, %266 : vector<8x32xf32>
    %268 = vector.broadcast %5 : vector<1x32xf32> to vector<8x32xf32>
    %269 = arith.addf %267, %268 : vector<8x32xf32>
    %cst_98 = arith.constant dense<0.000000e+00> : vector<8x64xf32>
    %270 = tpu.matmul %269, %6, %cst_98 {dimension_numbers = #tpu.dot_dimension_numbers<[1], [0], [0], [1], [0, 0, 1, 1], [], []>} : vector<8x32xf32>, vector<32x64xf32>, vector<8x64xf32> -> vector<8x64xf32>
    %271 = vector.broadcast %7 : vector<1x64xf32> to vector<8x64xf32>
    %272 = arith.addf %270, %271 : vector<8x64xf32>
    %cst_99 = arith.constant 0.000000e+00 : f32
    %273 = vector.broadcast %cst_99 : f32 to vector<8x64xf32>
    %274 = arith.maximumf %272, %273 : vector<8x64xf32>
    %cst_100 = arith.constant dense<0.000000e+00> : vector<8x32xf32>
    %275 = tpu.matmul %274, %8, %cst_100 {dimension_numbers = #tpu.dot_dimension_numbers<[1], [0], [0], [1], [0, 0, 1, 1], [], []>} : vector<8x64xf32>, vector<64x32xf32>, vector<8x32xf32> -> vector<8x32xf32>
    %276 = vector.broadcast %9 : vector<1x32xf32> to vector<8x32xf32>
    %277 = arith.addf %275, %276 : vector<8x32xf32>
    %278 = arith.addf %269, %277 : vector<8x32xf32>
    %cst_101 = arith.constant dense<0.000000e+00> : vector<8xf32>
    %279 = vector.multi_reduction <add>, %278, %cst_101 [1] : vector<8x32xf32> to vector<8xf32>
    %280 = vector.shape_cast %279 : vector<8xf32> to vector<8x1xf32>
    %cst_102 = arith.constant 3.200000e+01 : f32
    %281 = vector.broadcast %cst_102 : f32 to vector<8x1xf32>
    %282 = arith.divf %280, %281 : vector<8x1xf32>
    %283 = vector.broadcast %282 : vector<8x1xf32> to vector<8x32xf32>
    %284 = arith.subf %278, %283 : vector<8x32xf32>
    %285 = arith.mulf %284, %284 : vector<8x32xf32>
    %cst_103 = arith.constant dense<0.000000e+00> : vector<8xf32>
    %286 = vector.multi_reduction <add>, %285, %cst_103 [1] : vector<8x32xf32> to vector<8xf32>
    %287 = vector.shape_cast %286 : vector<8xf32> to vector<8x1xf32>
    %cst_104 = arith.constant 3.200000e+01 : f32
    %288 = vector.broadcast %cst_104 : f32 to vector<8x1xf32>
    %289 = arith.divf %287, %288 : vector<8x1xf32>
    %290 = vector.broadcast %282 : vector<8x1xf32> to vector<8x32xf32>
    %291 = arith.subf %278, %290 : vector<8x32xf32>
    %cst_105 = arith.constant 9.99999974E-6 : f32
    %292 = vector.broadcast %cst_105 : f32 to vector<8x1xf32>
    %293 = arith.addf %289, %292 : vector<8x1xf32>
    %294 = math.rsqrt %293 : vector<8x1xf32>
    %295 = vector.broadcast %294 : vector<8x1xf32> to vector<8x32xf32>
    %296 = arith.mulf %291, %295 : vector<8x32xf32>
    %297 = vector.broadcast %10 : vector<1x32xf32> to vector<8x32xf32>
    %298 = arith.mulf %296, %297 : vector<8x32xf32>
    %299 = vector.broadcast %11 : vector<1x32xf32> to vector<8x32xf32>
    %300 = arith.addf %298, %299 : vector<8x32xf32>
    %c1_106 = arith.constant 1 : index
    %c0_107 = arith.constant 0 : index
    %c0_108 = arith.constant 0 : index
    %301 = vector.load %arg15[%c1_106, %c0_107, %c0_108] : memref<2x8x32xf32, #tpu.memory_space<vmem>>, vector<1x8x32xf32>
    %302 = vector.shape_cast %301 : vector<1x8x32xf32> to vector<8x32xf32>
    %303 = vector.shape_cast %300 : vector<8x32xf32> to vector<1x8x32xf32>
    tpu.vector_store %arg15[%c1_106, %c0_107, %c0_108], %303 {strides = array<i32>} : memref<2x8x32xf32, #tpu.memory_space<vmem>>, vector<1x8x32xf32>,
    return
  }
  func.func @transform_0(%arg0: i32) -> (i32, i32, i32) {
    %c0_i32 = arith.constant 0 : i32
    %c0_i32_0 = arith.constant 0 : i32
    %c0_i32_1 = arith.constant 0 : i32
    return %arg0, %c0_i32, %c0_i32_0 : i32, i32, i32
  }
  func.func @transform_1(%arg0: i32) -> (i32, i32, i32) {
    %c0_i32 = arith.constant 0 : i32
    %c0_i32_0 = arith.constant 0 : i32
    %c0_i32_1 = arith.constant 0 : i32
    return %arg0, %c0_i32, %c0_i32_0 : i32, i32, i32
  }
  func.func @transform_2(%arg0: i32) -> (i32, i32) {
    %c0_i32 = arith.constant 0 : i32
    %c0_i32_0 = arith.constant 0 : i32
    %c0_i32_1 = arith.constant 0 : i32
    return %c0_i32, %c0_i32_0 : i32, i32
  }
  func.func @transform_3(%arg0: i32) -> (i32, i32) {
    %c0_i32 = arith.constant 0 : i32
    %c0_i32_0 = arith.constant 0 : i32
    %c0_i32_1 = arith.constant 0 : i32
    return %c0_i32, %c0_i32_0 : i32, i32
  }
  func.func @transform_4(%arg0: i32) -> (i32, i32) {
    %c0_i32 = arith.constant 0 : i32
    %c0_i32_0 = arith.constant 0 : i32
    %c0_i32_1 = arith.constant 0 : i32
    return %c0_i32, %c0_i32_0 : i32, i32
  }
  func.func @transform_5(%arg0: i32) -> (i32, i32) {
    %c0_i32 = arith.constant 0 : i32
    %c0_i32_0 = arith.constant 0 : i32
    %c0_i32_1 = arith.constant 0 : i32
    return %c0_i32, %c0_i32_0 : i32, i32
  }
  func.func @transform_6(%arg0: i32) -> (i32, i32) {
    %c0_i32 = arith.constant 0 : i32
    %c0_i32_0 = arith.constant 0 : i32
    %c0_i32_1 = arith.constant 0 : i32
    return %c0_i32, %c0_i32_0 : i32, i32
  }
  func.func @transform_7(%arg0: i32) -> (i32, i32) {
    %c0_i32 = arith.constant 0 : i32
    %c0_i32_0 = arith.constant 0 : i32
    %c0_i32_1 = arith.constant 0 : i32
    return %c0_i32, %c0_i32_0 : i32, i32
  }
  func.func @transform_8(%arg0: i32) -> (i32, i32) {
    %c0_i32 = arith.constant 0 : i32
    %c0_i32_0 = arith.constant 0 : i32
    %c0_i32_1 = arith.constant 0 : i32
    return %c0_i32, %c0_i32_0 : i32, i32
  }
  func.func @transform_9(%arg0: i32) -> (i32, i32) {
    %c0_i32 = arith.constant 0 : i32
    %c0_i32_0 = arith.constant 0 : i32
    %c0_i32_1 = arith.constant 0 : i32
    return %c0_i32, %c0_i32_0 : i32, i32
  }
  func.func @transform_10(%arg0: i32) -> (i32, i32) {
    %c0_i32 = arith.constant 0 : i32
    %c0_i32_0 = arith.constant 0 : i32
    %c0_i32_1 = arith.constant 0 : i32
    return %c0_i32, %c0_i32_0 : i32, i32
  }
  func.func @transform_11(%arg0: i32) -> (i32, i32) {
    %c0_i32 = arith.constant 0 : i32
    %c0_i32_0 = arith.constant 0 : i32
    %c0_i32_1 = arith.constant 0 : i32
    return %c0_i32, %c0_i32_0 : i32, i32
  }
  func.func @transform_12(%arg0: i32) -> (i32, i32) {
    %c0_i32 = arith.constant 0 : i32
    %c0_i32_0 = arith.constant 0 : i32
    %c0_i32_1 = arith.constant 0 : i32
    return %c0_i32, %c0_i32_0 : i32, i32
  }
  func.func @transform_13(%arg0: i32) -> (i32, i32) {
    %c0_i32 = arith.constant 0 : i32
    %c0_i32_0 = arith.constant 0 : i32
    %c0_i32_1 = arith.constant 0 : i32
    return %c0_i32, %c0_i32_0 : i32, i32
  }
  func.func @transform_14(%arg0: i32) -> (i32, i32, i32) {
    %c0_i32 = arith.constant 0 : i32
    %c0_i32_0 = arith.constant 0 : i32
    %c0_i32_1 = arith.constant 0 : i32
    return %arg0, %c0_i32, %c0_i32_0 : i32, i32, i32
  }
}

</mosaic_0001>

<llo_original>
// kernel: tpu_custom_call.1
$region0: #{tpu_custom_call.1}
  #allocation0 [shape = 'u32[]', space=smem, size = 0x4, offset = 0x4, fixed_abs, tag = 'smem constant byte address 0x4 - core index']
  #allocation1 [shape = 'u32[72,128]{1,0:T(1,128)}', space=vmem, size = 0x9000, scoped, tag = 'internal scratch']
  %s0 = inlined_call_operand.hbm [shape: f32[2,8,32], index: 0, kind: input, shape index: {}]
  %s1 = inlined_call_operand.hbm [shape: f32[2,1,8], index: 1, kind: input, shape index: {}]
  %s2 = inlined_call_operand.vmem [shape: f32[32,96], index: 2, kind: input, shape index: {}]
  %s3 = inlined_call_operand.vmem [shape: f32[1,96], index: 3, kind: input, shape index: {}]
  %s4 = inlined_call_operand.vmem [shape: f32[32,32], index: 4, kind: input, shape index: {}]
  %s5 = inlined_call_operand.vmem [shape: f32[1,32], index: 5, kind: input, shape index: {}]
  %s6 = inlined_call_operand.vmem [shape: f32[1,32], index: 6, kind: input, shape index: {}]
  %s7 = inlined_call_operand.vmem [shape: f32[1,32], index: 7, kind: input, shape index: {}]
  %s8 = inlined_call_operand.vmem [shape: f32[32,64], index: 8, kind: input, shape index: {}]
  %s9 = inlined_call_operand.vmem [shape: f32[1,64], index: 9, kind: input, shape index: {}]
  %s10 = inlined_call_operand.vmem [shape: f32[64,32], index: 10, kind: input, shape index: {}]
  %s11 = inlined_call_operand.vmem [shape: f32[1,32], index: 11, kind: input, shape index: {}]
  %s12 = inlined_call_operand.vmem [shape: f32[1,32], index: 12, kind: input, shape index: {}]
  %s13 = inlined_call_operand.vmem [shape: f32[1,32], index: 13, kind: input, shape index: {}]
  %s14 = inlined_call_operand.hbm [shape: f32[2,8,32], index: 14, kind: output, shape index: {}]
  %s15 = sld [smem:[#allocation0]]
  $region74: #{tpu_custom_call.1} parent=0
    _
  %s17 = ssub.s32 1, %s15
  %s18 = scalar_select 0, %s17, %s15
  $region1: #{tpu_custom_call.1} parent=0
    #allocation2 [shape = 'u8[8192]{0}', space=vmem, size = 0x2000, scoped, tag = 'input window, operand 0, single buffered']
    #allocation3 [shape = 's32[1]{0}', space=sflag, size = 0x4, scoped, tag = 'scoped memory for tpu_custom_call.1']
    #allocation4 [shape = 's32[1]{0}', space=sflag, size = 0x4, scoped, tag = 'scoped memory for tpu_custom_call.1']
    #allocation5 [shape = 'u8[1024]{0}', space=vmem, size = 0x400, scoped, tag = 'input window, operand 1, single buffered']
    #allocation6 [shape = 's32[1]{0}', space=sflag, size = 0x4, scoped, tag = 'scoped memory for tpu_custom_call.1']
    #allocation7 [shape = 'u8[8192]{0}', space=vmem, size = 0x2000, scoped, tag = 'output window, operand 0, single buffered']
    %19 = vsyncpa [#allocation3], 0
    %20 = vsyncpa [#allocation6], 0
    %21 = vsyncpa [#allocation4], 0
    // Predicated region
    $region2: #{tpu_custom_call.1} parent=1 // pred_check
      _
    $region3: #{tpu_custom_call.1} parent=1 // pred_check_branch
      %23 = sbr.rel (0) target = $region5
    $region4: #{tpu_custom_call.1} parent=1 // pred_region
      %25 = vsyncadd [#allocation3], 0
      %s26 = sshll.u32 %s0, 4
      %s27 = int_to_ptr.hbm [resolvable:$true] %s26
      %s28 = sshll.u32 [#allocation2], 4
      %s29 = int_to_ptr.vmem [resolvable:$true] %s28
      %34 = dma.hbm_to_vmem [thread:$0]  %s27, 256, %s29, [#allocation3], 128, 128, 8
    $region5: #{tpu_custom_call.1} parent=1 // pred_fallthru
      _
    // Predicated region
    $region6: #{tpu_custom_call.1} parent=1 // pred_check
      _
    $region7: #{tpu_custom_call.1} parent=1 // pred_check_branch
      %36 = sbr.rel (0) target = $region9
    $region8: #{tpu_custom_call.1} parent=1 // pred_region
      %38 = vsyncadd [#allocation6], 0
      %s39 = sshll.u32 %s1, 4
      %s40 = int_to_ptr.hbm [resolvable:$true] %s39
      %s41 = sshll.u32 [#allocation5], 4
      %s42 = int_to_ptr.vmem [resolvable:$true] %s41
      %47 = dma.hbm_to_vmem [thread:$0]  %s40, 32, %s42, [#allocation6], 16, 16, 1
    $region9: #{tpu_custom_call.1} parent=1 // pred_fallthru
      _
    // Predicated region
    $region10: #{tpu_custom_call.1} parent=1 // pred_check
      _
    $region11: #{tpu_custom_call.1} parent=1 // pred_check_branch
      %49 = sbr.rel (0) target = $region13
    $region12: #{tpu_custom_call.1} parent=1 // pred_region
      _
    $region13: #{tpu_custom_call.1} parent=1 // pred_fallthru
      _
    // Predicated region
    $region14: #{tpu_custom_call.1} parent=1 // pred_check
      _
    $region15: #{tpu_custom_call.1} parent=1 // pred_check_branch
      %51 = sbr.rel (0) target = $region17
    $region16: #{tpu_custom_call.1} parent=1 // pred_region
      _
    $region17: #{tpu_custom_call.1} parent=1 // pred_fallthru
      _
    // Predicated region
    $region18: #{tpu_custom_call.1} parent=1 // pred_check
      _
    $region19: #{tpu_custom_call.1} parent=1 // pred_check_branch
      %53 = sbr.rel (0) target = $region21
    $region20: #{tpu_custom_call.1} parent=1 // pred_region
      _
    $region21: #{tpu_custom_call.1} parent=1 // pred_fallthru
      _
    // Predicated region
    $region22: #{tpu_custom_call.1} parent=1 // pred_check
      _
    $region23: #{tpu_custom_call.1} parent=1 // pred_check_branch
      %55 = sbr.rel (0) target = $region25
    $region24: #{tpu_custom_call.1} parent=1 // pred_region
      _
    $region25: #{tpu_custom_call.1} parent=1 // pred_fallthru
      _
    // Predicated region
    $region26: #{tpu_custom_call.1} parent=1 // pred_check
      _
    $region27: #{tpu_custom_call.1} parent=1 // pred_check_branch
      %57 = sbr.rel (0) target = $region29
    $region28: #{tpu_custom_call.1} parent=1 // pred_region
      _
    $region29: #{tpu_custom_call.1} parent=1 // pred_fallthru
      _
    // Predicated region
    $region30: #{tpu_custom_call.1} parent=1 // pred_check
      _
    $region31: #{tpu_custom_call.1} parent=1 // pred_check_branch
      %59 = sbr.rel (0) target = $region33
    $region32: #{tpu_custom_call.1} parent=1 // pred_region
      _
    $region33: #{tpu_custom_call.1} parent=1 // pred_fallthru
      _
    // Predicated region
    $region34: #{tpu_custom_call.1} parent=1 // pred_check
      _
    $region35: #{tpu_custom_call.1} parent=1 // pred_check_branch
      %61 = sbr.rel (0) target = $region37
    $region36: #{tpu_custom_call.1} parent=1 // pred_region
      _
    $region37: #{tpu_custom_call.1} parent=1 // pred_fallthru
      _
    // Predicated region
    $region38: #{tpu_custom_call.1} parent=1 // pred_check
      _
    $region39: #{tpu_custom_call.1} parent=1 // pred_check_branch
      %63 = sbr.rel (0) target = $region41
    $region40: #{tpu_custom_call.1} parent=1 // pred_region
      _
    $region41: #{tpu_custom_call.1} parent=1 // pred_fallthru
      _
    // Predicated region
    $region42: #{tpu_custom_call.1} parent=1 // pred_check
      _
    $region43: #{tpu_custom_call.1} parent=1 // pred_check_branch
      %65 = sbr.rel (0) target = $region45
    $region44: #{tpu_custom_call.1} parent=1 // pred_region
      _
    $region45: #{tpu_custom_call.1} parent=1 // pred_fallthru
      _
    // Predicated region
    $region46: #{tpu_custom_call.1} parent=1 // pred_check
      _
    $region47: #{tpu_custom_call.1} parent=1 // pred_check_branch
      %67 = sbr.rel (0) target = $region49
    $region48: #{tpu_custom_call.1} parent=1 // pred_region
      _
    $region49: #{tpu_custom_call.1} parent=1 // pred_fallthru
      _
    // Predicated region
    $region50: #{tpu_custom_call.1} parent=1 // pred_check
      _
    $region51: #{tpu_custom_call.1} parent=1 // pred_check_branch
      %69 = sbr.rel (0) target = $region53
    $region52: #{tpu_custom_call.1} parent=1 // pred_region
      _
    $region53: #{tpu_custom_call.1} parent=1 // pred_fallthru
      _
    // Predicated region
    $region54: #{tpu_custom_call.1} parent=1 // pred_check
      _
    $region55: #{tpu_custom_call.1} parent=1 // pred_check_branch
      %71 = sbr.rel (0) target = $region57
    $region56: #{tpu_custom_call.1} parent=1 // pred_region
      _
    $region57: #{tpu_custom_call.1} parent=1 // pred_fallthru
      _
    // Predicated region
    $region58: #{tpu_custom_call.1} parent=1 // pred_check
      _
    $region59: #{tpu_custom_call.1} parent=1 // pred_check_branch
      %73 = sbr.rel (0) target = $region61
    $region60: #{tpu_custom_call.1} parent=1 // pred_region
      %75 = dma.done [#allocation3], 256
    $region61: #{tpu_custom_call.1} parent=1 // pred_fallthru
      _
    // Predicated region
    $region62: #{tpu_custom_call.1} parent=1 // pred_check
      _
    $region63: #{tpu_custom_call.1} parent=1 // pred_check_branch
      %77 = sbr.rel (0) target = $region65
    $region64: #{tpu_custom_call.1} parent=1 // pred_region
      %79 = dma.done [#allocation6], 32
    $region65: #{tpu_custom_call.1} parent=1 // pred_fallthru
      _
    %v80 = vld [vmem:[%s2] sm:$0xff]
    %v81 = vld [vmem:[%s2 + $0x8] sm:$0xff]
    %v82 = vld [vmem:[%s2 + $0x10] sm:$0xff]
    %v83 = vld [vmem:[%s2 + $0x18] sm:$0xff]
    %v84 = vld [vmem:[%s3] sm:$0x1]
    %v85 = vld [vmem:[%s4] sm:$0xff]
    %v86 = vld [vmem:[%s4 + $0x8] sm:$0xff]
    %v87 = vld [vmem:[%s4 + $0x10] sm:$0xff]
    %v88 = vld [vmem:[%s4 + $0x18] sm:$0xff]
    %v89 = vld [vmem:[%s5] sm:$0x1]
    %v90 = vld [vmem:[%s6] sm:$0x1]
    %v91 = vld [vmem:[%s7] sm:$0x1]
    %v92 = vld [vmem:[%s8] sm:$0xff]
    %v93 = vld [vmem:[%s8 + $0x8] sm:$0xff]
    %v94 = vld [vmem:[%s8 + $0x10] sm:$0xff]
    %v95 = vld [vmem:[%s8 + $0x18] sm:$0xff]
    %v96 = vld [vmem:[%s9] sm:$0x1]
    %v97 = vld [vmem:[%s10] sm:$0xff]
    %v98 = vld [vmem:[%s10 + $0x8] sm:$0xff]
    %v99 = vld [vmem:[%s10 + $0x10] sm:$0xff]
    %v100 = vld [vmem:[%s10 + $0x18] sm:$0xff]
    %v101 = vld [vmem:[%s10 + $0x20] sm:$0xff]
    %v102 = vld [vmem:[%s10 + $0x28] sm:$0xff]
    %v103 = vld [vmem:[%s10 + $0x30] sm:$0xff]
    %v104 = vld [vmem:[%s10 + $0x38] sm:$0xff]
    %v105 = vld [vmem:[%s11] sm:$0x1]
    %v106 = vld [vmem:[%s12] sm:$0x1]
    %v107 = vld [vmem:[%s13] sm:$0x1]
    %v108 = vld [vmem:[#allocation2] sm:$0xff]
    %v109 = vld [vmem:[#allocation5] sm:$0x1]
    %vm110 = vcmp.eq.f32.partialorder %v109, 0.0
    %v111 = vsel %vm110, -1e+10, 0.0
    %v113 = vperm.slane %v84, 0
    %vm115 = vcmask 261120
    %v117 = vsel %vm115, %v108, 0
    %119 = vmatpush.msra.mxu0 0.0
    %120 = vmatpush.msra.mxu0 0.0
    %121 = vmatpush.msra.mxu0 0.0
    %122 = vmatpush.msra.mxu0 0.0
    %123 = vmatpush.msra.mxu0 0.0
    %124 = vmatpush.msra.mxu0 0.0
    %125 = vmatpush.msra.mxu0 0.0
    %126 = vmatpush.msra.mxu0 0.0
    %127 = vmatpush.msra.mxu0 0.0
    %128 = vmatpush.msra.mxu0 0.0
    %129 = vmatpush.msra.mxu0 0.0
    %130 = vmatpush.msra.mxu0 0.0
    %131 = vmatpush.msra.mxu0 %v83
    %132 = vmatpush.msra.mxu0 %v82
    %133 = vmatpush.msra.mxu0 %v81
    %134 = vmatpush.msra.mxu0 %v80
    %135 = vmatmul.f32.gmra.mxu0 %v117
    %v136 = vpop.f32.mrf.mxu0
    %v137 = vadd.f32 %v113, %v136
    %138 = vdwg.mxu0
    %v139 = vmul.f32 %v137, 0.35355338
    %v141 = vperm.slane %v111, 0
    %144 = vrot.lane.b32.xlu0 %v137, 96
    %v145 = vpop.permute.xlu0 %144
    %vm146 = vcmask 64512
    %v148 = vsel %vm146, %v139, 0
    %v150 = vsel %vm146, %v145, 0
    %152 = vmatpush.xpose.msra.mxu0 0.0
    %153 = vmatpush.xpose.msra.mxu0 0.0
    %154 = vmatpush.xpose.msra.mxu0 0.0
    %155 = vmatpush.xpose.msra.mxu0 0.0
    %156 = vmatpush.xpose.msra.mxu0 0.0
    %157 = vmatpush.xpose.msra.mxu0 0.0
    %158 = vmatpush.xpose.msra.mxu0 0.0
    %159 = vmatpush.xpose.msra.mxu0 0.0
    %160 = vmatpush.xpose.msra.mxu0 0.0
    %161 = vmatpush.xpose.msra.mxu0 0.0
    %162 = vmatpush.xpose.msra.mxu0 0.0
    %163 = vmatpush.xpose.msra.mxu0 0.0
    %164 = vmatpush.xpose.msra.mxu0 0.0
    %165 = vmatpush.xpose.msra.mxu0 0.0
    %166 = vmatpush.xpose.msra.mxu0 0.0
    %167 = vmatpush.xpose.msra.mxu0 %v150
    %168 = vmatmul.f32.gmra.mxu0 %v148
    %v169 = vpop.f32.mrf.mxu0
    %v170 = vadd.f32 %v141, %v169
    %171 = vdwg.mxu0
    %v172 = vsel %vm146, %v170, -inf
    %173 = vmax.xlane.f32.xlu0 %v172
    %v174 = vpop.xlane.xlu0 %173
    %v175 = vsub.f32 %v170, %v174
    %v176 = vmul.f32 %v175, 1.442695
    %v177 = vpow.pop %v176
    %v178 = vsel %vm146, %v177, 0.0
    %179 = vadd.xlane.f32.xlu0 %v178
    %v180 = vpop.xlane.xlu0 %179
    %v181 = vrcp.pop %v180
    %v182 = vmul.f32 %v180, %v181
    %v183 = vsub.f32 1.0, %v182
    %v184 = vmul.f32 %v181, %v183
    %v185 = vadd.f32 %v181, %v184
    %vm186 = vweird.f32 %v180
    %vm187 = vweird.f32 %v181
    %vm188 = vmor %vm186, %vm187
    %v189 = vsel %vm188, %v181, %v185
    %v190 = vand.u32 2147483647, %v180
    %vm191 = vcmp.eq.f32.partialorder %v190, 8.507059e+37
    %v192 = vand.u32 %v180, 2147483648
    %v193 = vor.u32 1.1754944e-38, %v192
    %v194 = vsel %vm191, %v193, %v189
    %v195 = vmul.f32 %v177, %v194
    %196 = vrot.lane.b32.xlu0 %v137, 64
    %v197 = vpop.permute.xlu0 %196
    %v200 = vsel %vm146, %v195, 0
    %202 = vmatpush.msra.mxu0 0.0
    %203 = vmatpush.msra.mxu0 0.0
    %204 = vmatpush.msra.mxu0 0.0
    %205 = vmatpush.msra.mxu0 0.0
    %206 = vmatpush.msra.mxu0 0.0
    %207 = vmatpush.msra.mxu0 0.0
    %208 = vmatpush.msra.mxu0 0.0
    %209 = vmatpush.msra.mxu0 0.0
    %210 = vmatpush.msra.mxu0 0.0
    %211 = vmatpush.msra.mxu0 0.0
    %212 = vmatpush.msra.mxu0 0.0
    %213 = vmatpush.msra.mxu0 0.0
    %214 = vmatpush.msra.mxu0 0.0
    %215 = vmatpush.msra.mxu0 0.0
    %216 = vmatpush.msra.mxu0 0.0
    %217 = vmatpush.msra.mxu0 %v197
    %218 = vmatmul.f32.gmra.mxu0 %v200
    %v219 = vpop.f32.mrf.mxu0
    %v220 = vadd.f32 0.0, %v219
    %221 = vdwg.mxu0
    %222 = vrot.lane.b32.xlu0 %v139, 120
    %v223 = vpop.permute.xlu0 %222
    %224 = vrot.lane.b32.xlu0 %v137, 88
    %v225 = vpop.permute.xlu0 %224
    %v226 = vsel %vm146, %v223, 0
    %v228 = vsel %vm146, %v225, 0
    %230 = vmatpush.xpose.msra.mxu0 0.0
    %231 = vmatpush.xpose.msra.mxu0 0.0
    %232 = vmatpush.xpose.msra.mxu0 0.0
    %233 = vmatpush.xpose.msra.mxu0 0.0
    %234 = vmatpush.xpose.msra.mxu0 0.0
    %235 = vmatpush.xpose.msra.mxu0 0.0
    %236 = vmatpush.xpose.msra.mxu0 0.0
    %237 = vmatpush.xpose.msra.mxu0 0.0
    %238 = vmatpush.xpose.msra.mxu0 0.0
    %239 = vmatpush.xpose.msra.mxu0 0.0
    %240 = vmatpush.xpose.msra.mxu0 0.0
    %241 = vmatpush.xpose.msra.mxu0 0.0
    %242 = vmatpush.xpose.msra.mxu0 0.0
    %243 = vmatpush.xpose.msra.mxu0 0.0
    %244 = vmatpush.xpose.msra.mxu0 0.0
    %245 = vmatpush.xpose.msra.mxu0 %v228
    %246 = vmatmul.f32.gmra.mxu0 %v226
    %v247 = vpop.f32.mrf.mxu0
    %v248 = vadd.f32 %v141, %v247
    %249 = vdwg.mxu0
    %v250 = vsel %vm146, %v248, -inf
    %251 = vmax.xlane.f32.xlu0 %v250
    %v252 = vpop.xlane.xlu0 %251
    %v253 = vsub.f32 %v248, %v252
    %v254 = vmul.f32 %v253, 1.442695
    %v255 = vpow.pop %v254
    %v256 = vsel %vm146, %v255, 0.0
    %257 = vadd.xlane.f32.xlu0 %v256
    %v258 = vpop.xlane.xlu0 %257
    %v259 = vrcp.pop %v258
    %v260 = vmul.f32 %v258, %v259
    %v261 = vsub.f32 1.0, %v260
    %v262 = vmul.f32 %v259, %v261
    %v263 = vadd.f32 %v259, %v262
    %vm264 = vweird.f32 %v258
    %vm265 = vweird.f32 %v259
    %vm266 = vmor %vm264, %vm265
    %v267 = vsel %vm266, %v259, %v263
    %v268 = vand.u32 2147483647, %v258
    %vm269 = vcmp.eq.f32.partialorder %v268, 8.507059e+37
    %v270 = vand.u32 %v258, 2147483648
    %v271 = vor.u32 1.1754944e-38, %v270
    %v272 = vsel %vm269, %v271, %v267
    %v273 = vmul.f32 %v255, %v272
    %274 = vrot.lane.b32.xlu0 %v137, 56
    %v275 = vpop.permute.xlu0 %274
    %v278 = vsel %vm146, %v273, 0
    %280 = vmatpush.msra.mxu0 0.0
    %281 = vmatpush.msra.mxu0 0.0
    %282 = vmatpush.msra.mxu0 0.0
    %283 = vmatpush.msra.mxu0 0.0
    %284 = vmatpush.msra.mxu0 0.0
    %285 = vmatpush.msra.mxu0 0.0
    %286 = vmatpush.msra.mxu0 0.0
    %287 = vmatpush.msra.mxu0 0.0
    %288 = vmatpush.msra.mxu0 0.0
    %289 = vmatpush.msra.mxu0 0.0
    %290 = vmatpush.msra.mxu0 0.0
    %291 = vmatpush.msra.mxu0 0.0
    %292 = vmatpush.msra.mxu0 0.0
    %293 = vmatpush.msra.mxu0 0.0
    %294 = vmatpush.msra.mxu0 0.0
    %295 = vmatpush.msra.mxu0 %v275
    %296 = vmatmul.f32.gmra.mxu0 %v278
    %v297 = vpop.f32.mrf.mxu0
    %v298 = vadd.f32 0.0, %v297
    %299 = vdwg.mxu0
    %300 = vrot.lane.b32.xlu0 %v139, 112
    %v301 = vpop.permute.xlu0 %300
    %302 = vrot.lane.b32.xlu0 %v137, 80
    %v303 = vpop.permute.xlu0 %302
    %v304 = vsel %vm146, %v301, 0
    %v306 = vsel %vm146, %v303, 0
    %308 = vmatpush.xpose.msra.mxu0 0.0
    %309 = vmatpush.xpose.msra.mxu0 0.0
    %310 = vmatpush.xpose.msra.mxu0 0.0
    %311 = vmatpush.xpose.msra.mxu0 0.0
    %312 = vmatpush.xpose.msra.mxu0 0.0
    %313 = vmatpush.xpose.msra.mxu0 0.0
    %314 = vmatpush.xpose.msra.mxu0 0.0
    %315 = vmatpush.xpose.msra.mxu0 0.0
    %316 = vmatpush.xpose.msra.mxu0 0.0
    %317 = vmatpush.xpose.msra.mxu0 0.0
    %318 = vmatpush.xpose.msra.mxu0 0.0
    %319 = vmatpush.xpose.msra.mxu0 0.0
    %320 = vmatpush.xpose.msra.mxu0 0.0
    %321 = vmatpush.xpose.msra.mxu0 0.0
    %322 = vmatpush.xpose.msra.mxu0 0.0
    %323 = vmatpush.xpose.msra.mxu0 %v306
    %324 = vmatmul.f32.gmra.mxu0 %v304
    %v325 = vpop.f32.mrf.mxu0
    %v326 = vadd.f32 %v141, %v325
    %327 = vdwg.mxu0
    %v328 = vsel %vm146, %v326, -inf
    %329 = vmax.xlane.f32.xlu0 %v328
    %v330 = vpop.xlane.xlu0 %329
    %v331 = vsub.f32 %v326, %v330
    %v332 = vmul.f32 %v331, 1.442695
    %v333 = vpow.pop %v332
    %v334 = vsel %vm146, %v333, 0.0
    %335 = vadd.xlane.f32.xlu0 %v334
    %v336 = vpop.xlane.xlu0 %335
    %v337 = vrcp.pop %v336
    %v338 = vmul.f32 %v336, %v337
    %v339 = vsub.f32 1.0, %v338
    %v340 = vmul.f32 %v337, %v339
    %v341 = vadd.f32 %v337, %v340
    %vm342 = vweird.f32 %v336
    %vm343 = vweird.f32 %v337
    %vm344 = vmor %vm342, %vm343
    %v345 = vsel %vm344, %v337, %v341
    %v346 = vand.u32 2147483647, %v336
    %vm347 = vcmp.eq.f32.partialorder %v346, 8.507059e+37
    %v348 = vand.u32 %v336, 2147483648
    %v349 = vor.u32 1.1754944e-38, %v348
    %v350 = vsel %vm347, %v349, %v345
    %v351 = vmul.f32 %v333, %v350
    %352 = vrot.lane.b32.xlu0 %v137, 48
    %v353 = vpop.permute.xlu0 %352
    %v356 = vsel %vm146, %v351, 0
    %358 = vmatpush.msra.mxu0 0.0
    %359 = vmatpush.msra.mxu0 0.0
    %360 = vmatpush.msra.mxu0 0.0
    %361 = vmatpush.msra.mxu0 0.0
    %362 = vmatpush.msra.mxu0 0.0
    %363 = vmatpush.msra.mxu0 0.0
    %364 = vmatpush.msra.mxu0 0.0
    %365 = vmatpush.msra.mxu0 0.0
    %366 = vmatpush.msra.mxu0 0.0
    %367 = vmatpush.msra.mxu0 0.0
    %368 = vmatpush.msra.mxu0 0.0
    %369 = vmatpush.msra.mxu0 0.0
    %370 = vmatpush.msra.mxu0 0.0
    %371 = vmatpush.msra.mxu0 0.0
    %372 = vmatpush.msra.mxu0 0.0
    %373 = vmatpush.msra.mxu0 %v353
    %374 = vmatmul.f32.gmra.mxu0 %v356
    %v375 = vpop.f32.mrf.mxu0
    %v376 = vadd.f32 0.0, %v375
    %377 = vdwg.mxu0
    %378 = vrot.lane.b32.xlu0 %v139, 104
    %v379 = vpop.permute.xlu0 %378
    %380 = vrot.lane.b32.xlu0 %v137, 72
    %v381 = vpop.permute.xlu0 %380
    %v382 = vsel %vm146, %v379, 0
    %v384 = vsel %vm146, %v381, 0
    %386 = vmatpush.xpose.msra.mxu0 0.0
    %387 = vmatpush.xpose.msra.mxu0 0.0
    %388 = vmatpush.xpose.msra.mxu0 0.0
    %389 = vmatpush.xpose.msra.mxu0 0.0
    %390 = vmatpush.xpose.msra.mxu0 0.0
    %391 = vmatpush.xpose.msra.mxu0 0.0
    %392 = vmatpush.xpose.msra.mxu0 0.0
    %393 = vmatpush.xpose.msra.mxu0 0.0
    %394 = vmatpush.xpose.msra.mxu0 0.0
    %395 = vmatpush.xpose.msra.mxu0 0.0
    %396 = vmatpush.xpose.msra.mxu0 0.0
    %397 = vmatpush.xpose.msra.mxu0 0.0
    %398 = vmatpush.xpose.msra.mxu0 0.0
    %399 = vmatpush.xpose.msra.mxu0 0.0
    %400 = vmatpush.xpose.msra.mxu0 0.0
    %401 = vmatpush.xpose.msra.mxu0 %v384
    %402 = vmatmul.f32.gmra.mxu0 %v382
    %v403 = vpop.f32.mrf.mxu0
    %v404 = vadd.f32 %v141, %v403
    %405 = vdwg.mxu0
    %v406 = vsel %vm146, %v404, -inf
    %407 = vmax.xlane.f32.xlu0 %v406
    %v408 = vpop.xlane.xlu0 %407
    %v409 = vsub.f32 %v404, %v408
    %v410 = vmul.f32 %v409, 1.442695
    %v411 = vpow.pop %v410
    %v412 = vsel %vm146, %v411, 0.0
    %413 = vadd.xlane.f32.xlu0 %v412
    %v414 = vpop.xlane.xlu0 %413
    %v415 = vrcp.pop %v414
    %v416 = vmul.f32 %v414, %v415
    %v417 = vsub.f32 1.0, %v416
    %v418 = vmul.f32 %v415, %v417
    %v419 = vadd.f32 %v415, %v418
    %vm420 = vweird.f32 %v414
    %vm421 = vweird.f32 %v415
    %vm422 = vmor %vm420, %vm421
    %v423 = vsel %vm422, %v415, %v419
    %v424 = vand.u32 2147483647, %v414
    %vm425 = vcmp.eq.f32.partialorder %v424, 8.507059e+37
    %v426 = vand.u32 %v414, 2147483648
    %v427 = vor.u32 1.1754944e-38, %v426
    %v428 = vsel %vm425, %v427, %v423
    %v429 = vmul.f32 %v411, %v428
    %430 = vrot.lane.b32.xlu0 %v137, 40
    %v431 = vpop.permute.xlu0 %430
    %v434 = vsel %vm146, %v429, 0
    %436 = vmatpush.msra.mxu0 0.0
    %437 = vmatpush.msra.mxu0 0.0
    %438 = vmatpush.msra.mxu0 0.0
    %439 = vmatpush.msra.mxu0 0.0
    %440 = vmatpush.msra.mxu0 0.0
    %441 = vmatpush.msra.mxu0 0.0
    %442 = vmatpush.msra.mxu0 0.0
    %443 = vmatpush.msra.mxu0 0.0
    %444 = vmatpush.msra.mxu0 0.0
    %445 = vmatpush.msra.mxu0 0.0
    %446 = vmatpush.msra.mxu0 0.0
    %447 = vmatpush.msra.mxu0 0.0
    %448 = vmatpush.msra.mxu0 0.0
    %449 = vmatpush.msra.mxu0 0.0
    %450 = vmatpush.msra.mxu0 0.0
    %451 = vmatpush.msra.mxu0 %v431
    %452 = vmatmul.f32.gmra.mxu0 %v434
    %v453 = vpop.f32.mrf.mxu0
    %v454 = vadd.f32 0.0, %v453
    %455 = vdwg.mxu0
    %457 = vrot.lane.b32.xlu0 %v298, 8
    %v458 = vpop.permute.xlu0 %457
    %461 = vrot.lane.b32.xlu0 %v376, 16
    %v462 = vpop.permute.xlu0 %461
    %465 = vrot.lane.b32.xlu0 %v454, 24
    %v466 = vpop.permute.xlu0 %465
    %v468 = vsel %vm146, %v220, %v458
    %vm469 = vcmask 130048
    %v470 = vsel %vm469, %v468, %v462
    %vm471 = vcmask 195584
    %v472 = vsel %vm471, %v470, %v466
    %v474 = vperm.slane %v89, 0
    %v477 = vsel %vm115, %v472, 0
    %479 = vmatpush.msra.mxu0 0.0
    %480 = vmatpush.msra.mxu0 0.0
    %481 = vmatpush.msra.mxu0 0.0
    %482 = vmatpush.msra.mxu0 0.0
    %483 = vmatpush.msra.mxu0 0.0
    %484 = vmatpush.msra.mxu0 0.0
    %485 = vmatpush.msra.mxu0 0.0
    %486 = vmatpush.msra.mxu0 0.0
    %487 = vmatpush.msra.mxu0 0.0
    %488 = vmatpush.msra.mxu0 0.0
    %489 = vmatpush.msra.mxu0 0.0
    %490 = vmatpush.msra.mxu0 0.0
    %491 = vmatpush.msra.mxu0 %v88
    %492 = vmatpush.msra.mxu0 %v87
    %493 = vmatpush.msra.mxu0 %v86
    %494 = vmatpush.msra.mxu0 %v85
    %495 = vmatmul.f32.gmra.mxu0 %v477
    %v496 = vpop.f32.mrf.mxu0
    %v497 = vadd.f32 %v474, %v496
    %498 = vdwg.mxu0
    %v499 = vadd.f32 %v108, %v497
    %v500 = vsel %vm115, %v499, 0.0
    %501 = vadd.xlane.f32.xlu0 %v500
    %v502 = vpop.xlane.xlu0 %501
    %v503 = vrcp.pop 32.0
    %v504 = vmul.f32 32.0, %v503
    %v505 = vsub.f32 1.0, %v504
    %v506 = vmul.f32 %v503, %v505
    %v507 = vadd.f32 %v503, %v506
    %vm508 = vweird.f32 %v503
    %v509 = vsel %vm508, %v503, %v507
    %v510 = vmul.f32 %v502, %v509
    %v511 = vsub.f32 %v499, %v510
    %v512 = vmul.f32 %v511, %v511
    %v513 = vsel %vm115, %v512, 0.0
    %514 = vadd.xlane.f32.xlu0 %v513
    %v515 = vpop.xlane.xlu0 %514
    %v516 = vmul.f32 %v515, %v509
    %v517 = vadd.f32 %v516, 1e-05
    %v518 = vrsqrt.pop %v517
    %v519 = vmul.f32 %v518, %v517
    %v520 = vmul.f32 %v519, %v518
    %v521 = vmul.f32 0.5, %v520
    %v522 = vsub.f32 1.5, %v521
    %v523 = vmul.f32 %v518, %v522
    %vm524 = vweird.f32 %v517
    %vm525 = vweird.f32 %v518
    %vm526 = vmor %vm524, %vm525
    %v527 = vsel %vm526, %v518, %v523
    %v528 = vmul.f32 %v511, %v527
    %v530 = vperm.slane %v90, 0
    %v532 = vmul.f32 %v528, %v530
    %v534 = vperm.slane %v91, 0
    %v536 = vadd.f32 %v532, %v534
    %v538 = vperm.slane %v96, 0
    %v541 = vsel %vm115, %v536, 0
    %543 = vmatpush.msra.mxu0 0.0
    %544 = vmatpush.msra.mxu0 0.0
    %545 = vmatpush.msra.mxu0 0.0
    %546 = vmatpush.msra.mxu0 0.0
    %547 = vmatpush.msra.mxu0 0.0
    %548 = vmatpush.msra.mxu0 0.0
    %549 = vmatpush.msra.mxu0 0.0
    %550 = vmatpush.msra.mxu0 0.0
    %551 = vmatpush.msra.mxu0 0.0
    %552 = vmatpush.msra.mxu0 0.0
    %553 = vmatpush.msra.mxu0 0.0
    %554 = vmatpush.msra.mxu0 0.0
    %555 = vmatpush.msra.mxu0 %v95
    %556 = vmatpush.msra.mxu0 %v94
    %557 = vmatpush.msra.mxu0 %v93
    %558 = vmatpush.msra.mxu0 %v92
    %559 = vmatmul.f32.gmra.mxu0 %v541
    %v560 = vpop.f32.mrf.mxu0
    %v561 = vadd.f32 %v538, %v560
    %562 = vdwg.mxu0
    %v563 = vmax.f32 %v561, 0.0
    %v565 = vperm.slane %v105, 0
    %vm567 = vcmask 523264
    %v569 = vsel %vm567, %v563, 0
    %571 = vmatpush.msra.mxu0 0.0
    %572 = vmatpush.msra.mxu0 0.0
    %573 = vmatpush.msra.mxu0 0.0
    %574 = vmatpush.msra.mxu0 0.0
    %575 = vmatpush.msra.mxu0 0.0
    %576 = vmatpush.msra.mxu0 0.0
    %577 = vmatpush.msra.mxu0 0.0
    %578 = vmatpush.msra.mxu0 0.0
    %579 = vmatpush.msra.mxu0 %v104
    %580 = vmatpush.msra.mxu0 %v103
    %581 = vmatpush.msra.mxu0 %v102
    %582 = vmatpush.msra.mxu0 %v101
    %583 = vmatpush.msra.mxu0 %v100
    %584 = vmatpush.msra.mxu0 %v99
    %585 = vmatpush.msra.mxu0 %v98
    %586 = vmatpush.msra.mxu0 %v97
    %587 = vmatmul.f32.gmra.mxu0 %v569
    %v588 = vpop.f32.mrf.mxu0
    %v589 = vadd.f32 %v565, %v588
    %590 = vdwg.mxu0
    %v591 = vadd.f32 %v536, %v589
    %v592 = vsel %vm115, %v591, 0.0
    %593 = vadd.xlane.f32.xlu0 %v592
    %v594 = vpop.xlane.xlu0 %593
    %v595 = vmul.f32 %v594, %v509
    %v596 = vsub.f32 %v591, %v595
    %v597 = vmul.f32 %v596, %v596
    %v598 = vsel %vm115, %v597, 0.0
    %599 = vadd.xlane.f32.xlu0 %v598
    %v600 = vpop.xlane.xlu0 %599
    %v601 = vmul.f32 %v600, %v509
    %v602 = vadd.f32 %v601, 1e-05
    %v603 = vrsqrt.pop %v602
    %v604 = vmul.f32 %v603, %v602
    %v605 = vmul.f32 %v604, %v603
    %v606 = vmul.f32 0.5, %v605
    %v607 = vsub.f32 1.5, %v606
    %v608 = vmul.f32 %v603, %v607
    %vm609 = vweird.f32 %v602
    %vm610 = vweird.f32 %v603
    %vm611 = vmor %vm609, %vm610
    %v612 = vsel %vm611, %v603, %v608
    %v613 = vmul.f32 %v596, %v612
    %v615 = vperm.slane %v106, 0
    %v617 = vmul.f32 %v613, %v615
    %v619 = vperm.slane %v107, 0
    %v621 = vadd.f32 %v617, %v619
    %622 = vst.msk [vmem:[#allocation7] sm:$0xff] %vm115, %v621
    %s623 = scalar_lea.vmem [#allocation2], 8
    %v624 = vld [vmem:[%s623] sm:$0xff]
    %s625 = scalar_lea.vmem [#allocation5], 1
    %v626 = vld [vmem:[%s625] sm:$0x1]
    %vm627 = vcmp.eq.f32.partialorder %v626, 0.0
    %v628 = vsel %vm627, -1e+10, 0.0
    %v630 = vsel %vm115, %v624, 0
    %632 = vmatpush.msra.mxu0 0.0
    %633 = vmatpush.msra.mxu0 0.0
    %634 = vmatpush.msra.mxu0 0.0
    %635 = vmatpush.msra.mxu0 0.0
    %636 = vmatpush.msra.mxu0 0.0
    %637 = vmatpush.msra.mxu0 0.0
    %638 = vmatpush.msra.mxu0 0.0
    %639 = vmatpush.msra.mxu0 0.0
    %640 = vmatpush.msra.mxu0 0.0
    %641 = vmatpush.msra.mxu0 0.0
    %642 = vmatpush.msra.mxu0 0.0
    %643 = vmatpush.msra.mxu0 0.0
    %644 = vmatpush.msra.mxu0 %v83
    %645 = vmatpush.msra.mxu0 %v82
    %646 = vmatpush.msra.mxu0 %v81
    %647 = vmatpush.msra.mxu0 %v80
    %648 = vmatmul.f32.gmra.mxu0 %v630
    %v649 = vpop.f32.mrf.mxu0
    %v650 = vadd.f32 %v113, %v649
    %651 = vdwg.mxu0
    %v652 = vmul.f32 %v650, 0.35355338
    %v654 = vperm.slane %v628, 0
    %657 = vrot.lane.b32.xlu0 %v650, 96
    %v658 = vpop.permute.xlu0 %657
    %v660 = vsel %vm146, %v652, 0
    %v662 = vsel %vm146, %v658, 0
    %664 = vmatpush.xpose.msra.mxu0 0.0
    %665 = vmatpush.xpose.msra.mxu0 0.0
    %666 = vmatpush.xpose.msra.mxu0 0.0
    %667 = vmatpush.xpose.msra.mxu0 0.0
    %668 = vmatpush.xpose.msra.mxu0 0.0
    %669 = vmatpush.xpose.msra.mxu0 0.0
    %670 = vmatpush.xpose.msra.mxu0 0.0
    %671 = vmatpush.xpose.msra.mxu0 0.0
    %672 = vmatpush.xpose.msra.mxu0 0.0
    %673 = vmatpush.xpose.msra.mxu0 0.0
    %674 = vmatpush.xpose.msra.mxu0 0.0
    %675 = vmatpush.xpose.msra.mxu0 0.0
    %676 = vmatpush.xpose.msra.mxu0 0.0
    %677 = vmatpush.xpose.msra.mxu0 0.0
    %678 = vmatpush.xpose.msra.mxu0 0.0
    %679 = vmatpush.xpose.msra.mxu0 %v662
    %680 = vmatmul.f32.gmra.mxu0 %v660
    %v681 = vpop.f32.mrf.mxu0
    %v682 = vadd.f32 %v654, %v681
    %683 = vdwg.mxu0
    %v684 = vsel %vm146, %v682, -inf
    %685 = vmax.xlane.f32.xlu0 %v684
    %v686 = vpop.xlane.xlu0 %685
    %v687 = vsub.f32 %v682, %v686
    %v688 = vmul.f32 %v687, 1.442695
    %v689 = vpow.pop %v688
    %v690 = vsel %vm146, %v689, 0.0
    %691 = vadd.xlane.f32.xlu0 %v690
    %v692 = vpop.xlane.xlu0 %691
    %v693 = vrcp.pop %v692
    %v694 = vmul.f32 %v692, %v693
    %v695 = vsub.f32 1.0, %v694
    %v696 = vmul.f32 %v693, %v695
    %v697 = vadd.f32 %v693, %v696
    %vm698 = vweird.f32 %v692
    %vm699 = vweird.f32 %v693
    %vm700 = vmor %vm698, %vm699
    %v701 = vsel %vm700, %v693, %v697
    %v702 = vand.u32 2147483647, %v692
    %vm703 = vcmp.eq.f32.partialorder %v702, 8.507059e+37
    %v704 = vand.u32 %v692, 2147483648
    %v705 = vor.u32 1.1754944e-38, %v704
    %v706 = vsel %vm703, %v705, %v701
    %v707 = vmul.f32 %v689, %v706
    %708 = vrot.lane.b32.xlu0 %v650, 64
    %v709 = vpop.permute.xlu0 %708
    %v712 = vsel %vm146, %v707, 0
    %714 = vmatpush.msra.mxu0 0.0
    %715 = vmatpush.msra.mxu0 0.0
    %716 = vmatpush.msra.mxu0 0.0
    %717 = vmatpush.msra.mxu0 0.0
    %718 = vmatpush.msra.mxu0 0.0
    %719 = vmatpush.msra.mxu0 0.0
    %720 = vmatpush.msra.mxu0 0.0
    %721 = vmatpush.msra.mxu0 0.0
    %722 = vmatpush.msra.mxu0 0.0
    %723 = vmatpush.msra.mxu0 0.0
    %724 = vmatpush.msra.mxu0 0.0
    %725 = vmatpush.msra.mxu0 0.0
    %726 = vmatpush.msra.mxu0 0.0
    %727 = vmatpush.msra.mxu0 0.0
    %728 = vmatpush.msra.mxu0 0.0
    %729 = vmatpush.msra.mxu0 %v709
    %730 = vmatmul.f32.gmra.mxu0 %v712
    %v731 = vpop.f32.mrf.mxu0
    %v732 = vadd.f32 0.0, %v731
    %733 = vdwg.mxu0
    %734 = vrot.lane.b32.xlu0 %v652, 120
    %v735 = vpop.permute.xlu0 %734
    %736 = vrot.lane.b32.xlu0 %v650, 88
    %v737 = vpop.permute.xlu0 %736
    %v738 = vsel %vm146, %v735, 0
    %v740 = vsel %vm146, %v737, 0
    %742 = vmatpush.xpose.msra.mxu0 0.0
    %743 = vmatpush.xpose.msra.mxu0 0.0
    %744 = vmatpush.xpose.msra.mxu0 0.0
    %745 = vmatpush.xpose.msra.mxu0 0.0
    %746 = vmatpush.xpose.msra.mxu0 0.0
    %747 = vmatpush.xpose.msra.mxu0 0.0
    %748 = vmatpush.xpose.msra.mxu0 0.0
    %749 = vmatpush.xpose.msra.mxu0 0.0
    %750 = vmatpush.xpose.msra.mxu0 0.0
    %751 = vmatpush.xpose.msra.mxu0 0.0
    %752 = vmatpush.xpose.msra.mxu0 0.0
    %753 = vmatpush.xpose.msra.mxu0 0.0
    %754 = vmatpush.xpose.msra.mxu0 0.0
    %755 = vmatpush.xpose.msra.mxu0 0.0
    %756 = vmatpush.xpose.msra.mxu0 0.0
    %757 = vmatpush.xpose.msra.mxu0 %v740
    %758 = vmatmul.f32.gmra.mxu0 %v738
    %v759 = vpop.f32.mrf.mxu0
    %v760 = vadd.f32 %v654, %v759
    %761 = vdwg.mxu0
    %v762 = vsel %vm146, %v760, -inf
    %763 = vmax.xlane.f32.xlu0 %v762
    %v764 = vpop.xlane.xlu0 %763
    %v765 = vsub.f32 %v760, %v764
    %v766 = vmul.f32 %v765, 1.442695
    %v767 = vpow.pop %v766
    %v768 = vsel %vm146, %v767, 0.0
    %769 = vadd.xlane.f32.xlu0 %v768
    %v770 = vpop.xlane.xlu0 %769
    %v771 = vrcp.pop %v770
    %v772 = vmul.f32 %v770, %v771
    %v773 = vsub.f32 1.0, %v772
    %v774 = vmul.f32 %v771, %v773
    %v775 = vadd.f32 %v771, %v774
    %vm776 = vweird.f32 %v770
    %vm777 = vweird.f32 %v771
    %vm778 = vmor %vm776, %vm777
    %v779 = vsel %vm778, %v771, %v775
    %v780 = vand.u32 2147483647, %v770
    %vm781 = vcmp.eq.f32.partialorder %v780, 8.507059e+37
    %v782 = vand.u32 %v770, 2147483648
    %v783 = vor.u32 1.1754944e-38, %v782
    %v784 = vsel %vm781, %v783, %v779
    %v785 = vmul.f32 %v767, %v784
    %786 = vrot.lane.b32.xlu0 %v650, 56
    %v787 = vpop.permute.xlu0 %786
    %v790 = vsel %vm146, %v785, 0
    %792 = vmatpush.msra.mxu0 0.0
    %793 = vmatpush.msra.mxu0 0.0
    %794 = vmatpush.msra.mxu0 0.0
    %795 = vmatpush.msra.mxu0 0.0
    %796 = vmatpush.msra.mxu0 0.0
    %797 = vmatpush.msra.mxu0 0.0
    %798 = vmatpush.msra.mxu0 0.0
    %799 = vmatpush.msra.mxu0 0.0
    %800 = vmatpush.msra.mxu0 0.0
    %801 = vmatpush.msra.mxu0 0.0
    %802 = vmatpush.msra.mxu0 0.0
    %803 = vmatpush.msra.mxu0 0.0
    %804 = vmatpush.msra.mxu0 0.0
    %805 = vmatpush.msra.mxu0 0.0
    %806 = vmatpush.msra.mxu0 0.0
    %807 = vmatpush.msra.mxu0 %v787
    %808 = vmatmul.f32.gmra.mxu0 %v790
    %v809 = vpop.f32.mrf.mxu0
    %v810 = vadd.f32 0.0, %v809
    %811 = vdwg.mxu0
    %812 = vrot.lane.b32.xlu0 %v652, 112
    %v813 = vpop.permute.xlu0 %812
    %814 = vrot.lane.b32.xlu0 %v650, 80
    %v815 = vpop.permute.xlu0 %814
    %v816 = vsel %vm146, %v813, 0
    %v818 = vsel %vm146, %v815, 0
    %820 = vmatpush.xpose.msra.mxu0 0.0
    %821 = vmatpush.xpose.msra.mxu0 0.0
    %822 = vmatpush.xpose.msra.mxu0 0.0
    %823 = vmatpush.xpose.msra.mxu0 0.0
    %824 = vmatpush.xpose.msra.mxu0 0.0
    %825 = vmatpush.xpose.msra.mxu0 0.0
    %826 = vmatpush.xpose.msra.mxu0 0.0
    %827 = vmatpush.xpose.msra.mxu0 0.0
    %828 = vmatpush.xpose.msra.mxu0 0.0
    %829 = vmatpush.xpose.msra.mxu0 0.0
    %830 = vmatpush.xpose.msra.mxu0 0.0
    %831 = vmatpush.xpose.msra.mxu0 0.0
    %832 = vmatpush.xpose.msra.mxu0 0.0
    %833 = vmatpush.xpose.msra.mxu0 0.0
    %834 = vmatpush.xpose.msra.mxu0 0.0
    %835 = vmatpush.xpose.msra.mxu0 %v818
    %836 = vmatmul.f32.gmra.mxu0 %v816
    %v837 = vpop.f32.mrf.mxu0
    %v838 = vadd.f32 %v654, %v837
    %839 = vdwg.mxu0
    %v840 = vsel %vm146, %v838, -inf
    %841 = vmax.xlane.f32.xlu0 %v840
    %v842 = vpop.xlane.xlu0 %841
    %v843 = vsub.f32 %v838, %v842
    %v844 = vmul.f32 %v843, 1.442695
    %v845 = vpow.pop %v844
    %v846 = vsel %vm146, %v845, 0.0
    %847 = vadd.xlane.f32.xlu0 %v846
    %v848 = vpop.xlane.xlu0 %847
    %v849 = vrcp.pop %v848
    %v850 = vmul.f32 %v848, %v849
    %v851 = vsub.f32 1.0, %v850
    %v852 = vmul.f32 %v849, %v851
    %v853 = vadd.f32 %v849, %v852
    %vm854 = vweird.f32 %v848
    %vm855 = vweird.f32 %v849
    %vm856 = vmor %vm854, %vm855
    %v857 = vsel %vm856, %v849, %v853
    %v858 = vand.u32 2147483647, %v848
    %vm859 = vcmp.eq.f32.partialorder %v858, 8.507059e+37
    %v860 = vand.u32 %v848, 2147483648
    %v861 = vor.u32 1.1754944e-38, %v860
    %v862 = vsel %vm859, %v861, %v857
    %v863 = vmul.f32 %v845, %v862
    %864 = vrot.lane.b32.xlu0 %v650, 48
    %v865 = vpop.permute.xlu0 %864
    %v868 = vsel %vm146, %v863, 0
    %870 = vmatpush.msra.mxu0 0.0
    %871 = vmatpush.msra.mxu0 0.0
    %872 = vmatpush.msra.mxu0 0.0
    %873 = vmatpush.msra.mxu0 0.0
    %874 = vmatpush.msra.mxu0 0.0
    %875 = vmatpush.msra.mxu0 0.0
    %876 = vmatpush.msra.mxu0 0.0
    %877 = vmatpush.msra.mxu0 0.0
    %878 = vmatpush.msra.mxu0 0.0
    %879 = vmatpush.msra.mxu0 0.0
    %880 = vmatpush.msra.mxu0 0.0
    %881 = vmatpush.msra.mxu0 0.0
    %882 = vmatpush.msra.mxu0 0.0
    %883 = vmatpush.msra.mxu0 0.0
    %884 = vmatpush.msra.mxu0 0.0
    %885 = vmatpush.msra.mxu0 %v865
    %886 = vmatmul.f32.gmra.mxu0 %v868
    %v887 = vpop.f32.mrf.mxu0
    %v888 = vadd.f32 0.0, %v887
    %889 = vdwg.mxu0
    %890 = vrot.lane.b32.xlu0 %v652, 104
    %v891 = vpop.permute.xlu0 %890
    %892 = vrot.lane.b32.xlu0 %v650, 72
    %v893 = vpop.permute.xlu0 %892
    %v894 = vsel %vm146, %v891, 0
    %v896 = vsel %vm146, %v893, 0
    %898 = vmatpush.xpose.msra.mxu0 0.0
    %899 = vmatpush.xpose.msra.mxu0 0.0
    %900 = vmatpush.xpose.msra.mxu0 0.0
    %901 = vmatpush.xpose.msra.mxu0 0.0
    %902 = vmatpush.xpose.msra.mxu0 0.0
    %903 = vmatpush.xpose.msra.mxu0 0.0
    %904 = vmatpush.xpose.msra.mxu0 0.0
    %905 = vmatpush.xpose.msra.mxu0 0.0
    %906 = vmatpush.xpose.msra.mxu0 0.0
    %907 = vmatpush.xpose.msra.mxu0 0.0
    %908 = vmatpush.xpose.msra.mxu0 0.0
    %909 = vmatpush.xpose.msra.mxu0 0.0
    %910 = vmatpush.xpose.msra.mxu0 0.0
    %911 = vmatpush.xpose.msra.mxu0 0.0
    %912 = vmatpush.xpose.msra.mxu0 0.0
    %913 = vmatpush.xpose.msra.mxu0 %v896
    %914 = vmatmul.f32.gmra.mxu0 %v894
    %v915 = vpop.f32.mrf.mxu0
    %v916 = vadd.f32 %v654, %v915
    %917 = vdwg.mxu0
    %v918 = vsel %vm146, %v916, -inf
    %919 = vmax.xlane.f32.xlu0 %v918
    %v920 = vpop.xlane.xlu0 %919
    %v921 = vsub.f32 %v916, %v920
    %v922 = vmul.f32 %v921, 1.442695
    %v923 = vpow.pop %v922
    %v924 = vsel %vm146, %v923, 0.0
    %925 = vadd.xlane.f32.xlu0 %v924
    %v926 = vpop.xlane.xlu0 %925
    %v927 = vrcp.pop %v926
    %v928 = vmul.f32 %v926, %v927
    %v929 = vsub.f32 1.0, %v928
    %v930 = vmul.f32 %v927, %v929
    %v931 = vadd.f32 %v927, %v930
    %vm932 = vweird.f32 %v926
    %vm933 = vweird.f32 %v927
    %vm934 = vmor %vm932, %vm933
    %v935 = vsel %vm934, %v927, %v931
    %v936 = vand.u32 2147483647, %v926
    %vm937 = vcmp.eq.f32.partialorder %v936, 8.507059e+37
    %v938 = vand.u32 %v926, 2147483648
    %v939 = vor.u32 1.1754944e-38, %v938
    %v940 = vsel %vm937, %v939, %v935
    %v941 = vmul.f32 %v923, %v940
    %942 = vrot.lane.b32.xlu0 %v650, 40
    %v943 = vpop.permute.xlu0 %942
    %v946 = vsel %vm146, %v941, 0
    %948 = vmatpush.msra.mxu0 0.0
    %949 = vmatpush.msra.mxu0 0.0
    %950 = vmatpush.msra.mxu0 0.0
    %951 = vmatpush.msra.mxu0 0.0
    %952 = vmatpush.msra.mxu0 0.0
    %953 = vmatpush.msra.mxu0 0.0
    %954 = vmatpush.msra.mxu0 0.0
    %955 = vmatpush.msra.mxu0 0.0
    %956 = vmatpush.msra.mxu0 0.0
    %957 = vmatpush.msra.mxu0 0.0
    %958 = vmatpush.msra.mxu0 0.0
    %959 = vmatpush.msra.mxu0 0.0
    %960 = vmatpush.msra.mxu0 0.0
    %961 = vmatpush.msra.mxu0 0.0
    %962 = vmatpush.msra.mxu0 0.0
    %963 = vmatpush.msra.mxu0 %v943
    %964 = vmatmul.f32.gmra.mxu0 %v946
    %v965 = vpop.f32.mrf.mxu0
    %v966 = vadd.f32 0.0, %v965
    %967 = vdwg.mxu0
    %969 = vrot.lane.b32.xlu0 %v810, 8
    %v970 = vpop.permute.xlu0 %969
    %973 = vrot.lane.b32.xlu0 %v888, 16
    %v974 = vpop.permute.xlu0 %973
    %977 = vrot.lane.b32.xlu0 %v966, 24
    %v978 = vpop.permute.xlu0 %977
    %v980 = vsel %vm146, %v732, %v970
    %v981 = vsel %vm469, %v980, %v974
    %v982 = vsel %vm471, %v981, %v978
    %v984 = vsel %vm115, %v982, 0
    %986 = vmatpush.msra.mxu0 0.0
    %987 = vmatpush.msra.mxu0 0.0
    %988 = vmatpush.msra.mxu0 0.0
    %989 = vmatpush.msra.mxu0 0.0
    %990 = vmatpush.msra.mxu0 0.0
    %991 = vmatpush.msra.mxu0 0.0
    %992 = vmatpush.msra.mxu0 0.0
    %993 = vmatpush.msra.mxu0 0.0
    %994 = vmatpush.msra.mxu0 0.0
    %995 = vmatpush.msra.mxu0 0.0
    %996 = vmatpush.msra.mxu0 0.0
    %997 = vmatpush.msra.mxu0 0.0
    %998 = vmatpush.msra.mxu0 %v88
    %999 = vmatpush.msra.mxu0 %v87
    %1000 = vmatpush.msra.mxu0 %v86
    %1001 = vmatpush.msra.mxu0 %v85
    %1002 = vmatmul.f32.gmra.mxu0 %v984
    %v1003 = vpop.f32.mrf.mxu0
    %v1004 = vadd.f32 %v474, %v1003
    %1005 = vdwg.mxu0
    %v1006 = vadd.f32 %v624, %v1004
    %v1007 = vsel %vm115, %v1006, 0.0
    %1008 = vadd.xlane.f32.xlu0 %v1007
    %v1009 = vpop.xlane.xlu0 %1008
    %v1010 = vmul.f32 %v1009, %v509
    %v1011 = vsub.f32 %v1006, %v1010
    %v1012 = vmul.f32 %v1011, %v1011
    %v1013 = vsel %vm115, %v1012, 0.0
    %1014 = vadd.xlane.f32.xlu0 %v1013
    %v1015 = vpop.xlane.xlu0 %1014
    %v1016 = vmul.f32 %v1015, %v509
    %v1017 = vadd.f32 %v1016, 1e-05
    %v1018 = vrsqrt.pop %v1017
    %v1019 = vmul.f32 %v1018, %v1017
    %v1020 = vmul.f32 %v1019, %v1018
    %v1021 = vmul.f32 0.5, %v1020
    %v1022 = vsub.f32 1.5, %v1021
    %v1023 = vmul.f32 %v1018, %v1022
    %vm1024 = vweird.f32 %v1017
    %vm1025 = vweird.f32 %v1018
    %vm1026 = vmor %vm1024, %vm1025
    %v1027 = vsel %vm1026, %v1018, %v1023
    %v1028 = vmul.f32 %v1011, %v1027
    %v1029 = vmul.f32 %v1028, %v530
    %v1030 = vadd.f32 %v1029, %v534
    %v1032 = vsel %vm115, %v1030, 0
    %1034 = vmatpush.msra.mxu0 0.0
    %1035 = vmatpush.msra.mxu0 0.0
    %1036 = vmatpush.msra.mxu0 0.0
    %1037 = vmatpush.msra.mxu0 0.0
    %1038 = vmatpush.msra.mxu0 0.0
    %1039 = vmatpush.msra.mxu0 0.0
    %1040 = vmatpush.msra.mxu0 0.0
    %1041 = vmatpush.msra.mxu0 0.0
    %1042 = vmatpush.msra.mxu0 0.0
    %1043 = vmatpush.msra.mxu0 0.0
    %1044 = vmatpush.msra.mxu0 0.0
    %1045 = vmatpush.msra.mxu0 0.0
    %1046 = vmatpush.msra.mxu0 %v95
    %1047 = vmatpush.msra.mxu0 %v94
    %1048 = vmatpush.msra.mxu0 %v93
    %1049 = vmatpush.msra.mxu0 %v92
    %1050 = vmatmul.f32.gmra.mxu0 %v1032
    %v1051 = vpop.f32.mrf.mxu0
    %v1052 = vadd.f32 %v538, %v1051
    %1053 = vdwg.mxu0
    %v1054 = vmax.f32 %v1052, 0.0
    %v1056 = vsel %vm567, %v1054, 0
    %1058 = vmatpush.msra.mxu0 0.0
    %1059 = vmatpush.msra.mxu0 0.0
    %1060 = vmatpush.msra.mxu0 0.0
    %1061 = vmatpush.msra.mxu0 0.0
    %1062 = vmatpush.msra.mxu0 0.0
    %1063 = vmatpush.msra.mxu0 0.0
    %1064 = vmatpush.msra.mxu0 0.0
    %1065 = vmatpush.msra.mxu0 0.0
    %1066 = vmatpush.msra.mxu0 %v104
    %1067 = vmatpush.msra.mxu0 %v103
    %1068 = vmatpush.msra.mxu0 %v102
    %1069 = vmatpush.msra.mxu0 %v101
    %1070 = vmatpush.msra.mxu0 %v100
    %1071 = vmatpush.msra.mxu0 %v99
    %1072 = vmatpush.msra.mxu0 %v98
    %1073 = vmatpush.msra.mxu0 %v97
    %1074 = vmatmul.f32.gmra.mxu0 %v1056
    %v1075 = vpop.f32.mrf.mxu0
    %v1076 = vadd.f32 %v565, %v1075
    %1077 = vdwg.mxu0
    %v1078 = vadd.f32 %v1030, %v1076
    %v1079 = vsel %vm115, %v1078, 0.0
    %1080 = vadd.xlane.f32.xlu0 %v1079
    %v1081 = vpop.xlane.xlu0 %1080
    %v1082 = vmul.f32 %v1081, %v509
    %v1083 = vsub.f32 %v1078, %v1082
    %v1084 = vmul.f32 %v1083, %v1083
    %v1085 = vsel %vm115, %v1084, 0.0
    %1086 = vadd.xlane.f32.xlu0 %v1085
    %v1087 = vpop.xlane.xlu0 %1086
    %v1088 = vmul.f32 %v1087, %v509
    %v1089 = vadd.f32 %v1088, 1e-05
    %v1090 = vrsqrt.pop %v1089
    %v1091 = vmul.f32 %v1090, %v1089
    %v1092 = vmul.f32 %v1091, %v1090
    %v1093 = vmul.f32 0.5, %v1092
    %v1094 = vsub.f32 1.5, %v1093
    %v1095 = vmul.f32 %v1090, %v1094
    %vm1096 = vweird.f32 %v1089
    %vm1097 = vweird.f32 %v1090
    %vm1098 = vmor %vm1096, %vm1097
    %v1099 = vsel %vm1098, %v1090, %v1095
    %v1100 = vmul.f32 %v1083, %v1099
    %v1101 = vmul.f32 %v1100, %v615
    %v1102 = vadd.f32 %v1101, %v619
    %s1103 = scalar_lea.vmem [#allocation7], 8
    %1104 = vst.msk [vmem:[%s1103] sm:$0xff] %vm115, %v1102
    // Predicated region
    $region66: #{tpu_custom_call.1} parent=1 // pred_check
      _
    $region67: #{tpu_custom_call.1} parent=1 // pred_check_branch
      %1106 = sbr.rel (0) target = $region69
    $region68: #{tpu_custom_call.1} parent=1 // pred_region
      %1108 = vsyncadd [#allocation4], 0
      %s1109 = sshll.u32 [#allocation7], 4
      %s1110 = int_to_ptr.vmem [resolvable:$true] %s1109
      %s1111 = sshll.u32 %s14, 4
      %s1112 = int_to_ptr.hbm [resolvable:$true] %s1111
      %1117 = dma.vmem_to_hbm [thread:$0]  %s1110, 256, %s1112, [#allocation4], 128, 128, 8
    $region69: #{tpu_custom_call.1} parent=1 // pred_fallthru
      _
    // Predicated region
    $region70: #{tpu_custom_call.1} parent=1 // pred_check
      _
    $region71: #{tpu_custom_call.1} parent=1 // pred_check_branch
      %1119 = sbr.rel (0) target = $region73
    $region72: #{tpu_custom_call.1} parent=1 // pred_region
      %1121 = dma.done [#allocation4], 256
    $region73: #{tpu_custom_call.1} parent=1 // pred_fallthru
      _
    %1122 = vsyncpa [#allocation3], 1
    %1123 = vsyncpa [#allocation6], 1
    %1124 = vsyncpa [#allocation4], 1

// kernel: tpu_custom_call.1
$region0: #{tpu_custom_call.1}
  #allocation0 [shape = 'u32[]', space=smem, size = 0x4, offset = 0x4, fixed_abs, tag = 'smem constant byte address 0x4 - core index']
  #allocation1 [shape = 'u32[72,128]{1,0:T(1,128)}', space=vmem, size = 0x9000, scoped, tag = 'internal scratch']
  %s0 = inlined_call_operand.hbm [shape: f32[2,8,32], index: 0, kind: input, shape index: {}]
  %s1 = inlined_call_operand.hbm [shape: f32[2,1,8], index: 1, kind: input, shape index: {}]
  %s2 = inlined_call_operand.vmem [shape: f32[32,96], index: 2, kind: input, shape index: {}]
  %s3 = inlined_call_operand.vmem [shape: f32[1,96], index: 3, kind: input, shape index: {}]
  %s4 = inlined_call_operand.vmem [shape: f32[32,32], index: 4, kind: input, shape index: {}]
  %s5 = inlined_call_operand.vmem [shape: f32[1,32], index: 5, kind: input, shape index: {}]
  %s6 = inlined_call_operand.vmem [shape: f32[1,32], index: 6, kind: input, shape index: {}]
  %s7 = inlined_call_operand.vmem [shape: f32[1,32], index: 7, kind: input, shape index: {}]
  %s8 = inlined_call_operand.vmem [shape: f32[32,64], index: 8, kind: input, shape index: {}]
  %s9 = inlined_call_operand.vmem [shape: f32[1,64], index: 9, kind: input, shape index: {}]
  %s10 = inlined_call_operand.vmem [shape: f32[64,32], index: 10, kind: input, shape index: {}]
  %s11 = inlined_call_operand.vmem [shape: f32[1,32], index: 11, kind: input, shape index: {}]
  %s12 = inlined_call_operand.vmem [shape: f32[1,32], index: 12, kind: input, shape index: {}]
  %s13 = inlined_call_operand.vmem [shape: f32[1,32], index: 13, kind: input, shape index: {}]
  %s14 = inlined_call_operand.hbm [shape: f32[2,8,32], index: 14, kind: output, shape index: {}]
  %s15 = sld [smem:[#allocation0]]
  $region74: #{tpu_custom_call.1} parent=0
    _
  %s17 = ssub.s32 1, %s15
  %s18 = scalar_select 0, %s17, %s15
  $region1: #{tpu_custom_call.1} parent=0
    #allocation2 [shape = 'u8[8192]{0}', space=vmem, size = 0x2000, scoped, tag = 'input window, operand 0, single buffered']
    #allocation3 [shape = 's32[1]{0}', space=sflag, size = 0x4, scoped, tag = 'scoped memory for tpu_custom_call.1']
    #allocation4 [shape = 's32[1]{0}', space=sflag, size = 0x4, scoped, tag = 'scoped memory for tpu_custom_call.1']
    #allocation5 [shape = 'u8[1024]{0}', space=vmem, size = 0x400, scoped, tag = 'input window, operand 1, single buffered']
    #allocation6 [shape = 's32[1]{0}', space=sflag, size = 0x4, scoped, tag = 'scoped memory for tpu_custom_call.1']
    #allocation7 [shape = 'u8[8192]{0}', space=vmem, size = 0x2000, scoped, tag = 'output window, operand 0, single buffered']
    %19 = vsyncpa [#allocation3], 0
    %20 = vsyncpa [#allocation6], 0
    %21 = vsyncpa [#allocation4], 0
    // Predicated region
    $region2: #{tpu_custom_call.1} parent=1 // pred_check
      _
    $region3: #{tpu_custom_call.1} parent=1 // pred_check_branch
      %23 = sbr.rel (0) target = $region5
    $region4: #{tpu_custom_call.1} parent=1 // pred_region
      %25 = vsyncadd [#allocation3], 0
      %s26 = sshll.u32 %s0, 4
      %s27 = int_to_ptr.hbm [resolvable:$true] %s26
      %s28 = sshll.u32 [#allocation2], 4
      %s29 = int_to_ptr.vmem [resolvable:$true] %s28
      %34 = dma.hbm_to_vmem [thread:$0]  %s27, 256, %s29, [#allocation3], 128, 128, 8
    $region5: #{tpu_custom_call.1} parent=1 // pred_fallthru
      _
    // Predicated region
    $region6: #{tpu_custom_call.1} parent=1 // pred_check
      _
    $region7: #{tpu_custom_call.1} parent=1 // pred_check_branch
      %36 = sbr.rel (0) target = $region9
    $region8: #{tpu_custom_call.1} parent=1 // pred_region
      %38 = vsyncadd [#allocation6], 0
      %s39 = sshll.u32 %s1, 4
      %s40 = int_to_ptr.hbm [resolvable:$true] %s39
      %s41 = sshll.u32 [#allocation5], 4
      %s42 = int_to_ptr.vmem [resolvable:$true] %s41
      %47 = dma.hbm_to_vmem [thread:$0]  %s40, 32, %s42, [#allocation6], 16, 16, 1
    $region9: #{tpu_custom_call.1} parent=1 // pred_fallthru
      _
    // Predicated region
    $region10: #{tpu_custom_call.1} parent=1 // pred_check
      _
    $region11: #{tpu_custom_call.1} parent=1 // pred_check_branch
      %49 = sbr.rel (0) target = $region13
    $region12: #{tpu_custom_call.1} parent=1 // pred_region
      _
    $region13: #{tpu_custom_call.1} parent=1 // pred_fallthru
      _
    // Predicated region
    $region14: #{tpu_custom_call.1} parent=1 // pred_check
      _
    $region15: #{tpu_custom_call.1} parent=1 // pred_check_branch
      %51 = sbr.rel (0) target = $region17
    $region16: #{tpu_custom_call.1} parent=1 // pred_region
      _
    $region17: #{tpu_custom_call.1} parent=1 // pred_fallthru
      _
    // Predicated region
    $region18: #{tpu_custom_call.1} parent=1 // pred_check
      _
    $region19: #{tpu_custom_call.1} parent=1 // pred_check_branch
      %53 = sbr.rel (0) target = $region21
    $region20: #{tpu_custom_call.1} parent=1 // pred_region
      _
    $region21: #{tpu_custom_call.1} parent=1 // pred_fallthru
      _
    // Predicated region
    $region22: #{tpu_custom_call.1} parent=1 // pred_check
      _
    $region23: #{tpu_custom_call.1} parent=1 // pred_check_branch
      %55 = sbr.rel (0) target = $region25
    $region24: #{tpu_custom_call.1} parent=1 // pred_region
      _
    $region25: #{tpu_custom_call.1} parent=1 // pred_fallthru
      _
    // Predicated region
    $region26: #{tpu_custom_call.1} parent=1 // pred_check
      _
    $region27: #{tpu_custom_call.1} parent=1 // pred_check_branch
      %57 = sbr.rel (0) target = $region29
    $region28: #{tpu_custom_call.1} parent=1 // pred_region
      _
    $region29: #{tpu_custom_call.1} parent=1 // pred_fallthru
      _
    // Predicated region
    $region30: #{tpu_custom_call.1} parent=1 // pred_check
      _
    $region31: #{tpu_custom_call.1} parent=1 // pred_check_branch
      %59 = sbr.rel (0) target = $region33
    $region32: #{tpu_custom_call.1} parent=1 // pred_region
      _
    $region33: #{tpu_custom_call.1} parent=1 // pred_fallthru
      _
    // Predicated region
    $region34: #{tpu_custom_call.1} parent=1 // pred_check
      _
    $region35: #{tpu_custom_call.1} parent=1 // pred_check_branch
      %61 = sbr.rel (0) target = $region37
    $region36: #{tpu_custom_call.1} parent=1 // pred_region
      _
    $region37: #{tpu_custom_call.1} parent=1 // pred_fallthru
      _
    // Predicated region
    $region38: #{tpu_custom_call.1} parent=1 // pred_check
      _
    $region39: #{tpu_custom_call.1} parent=1 // pred_check_branch
      %63 = sbr.rel (0) target = $region41
    $region40: #{tpu_custom_call.1} parent=1 // pred_region
      _
    $region41: #{tpu_custom_call.1} parent=1 // pred_fallthru
      _
    // Predicated region
    $region42: #{tpu_custom_call.1} parent=1 // pred_check
      _
    $region43: #{tpu_custom_call.1} parent=1 // pred_check_branch
      %65 = sbr.rel (0) target = $region45
    $region44: #{tpu_custom_call.1} parent=1 // pred_region
      _
    $region45: #{tpu_custom_call.1} parent=1 // pred_fallthru
      _
    // Predicated region
    $region46: #{tpu_custom_call.1} parent=1 // pred_check
      _
    $region47: #{tpu_custom_call.1} parent=1 // pred_check_branch
      %67 = sbr.rel (0) target = $region49
    $region48: #{tpu_custom_call.1} parent=1 // pred_region
      _
    $region49: #{tpu_custom_call.1} parent=1 // pred_fallthru
      _
    // Predicated region
    $region50: #{tpu_custom_call.1} parent=1 // pred_check
      _
    $region51: #{tpu_custom_call.1} parent=1 // pred_check_branch
      %69 = sbr.rel (0) target = $region53
    $region52: #{tpu_custom_call.1} parent=1 // pred_region
      _
    $region53: #{tpu_custom_call.1} parent=1 // pred_fallthru
      _
    // Predicated region
    $region54: #{tpu_custom_call.1} parent=1 // pred_check
      _
    $region55: #{tpu_custom_call.1} parent=1 // pred_check_branch
      %71 = sbr.rel (0) target = $region57
    $region56: #{tpu_custom_call.1} parent=1 // pred_region
      _
    $region57: #{tpu_custom_call.1} parent=1 // pred_fallthru
      _
    // Predicated region
    $region58: #{tpu_custom_call.1} parent=1 // pred_check
      _
    $region59: #{tpu_custom_call.1} parent=1 // pred_check_branch
      %73 = sbr.rel (0) target = $region61
    $region60: #{tpu_custom_call.1} parent=1 // pred_region
      %75 = dma.done [#allocation3], 256
    $region61: #{tpu_custom_call.1} parent=1 // pred_fallthru
      _
    // Predicated region
    $region62: #{tpu_custom_call.1} parent=1 // pred_check
      _
    $region63: #{tpu_custom_call.1} parent=1 // pred_check_branch
      %77 = sbr.rel (0) target = $region65
    $region64: #{tpu_custom_call.1} parent=1 // pred_region
      %79 = dma.done [#allocation6], 32
    $region65: #{tpu_custom_call.1} parent=1 // pred_fallthru
      _
    %v80 = vld [vmem:[%s2] sm:$0xff]
    %v81 = vld [vmem:[%s2 + $0x8] sm:$0xff]
    %v82 = vld [vmem:[%s2 + $0x10] sm:$0xff]
    %v83 = vld [vmem:[%s2 + $0x18] sm:$0xff]
    %v84 = vld [vmem:[%s3] sm:$0x1]
    %v85 = vld [vmem:[%s4] sm:$0xff]
    %v86 = vld [vmem:[%s4 + $0x8] sm:$0xff]
    %v87 = vld [vmem:[%s4 + $0x10] sm:$0xff]
    %v88 = vld [vmem:[%s4 + $0x18] sm:$0xff]
    %v89 = vld [vmem:[%s5] sm:$0x1]
    %v90 = vld [vmem:[%s6] sm:$0x1]
    %v91 = vld [vmem:[%s7] sm:$0x1]
    %v92 = vld [vmem:[%s8] sm:$0xff]
    %v93 = vld [vmem:[%s8 + $0x8] sm:$0xff]
    %v94 = vld [vmem:[%s8 + $0x10] sm:$0xff]
    %v95 = vld [vmem:[%s8 + $0x18] sm:$0xff]
    %v96 = vld [vmem:[%s9] sm:$0x1]
    %v97 = vld [vmem:[%s10] sm:$0xff]
    %v98 = vld [vmem:[%s10 + $0x8] sm:$0xff]
    %v99 = vld [vmem:[%s10 + $0x10] sm:$0xff]
    %v100 = vld [vmem:[%s10 + $0x18] sm:$0xff]
    %v101 = vld [vmem:[%s10 + $0x20] sm:$0xff]
    %v102 = vld [vmem:[%s10 + $0x28] sm:$0xff]
    %v103 = vld [vmem:[%s10 + $0x30] sm:$0xff]
    %v104 = vld [vmem:[%s10 + $0x38] sm:$0xff]
    %v105 = vld [vmem:[%s11] sm:$0x1]
    %v106 = vld [vmem:[%s12] sm:$0x1]
    %v107 = vld [vmem:[%s13] sm:$0x1]
    %v108 = vld [vmem:[#allocation2] sm:$0xff]
    %v109 = vld [vmem:[#allocation5] sm:$0x1]
    %vm110 = vcmp.eq.f32.partialorder %v109, 0.0
    %v111 = vsel %vm110, -1e+10, 0.0
    %v113 = vperm.slane %v84, 0
    %vm115 = vcmask 261120
    %v117 = vsel %vm115, %v108, 0
    %119 = vmatpush.msra.mxu0 0.0
    %120 = vmatpush.msra.mxu0 0.0
    %121 = vmatpush.msra.mxu0 0.0
    %122 = vmatpush.msra.mxu0 0.0
    %123 = vmatpush.msra.mxu0 0.0
    %124 = vmatpush.msra.mxu0 0.0
    %125 = vmatpush.msra.mxu0 0.0
    %126 = vmatpush.msra.mxu0 0.0
    %127 = vmatpush.msra.mxu0 0.0
    %128 = vmatpush.msra.mxu0 0.0
    %129 = vmatpush.msra.mxu0 0.0
    %130 = vmatpush.msra.mxu0 0.0
    %131 = vmatpush.msra.mxu0 %v83
    %132 = vmatpush.msra.mxu0 %v82
    %133 = vmatpush.msra.mxu0 %v81
    %134 = vmatpush.msra.mxu0 %v80
    %135 = vmatmul.f32.gmra.mxu0 %v117
    %v136 = vpop.f32.mrf.mxu0
    %v137 = vadd.f32 %v113, %v136
    %138 = vdwg.mxu0
    %v139 = vmul.f32 %v137, 0.35355338
    %v141 = vperm.slane %v111, 0
    %144 = vrot.lane.b32.xlu0 %v137, 96
    %v145 = vpop.permute.xlu0 %144
    %vm146 = vcmask 64512
    %v148 = vsel %vm146, %v139, 0
    %v150 = vsel %vm146, %v145, 0
    %152 = vmatpush.xpose.msra.mxu0 0.0
    %153 = vmatpush.xpose.msra.mxu0 0.0
    %154 = vmatpush.xpose.msra.mxu0 0.0
    %155 = vmatpush.xpose.msra.mxu0 0.0
    %156 = vmatpush.xpose.msra.mxu0 0.0
    %157 = vmatpush.xpose.msra.mxu0 0.0
    %158 = vmatpush.xpose.msra.mxu0 0.0
    %159 = vmatpush.xpose.msra.mxu0 0.0
    %160 = vmatpush.xpose.msra.mxu0 0.0
    %161 = vmatpush.xpose.msra.mxu0 0.0
    %162 = vmatpush.xpose.msra.mxu0 0.0
    %163 = vmatpush.xpose.msra.mxu0 0.0
    %164 = vmatpush.xpose.msra.mxu0 0.0
    %165 = vmatpush.xpose.msra.mxu0 0.0
    %166 = vmatpush.xpose.msra.mxu0 0.0
    %167 = vmatpush.xpose.msra.mxu0 %v150
    %168 = vmatmul.f32.gmra.mxu0 %v148
    %v169 = vpop.f32.mrf.mxu0
    %v170 = vadd.f32 %v141, %v169
    %171 = vdwg.mxu0
    %v172 = vsel %vm146, %v170, -inf
    %173 = vmax.xlane.f32.xlu0 %v172
    %v174 = vpop.xlane.xlu0 %173
    %v175 = vsub.f32 %v170, %v174
    %v176 = vmul.f32 %v175, 1.442695
    %v177 = vpow.pop %v176
    %v178 = vsel %vm146, %v177, 0.0
    %179 = vadd.xlane.f32.xlu0 %v178
    %v180 = vpop.xlane.xlu0 %179
    %v181 = vrcp.pop %v180
    %v182 = vmul.f32 %v180, %v181
    %v183 = vsub.f32 1.0, %v182
    %v184 = vmul.f32 %v181, %v183
    %v185 = vadd.f32 %v181, %v184
    %vm186 = vweird.f32 %v180
    %vm187 = vweird.f32 %v181
    %vm188 = vmor %vm186, %vm187
    %v189 = vsel %vm188, %v181, %v185
    %v190 = vand.u32 2147483647, %v180
    %vm191 = vcmp.eq.f32.partialorder %v190, 8.507059e+37
    %v192 = vand.u32 %v180, 2147483648
    %v193 = vor.u32 1.1754944e-38, %v192
    %v194 = vsel %vm191, %v193, %v189
    %v195 = vmul.f32 %v177, %v194
    %196 = vrot.lane.b32.xlu0 %v137, 64
    %v197 = vpop.permute.xlu0 %196
    %v200 = vsel %vm146, %v195, 0
    %202 = vmatpush.msra.mxu0 0.0
    %203 = vmatpush.msra.mxu0 0.0
    %204 = vmatpush.msra.mxu0 0.0
    %205 = vmatpush.msra.mxu0 0.0
    %206 = vmatpush.msra.mxu0 0.0
    %207 = vmatpush.msra.mxu0 0.0
    %208 = vmatpush.msra.mxu0 0.0
    %209 = vmatpush.msra.mxu0 0.0
    %210 = vmatpush.msra.mxu0 0.0
    %211 = vmatpush.msra.mxu0 0.0
    %212 = vmatpush.msra.mxu0 0.0
    %213 = vmatpush.msra.mxu0 0.0
    %214 = vmatpush.msra.mxu0 0.0
    %215 = vmatpush.msra.mxu0 0.0
    %216 = vmatpush.msra.mxu0 0.0
    %217 = vmatpush.msra.mxu0 %v197
    %218 = vmatmul.f32.gmra.mxu0 %v200
    %v219 = vpop.f32.mrf.mxu0
    %v220 = vadd.f32 0.0, %v219
    %221 = vdwg.mxu0
    %222 = vrot.lane.b32.xlu0 %v139, 120
    %v223 = vpop.permute.xlu0 %222
    %224 = vrot.lane.b32.xlu0 %v137, 88
    %v225 = vpop.permute.xlu0 %224
    %v226 = vsel %vm146, %v223, 0
    %v228 = vsel %vm146, %v225, 0
    %230 = vmatpush.xpose.msra.mxu0 0.0
    %231 = vmatpush.xpose.msra.mxu0 0.0
    %232 = vmatpush.xpose.msra.mxu0 0.0
    %233 = vmatpush.xpose.msra.mxu0 0.0
    %234 = vmatpush.xpose.msra.mxu0 0.0
    %235 = vmatpush.xpose.msra.mxu0 0.0
    %236 = vmatpush.xpose.msra.mxu0 0.0
    %237 = vmatpush.xpose.msra.mxu0 0.0
    %238 = vmatpush.xpose.msra.mxu0 0.0
    %239 = vmatpush.xpose.msra.mxu0 0.0
    %240 = vmatpush.xpose.msra.mxu0 0.0
    %241 = vmatpush.xpose.msra.mxu0 0.0
    %242 = vmatpush.xpose.msra.mxu0 0.0
    %243 = vmatpush.xpose.msra.mxu0 0.0
    %244 = vmatpush.xpose.msra.mxu0 0.0
    %245 = vmatpush.xpose.msra.mxu0 %v228
    %246 = vmatmul.f32.gmra.mxu0 %v226
    %v247 = vpop.f32.mrf.mxu0
    %v248 = vadd.f32 %v141, %v247
    %249 = vdwg.mxu0
    %v250 = vsel %vm146, %v248, -inf
    %251 = vmax.xlane.f32.xlu0 %v250
    %v252 = vpop.xlane.xlu0 %251
    %v253 = vsub.f32 %v248, %v252
    %v254 = vmul.f32 %v253, 1.442695
    %v255 = vpow.pop %v254
    %v256 = vsel %vm146, %v255, 0.0
    %257 = vadd.xlane.f32.xlu0 %v256
    %v258 = vpop.xlane.xlu0 %257
    %v259 = vrcp.pop %v258
    %v260 = vmul.f32 %v258, %v259
    %v261 = vsub.f32 1.0, %v260
    %v262 = vmul.f32 %v259, %v261
    %v263 = vadd.f32 %v259, %v262
    %vm264 = vweird.f32 %v258
    %vm265 = vweird.f32 %v259
    %vm266 = vmor %vm264, %vm265
    %v267 = vsel %vm266, %v259, %v263
    %v268 = vand.u32 2147483647, %v258
    %vm269 = vcmp.eq.f32.partialorder %v268, 8.507059e+37
    %v270 = vand.u32 %v258, 2147483648
    %v271 = vor.u32 1.1754944e-38, %v270
    %v272 = vsel %vm269, %v271, %v267
    %v273 = vmul.f32 %v255, %v272
    %274 = vrot.lane.b32.xlu0 %v137, 56
    %v275 = vpop.permute.xlu0 %274
    %v278 = vsel %vm146, %v273, 0
    %280 = vmatpush.msra.mxu0 0.0
    %281 = vmatpush.msra.mxu0 0.0
    %282 = vmatpush.msra.mxu0 0.0
    %283 = vmatpush.msra.mxu0 0.0
    %284 = vmatpush.msra.mxu0 0.0
    %285 = vmatpush.msra.mxu0 0.0
    %286 = vmatpush.msra.mxu0 0.0
    %287 = vmatpush.msra.mxu0 0.0
    %288 = vmatpush.msra.mxu0 0.0
    %289 = vmatpush.msra.mxu0 0.0
    %290 = vmatpush.msra.mxu0 0.0
    %291 = vmatpush.msra.mxu0 0.0
    %292 = vmatpush.msra.mxu0 0.0
    %293 = vmatpush.msra.mxu0 0.0
    %294 = vmatpush.msra.mxu0 0.0
    %295 = vmatpush.msra.mxu0 %v275
    %296 = vmatmul.f32.gmra.mxu0 %v278
    %v297 = vpop.f32.mrf.mxu0
    %v298 = vadd.f32 0.0, %v297
    %299 = vdwg.mxu0
    %300 = vrot.lane.b32.xlu0 %v139, 112
    %v301 = vpop.permute.xlu0 %300
    %302 = vrot.lane.b32.xlu0 %v137, 80
    %v303 = vpop.permute.xlu0 %302
    %v304 = vsel %vm146, %v301, 0
    %v306 = vsel %vm146, %v303, 0
    %308 = vmatpush.xpose.msra.mxu0 0.0
    %309 = vmatpush.xpose.msra.mxu0 0.0
    %310 = vmatpush.xpose.msra.mxu0 0.0
    %311 = vmatpush.xpose.msra.mxu0 0.0
    %312 = vmatpush.xpose.msra.mxu0 0.0
    %313 = vmatpush.xpose.msra.mxu0 0.0
    %314 = vmatpush.xpose.msra.mxu0 0.0
    %315 = vmatpush.xpose.msra.mxu0 0.0
    %316 = vmatpush.xpose.msra.mxu0 0.0
    %317 = vmatpush.xpose.msra.mxu0 0.0
    %318 = vmatpush.xpose.msra.mxu0 0.0
    %319 = vmatpush.xpose.msra.mxu0 0.0
    %320 = vmatpush.xpose.msra.mxu0 0.0
    %321 = vmatpush.xpose.msra.mxu0 0.0
    %322 = vmatpush.xpose.msra.mxu0 0.0
    %323 = vmatpush.xpose.msra.mxu0 %v306
    %324 = vmatmul.f32.gmra.mxu0 %v304
    %v325 = vpop.f32.mrf.mxu0
    %v326 = vadd.f32 %v141, %v325
    %327 = vdwg.mxu0
    %v328 = vsel %vm146, %v326, -inf
    %329 = vmax.xlane.f32.xlu0 %v328
    %v330 = vpop.xlane.xlu0 %329
    %v331 = vsub.f32 %v326, %v330
    %v332 = vmul.f32 %v331, 1.442695
    %v333 = vpow.pop %v332
    %v334 = vsel %vm146, %v333, 0.0
    %335 = vadd.xlane.f32.xlu0 %v334
    %v336 = vpop.xlane.xlu0 %335
    %v337 = vrcp.pop %v336
    %v338 = vmul.f32 %v336, %v337
    %v339 = vsub.f32 1.0, %v338
    %v340 = vmul.f32 %v337, %v339
    %v341 = vadd.f32 %v337, %v340
    %vm342 = vweird.f32 %v336
    %vm343 = vweird.f32 %v337
    %vm344 = vmor %vm342, %vm343
    %v345 = vsel %vm344, %v337, %v341
    %v346 = vand.u32 2147483647, %v336
    %vm347 = vcmp.eq.f32.partialorder %v346, 8.507059e+37
    %v348 = vand.u32 %v336, 2147483648
    %v349 = vor.u32 1.1754944e-38, %v348
    %v350 = vsel %vm347, %v349, %v345
    %v351 = vmul.f32 %v333, %v350
    %352 = vrot.lane.b32.xlu0 %v137, 48
    %v353 = vpop.permute.xlu0 %352
    %v356 = vsel %vm146, %v351, 0
    %358 = vmatpush.msra.mxu0 0.0
    %359 = vmatpush.msra.mxu0 0.0
    %360 = vmatpush.msra.mxu0 0.0
    %361 = vmatpush.msra.mxu0 0.0
    %362 = vmatpush.msra.mxu0 0.0
    %363 = vmatpush.msra.mxu0 0.0
    %364 = vmatpush.msra.mxu0 0.0
    %365 = vmatpush.msra.mxu0 0.0
    %366 = vmatpush.msra.mxu0 0.0
    %367 = vmatpush.msra.mxu0 0.0
    %368 = vmatpush.msra.mxu0 0.0
    %369 = vmatpush.msra.mxu0 0.0
    %370 = vmatpush.msra.mxu0 0.0
    %371 = vmatpush.msra.mxu0 0.0
    %372 = vmatpush.msra.mxu0 0.0
    %373 = vmatpush.msra.mxu0 %v353
    %374 = vmatmul.f32.gmra.mxu0 %v356
    %v375 = vpop.f32.mrf.mxu0
    %v376 = vadd.f32 0.0, %v375
    %377 = vdwg.mxu0
    %378 = vrot.lane.b32.xlu0 %v139, 104
    %v379 = vpop.permute.xlu0 %378
    %380 = vrot.lane.b32.xlu0 %v137, 72
    %v381 = vpop.permute.xlu0 %380
    %v382 = vsel %vm146, %v379, 0
    %v384 = vsel %vm146, %v381, 0
    %386 = vmatpush.xpose.msra.mxu0 0.0
    %387 = vmatpush.xpose.msra.mxu0 0.0
    %388 = vmatpush.xpose.msra.mxu0 0.0
    %389 = vmatpush.xpose.msra.mxu0 0.0
    %390 = vmatpush.xpose.msra.mxu0 0.0
    %391 = vmatpush.xpose.msra.mxu0 0.0
    %392 = vmatpush.xpose.msra.mxu0 0.0
    %393 = vmatpush.xpose.msra.mxu0 0.0
    %394 = vmatpush.xpose.msra.mxu0 0.0
    %395 = vmatpush.xpose.msra.mxu0 0.0
    %396 = vmatpush.xpose.msra.mxu0 0.0
    %397 = vmatpush.xpose.msra.mxu0 0.0
    %398 = vmatpush.xpose.msra.mxu0 0.0
    %399 = vmatpush.xpose.msra.mxu0 0.0
    %400 = vmatpush.xpose.msra.mxu0 0.0
    %401 = vmatpush.xpose.msra.mxu0 %v384
    %402 = vmatmul.f32.gmra.mxu0 %v382
    %v403 = vpop.f32.mrf.mxu0
    %v404 = vadd.f32 %v141, %v403
    %405 = vdwg.mxu0
    %v406 = vsel %vm146, %v404, -inf
    %407 = vmax.xlane.f32.xlu0 %v406
    %v408 = vpop.xlane.xlu0 %407
    %v409 = vsub.f32 %v404, %v408
    %v410 = vmul.f32 %v409, 1.442695
    %v411 = vpow.pop %v410
    %v412 = vsel %vm146, %v411, 0.0
    %413 = vadd.xlane.f32.xlu0 %v412
    %v414 = vpop.xlane.xlu0 %413
    %v415 = vrcp.pop %v414
    %v416 = vmul.f32 %v414, %v415
    %v417 = vsub.f32 1.0, %v416
    %v418 = vmul.f32 %v415, %v417
    %v419 = vadd.f32 %v415, %v418
    %vm420 = vweird.f32 %v414
    %vm421 = vweird.f32 %v415
    %vm422 = vmor %vm420, %vm421
    %v423 = vsel %vm422, %v415, %v419
    %v424 = vand.u32 2147483647, %v414
    %vm425 = vcmp.eq.f32.partialorder %v424, 8.507059e+37
    %v426 = vand.u32 %v414, 2147483648
    %v427 = vor.u32 1.1754944e-38, %v426
    %v428 = vsel %vm425, %v427, %v423
    %v429 = vmul.f32 %v411, %v428
    %430 = vrot.lane.b32.xlu0 %v137, 40
    %v431 = vpop.permute.xlu0 %430
    %v434 = vsel %vm146, %v429, 0
    %436 = vmatpush.msra.mxu0 0.0
    %437 = vmatpush.msra.mxu0 0.0
    %438 = vmatpush.msra.mxu0 0.0
    %439 = vmatpush.msra.mxu0 0.0
    %440 = vmatpush.msra.mxu0 0.0
    %441 = vmatpush.msra.mxu0 0.0
    %442 = vmatpush.msra.mxu0 0.0
    %443 = vmatpush.msra.mxu0 0.0
    %444 = vmatpush.msra.mxu0 0.0
    %445 = vmatpush.msra.mxu0 0.0
    %446 = vmatpush.msra.mxu0 0.0
    %447 = vmatpush.msra.mxu0 0.0
    %448 = vmatpush.msra.mxu0 0.0
    %449 = vmatpush.msra.mxu0 0.0
    %450 = vmatpush.msra.mxu0 0.0
    %451 = vmatpush.msra.mxu0 %v431
    %452 = vmatmul.f32.gmra.mxu0 %v434
    %v453 = vpop.f32.mrf.mxu0
    %v454 = vadd.f32 0.0, %v453
    %455 = vdwg.mxu0
    %457 = vrot.lane.b32.xlu0 %v298, 8
    %v458 = vpop.permute.xlu0 %457
    %461 = vrot.lane.b32.xlu0 %v376, 16
    %v462 = vpop.permute.xlu0 %461
    %465 = vrot.lane.b32.xlu0 %v454, 24
    %v466 = vpop.permute.xlu0 %465
    %v468 = vsel %vm146, %v220, %v458
    %vm469 = vcmask 130048
    %v470 = vsel %vm469, %v468, %v462
    %vm471 = vcmask 195584
    %v472 = vsel %vm471, %v470, %v466
    %v474 = vperm.slane %v89, 0
    %v477 = vsel %vm115, %v472, 0
    %479 = vmatpush.msra.mxu0 0.0
    %480 = vmatpush.msra.mxu0 0.0
    %481 = vmatpush.msra.mxu0 0.0
    %482 = vmatpush.msra.mxu0 0.0
    %483 = vmatpush.msra.mxu0 0.0
    %484 = vmatpush.msra.mxu0 0.0
    %485 = vmatpush.msra.mxu0 0.0
    %486 = vmatpush.msra.mxu0 0.0
    %487 = vmatpush.msra.mxu0 0.0
    %488 = vmatpush.msra.mxu0 0.0
    %489 = vmatpush.msra.mxu0 0.0
    %490 = vmatpush.msra.mxu0 0.0
    %491 = vmatpush.msra.mxu0 %v88
    %492 = vmatpush.msra.mxu0 %v87
    %493 = vmatpush.msra.mxu0 %v86
    %494 = vmatpush.msra.mxu0 %v85
    %495 = vmatmul.f32.gmra.mxu0 %v477
    %v496 = vpop.f32.mrf.mxu0
    %v497 = vadd.f32 %v474, %v496
    %498 = vdwg.mxu0
    %v499 = vadd.f32 %v108, %v497
    %v500 = vsel %vm115, %v499, 0.0
    %501 = vadd.xlane.f32.xlu0 %v500
    %v502 = vpop.xlane.xlu0 %501
    %v503 = vrcp.pop 32.0
    %v504 = vmul.f32 32.0, %v503
    %v505 = vsub.f32 1.0, %v504
    %v506 = vmul.f32 %v503, %v505
    %v507 = vadd.f32 %v503, %v506
    %vm508 = vweird.f32 %v503
    %v509 = vsel %vm508, %v503, %v507
    %v510 = vmul.f32 %v502, %v509
    %v511 = vsub.f32 %v499, %v510
    %v512 = vmul.f32 %v511, %v511
    %v513 = vsel %vm115, %v512, 0.0
    %514 = vadd.xlane.f32.xlu0 %v513
    %v515 = vpop.xlane.xlu0 %514
    %v516 = vmul.f32 %v515, %v509
    %v517 = vadd.f32 %v516, 1e-05
    %v518 = vrsqrt.pop %v517
    %v519 = vmul.f32 %v518, %v517
    %v520 = vmul.f32 %v519, %v518
    %v521 = vmul.f32 0.5, %v520
    %v522 = vsub.f32 1.5, %v521
    %v523 = vmul.f32 %v518, %v522
    %vm524 = vweird.f32 %v517
    %vm525 = vweird.f32 %v518
    %vm526 = vmor %vm524, %vm525
    %v527 = vsel %vm526, %v518, %v523
    %v528 = vmul.f32 %v511, %v527
    %v530 = vperm.slane %v90, 0
    %v532 = vmul.f32 %v528, %v530
    %v534 = vperm.slane %v91, 0
    %v536 = vadd.f32 %v532, %v534
    %v538 = vperm.slane %v96, 0
    %v541 = vsel %vm115, %v536, 0
    %543 = vmatpush.msra.mxu0 0.0
    %544 = vmatpush.msra.mxu0 0.0
    %545 = vmatpush.msra.mxu0 0.0
    %546 = vmatpush.msra.mxu0 0.0
    %547 = vmatpush.msra.mxu0 0.0
    %548 = vmatpush.msra.mxu0 0.0
    %549 = vmatpush.msra.mxu0 0.0
    %550 = vmatpush.msra.mxu0 0.0
    %551 = vmatpush.msra.mxu0 0.0
    %552 = vmatpush.msra.mxu0 0.0
    %553 = vmatpush.msra.mxu0 0.0
    %554 = vmatpush.msra.mxu0 0.0
    %555 = vmatpush.msra.mxu0 %v95
    %556 = vmatpush.msra.mxu0 %v94
    %557 = vmatpush.msra.mxu0 %v93
    %558 = vmatpush.msra.mxu0 %v92
    %559 = vmatmul.f32.gmra.mxu0 %v541
    %v560 = vpop.f32.mrf.mxu0
    %v561 = vadd.f32 %v538, %v560
    %562 = vdwg.mxu0
    %v563 = vmax.f32 %v561, 0.0
    %v565 = vperm.slane %v105, 0
    %vm567 = vcmask 523264
    %v569 = vsel %vm567, %v563, 0
    %571 = vmatpush.msra.mxu0 0.0
    %572 = vmatpush.msra.mxu0 0.0
    %573 = vmatpush.msra.mxu0 0.0
    %574 = vmatpush.msra.mxu0 0.0
    %575 = vmatpush.msra.mxu0 0.0
    %576 = vmatpush.msra.mxu0 0.0
    %577 = vmatpush.msra.mxu0 0.0
    %578 = vmatpush.msra.mxu0 0.0
    %579 = vmatpush.msra.mxu0 %v104
    %580 = vmatpush.msra.mxu0 %v103
    %581 = vmatpush.msra.mxu0 %v102
    %582 = vmatpush.msra.mxu0 %v101
    %583 = vmatpush.msra.mxu0 %v100
    %584 = vmatpush.msra.mxu0 %v99
    %585 = vmatpush.msra.mxu0 %v98
    %586 = vmatpush.msra.mxu0 %v97
    %587 = vmatmul.f32.gmra.mxu0 %v569
    %v588 = vpop.f32.mrf.mxu0
    %v589 = vadd.f32 %v565, %v588
    %590 = vdwg.mxu0
    %v591 = vadd.f32 %v536, %v589
    %v592 = vsel %vm115, %v591, 0.0
    %593 = vadd.xlane.f32.xlu0 %v592
    %v594 = vpop.xlane.xlu0 %593
    %v595 = vmul.f32 %v594, %v509
    %v596 = vsub.f32 %v591, %v595
    %v597 = vmul.f32 %v596, %v596
    %v598 = vsel %vm115, %v597, 0.0
    %599 = vadd.xlane.f32.xlu0 %v598
    %v600 = vpop.xlane.xlu0 %599
    %v601 = vmul.f32 %v600, %v509
    %v602 = vadd.f32 %v601, 1e-05
    %v603 = vrsqrt.pop %v602
    %v604 = vmul.f32 %v603, %v602
    %v605 = vmul.f32 %v604, %v603
    %v606 = vmul.f32 0.5, %v605
    %v607 = vsub.f32 1.5, %v606
    %v608 = vmul.f32 %v603, %v607
    %vm609 = vweird.f32 %v602
    %vm610 = vweird.f32 %v603
    %vm611 = vmor %vm609, %vm610
    %v612 = vsel %vm611, %v603, %v608
    %v613 = vmul.f32 %v596, %v612
    %v615 = vperm.slane %v106, 0
    %v617 = vmul.f32 %v613, %v615
    %v619 = vperm.slane %v107, 0
    %v621 = vadd.f32 %v617, %v619
    %622 = vst.msk [vmem:[#allocation7] sm:$0xff] %vm115, %v621
    %s623 = scalar_lea.vmem [#allocation2], 8
    %v624 = vld [vmem:[%s623] sm:$0xff]
    %s625 = scalar_lea.vmem [#allocation5], 1
    %v626 = vld [vmem:[%s625] sm:$0x1]
    %vm627 = vcmp.eq.f32.partialorder %v626, 0.0
    %v628 = vsel %vm627, -1e+10, 0.0
    %v630 = vsel %vm115, %v624, 0
    %632 = vmatpush.msra.mxu0 0.0
    %633 = vmatpush.msra.mxu0 0.0
    %634 = vmatpush.msra.mxu0 0.0
    %635 = vmatpush.msra.mxu0 0.0
    %636 = vmatpush.msra.mxu0 0.0
    %637 = vmatpush.msra.mxu0 0.0
    %638 = vmatpush.msra.mxu0 0.0
    %639 = vmatpush.msra.mxu0 0.0
    %640 = vmatpush.msra.mxu0 0.0
    %641 = vmatpush.msra.mxu0 0.0
    %642 = vmatpush.msra.mxu0 0.0
    %643 = vmatpush.msra.mxu0 0.0
    %644 = vmatpush.msra.mxu0 %v83
    %645 = vmatpush.msra.mxu0 %v82
    %646 = vmatpush.msra.mxu0 %v81
    %647 = vmatpush.msra.mxu0 %v80
    %648 = vmatmul.f32.gmra.mxu0 %v630
    %v649 = vpop.f32.mrf.mxu0
    %v650 = vadd.f32 %v113, %v649
    %651 = vdwg.mxu0
    %v652 = vmul.f32 %v650, 0.35355338
    %v654 = vperm.slane %v628, 0
    %657 = vrot.lane.b32.xlu0 %v650, 96
    %v658 = vpop.permute.xlu0 %657
    %v660 = vsel %vm146, %v652, 0
    %v662 = vsel %vm146, %v658, 0
    %664 = vmatpush.xpose.msra.mxu0 0.0
    %665 = vmatpush.xpose.msra.mxu0 0.0
    %666 = vmatpush.xpose.msra.mxu0 0.0
    %667 = vmatpush.xpose.msra.mxu0 0.0
    %668 = vmatpush.xpose.msra.mxu0 0.0
    %669 = vmatpush.xpose.msra.mxu0 0.0
    %670 = vmatpush.xpose.msra.mxu0 0.0
    %671 = vmatpush.xpose.msra.mxu0 0.0
    %672 = vmatpush.xpose.msra.mxu0 0.0
    %673 = vmatpush.xpose.msra.mxu0 0.0
    %674 = vmatpush.xpose.msra.mxu0 0.0
    %675 = vmatpush.xpose.msra.mxu0 0.0
    %676 = vmatpush.xpose.msra.mxu0 0.0
    %677 = vmatpush.xpose.msra.mxu0 0.0
    %678 = vmatpush.xpose.msra.mxu0 0.0
    %679 = vmatpush.xpose.msra.mxu0 %v662
    %680 = vmatmul.f32.gmra.mxu0 %v660
    %v681 = vpop.f32.mrf.mxu0
    %v682 = vadd.f32 %v654, %v681
    %683 = vdwg.mxu0
    %v684 = vsel %vm146, %v682, -inf
    %685 = vmax.xlane.f32.xlu0 %v684
    %v686 = vpop.xlane.xlu0 %685
    %v687 = vsub.f32 %v682, %v686
    %v688 = vmul.f32 %v687, 1.442695
    %v689 = vpow.pop %v688
    %v690 = vsel %vm146, %v689, 0.0
    %691 = vadd.xlane.f32.xlu0 %v690
    %v692 = vpop.xlane.xlu0 %691
    %v693 = vrcp.pop %v692
    %v694 = vmul.f32 %v692, %v693
    %v695 = vsub.f32 1.0, %v694
    %v696 = vmul.f32 %v693, %v695
    %v697 = vadd.f32 %v693, %v696
    %vm698 = vweird.f32 %v692
    %vm699 = vweird.f32 %v693
    %vm700 = vmor %vm698, %vm699
    %v701 = vsel %vm700, %v693, %v697
    %v702 = vand.u32 2147483647, %v692
    %vm703 = vcmp.eq.f32.partialorder %v702, 8.507059e+37
    %v704 = vand.u32 %v692, 2147483648
    %v705 = vor.u32 1.1754944e-38, %v704
    %v706 = vsel %vm703, %v705, %v701
    %v707 = vmul.f32 %v689, %v706
    %708 = vrot.lane.b32.xlu0 %v650, 64
    %v709 = vpop.permute.xlu0 %708
    %v712 = vsel %vm146, %v707, 0
    %714 = vmatpush.msra.mxu0 0.0
    %715 = vmatpush.msra.mxu0 0.0
    %716 = vmatpush.msra.mxu0 0.0
    %717 = vmatpush.msra.mxu0 0.0
    %718 = vmatpush.msra.mxu0 0.0
    %719 = vmatpush.msra.mxu0 0.0
    %720 = vmatpush.msra.mxu0 0.0
    %721 = vmatpush.msra.mxu0 0.0
    %722 = vmatpush.msra.mxu0 0.0
    %723 = vmatpush.msra.mxu0 0.0
    %724 = vmatpush.msra.mxu0 0.0
    %725 = vmatpush.msra.mxu0 0.0
    %726 = vmatpush.msra.mxu0 0.0
    %727 = vmatpush.msra.mxu0 0.0
    %728 = vmatpush.msra.mxu0 0.0
    %729 = vmatpush.msra.mxu0 %v709
    %730 = vmatmul.f32.gmra.mxu0 %v712
    %v731 = vpop.f32.mrf.mxu0
    %v732 = vadd.f32 0.0, %v731
    %733 = vdwg.mxu0
    %734 = vrot.lane.b32.xlu0 %v652, 120
    %v735 = vpop.permute.xlu0 %734
    %736 = vrot.lane.b32.xlu0 %v650, 88
    %v737 = vpop.permute.xlu0 %736
    %v738 = vsel %vm146, %v735, 0
    %v740 = vsel %vm146, %v737, 0
    %742 = vmatpush.xpose.msra.mxu0 0.0
    %743 = vmatpush.xpose.msra.mxu0 0.0
    %744 = vmatpush.xpose.msra.mxu0 0.0
    %745 = vmatpush.xpose.msra.mxu0 0.0
    %746 = vmatpush.xpose.msra.mxu0 0.0
    %747 = vmatpush.xpose.msra.mxu0 0.0
    %748 = vmatpush.xpose.msra.mxu0 0.0
    %749 = vmatpush.xpose.msra.mxu0 0.0
    %750 = vmatpush.xpose.msra.mxu0 0.0
    %751 = vmatpush.xpose.msra.mxu0 0.0
    %752 = vmatpush.xpose.msra.mxu0 0.0
    %753 = vmatpush.xpose.msra.mxu0 0.0
    %754 = vmatpush.xpose.msra.mxu0 0.0
    %755 = vmatpush.xpose.msra.mxu0 0.0
    %756 = vmatpush.xpose.msra.mxu0 0.0
    %757 = vmatpush.xpose.msra.mxu0 %v740
    %758 = vmatmul.f32.gmra.mxu0 %v738
    %v759 = vpop.f32.mrf.mxu0
    %v760 = vadd.f32 %v654, %v759
    %761 = vdwg.mxu0
    %v762 = vsel %vm146, %v760, -inf
    %763 = vmax.xlane.f32.xlu0 %v762
    %v764 = vpop.xlane.xlu0 %763
    %v765 = vsub.f32 %v760, %v764
    %v766 = vmul.f32 %v765, 1.442695
    %v767 = vpow.pop %v766
    %v768 = vsel %vm146, %v767, 0.0
    %769 = vadd.xlane.f32.xlu0 %v768
    %v770 = vpop.xlane.xlu0 %769
    %v771 = vrcp.pop %v770
    %v772 = vmul.f32 %v770, %v771
    %v773 = vsub.f32 1.0, %v772
    %v774 = vmul.f32 %v771, %v773
    %v775 = vadd.f32 %v771, %v774
    %vm776 = vweird.f32 %v770
    %vm777 = vweird.f32 %v771
    %vm778 = vmor %vm776, %vm777
    %v779 = vsel %vm778, %v771, %v775
    %v780 = vand.u32 2147483647, %v770
    %vm781 = vcmp.eq.f32.partialorder %v780, 8.507059e+37
    %v782 = vand.u32 %v770, 2147483648
    %v783 = vor.u32 1.1754944e-38, %v782
    %v784 = vsel %vm781, %v783, %v779
    %v785 = vmul.f32 %v767, %v784
    %786 = vrot.lane.b32.xlu0 %v650, 56
    %v787 = vpop.permute.xlu0 %786
    %v790 = vsel %vm146, %v785, 0
    %792 = vmatpush.msra.mxu0 0.0
    %793 = vmatpush.msra.mxu0 0.0
    %794 = vmatpush.msra.mxu0 0.0
    %795 = vmatpush.msra.mxu0 0.0
    %796 = vmatpush.msra.mxu0 0.0
    %797 = vmatpush.msra.mxu0 0.0
    %798 = vmatpush.msra.mxu0 0.0
    %799 = vmatpush.msra.mxu0 0.0
    %800 = vmatpush.msra.mxu0 0.0
    %801 = vmatpush.msra.mxu0 0.0
    %802 = vmatpush.msra.mxu0 0.0
    %803 = vmatpush.msra.mxu0 0.0
    %804 = vmatpush.msra.mxu0 0.0
    %805 = vmatpush.msra.mxu0 0.0
    %806 = vmatpush.msra.mxu0 0.0
    %807 = vmatpush.msra.mxu0 %v787
    %808 = vmatmul.f32.gmra.mxu0 %v790
    %v809 = vpop.f32.mrf.mxu0
    %v810 = vadd.f32 0.0, %v809
    %811 = vdwg.mxu0
    %812 = vrot.lane.b32.xlu0 %v652, 112
    %v813 = vpop.permute.xlu0 %812
    %814 = vrot.lane.b32.xlu0 %v650, 80
    %v815 = vpop.permute.xlu0 %814
    %v816 = vsel %vm146, %v813, 0
    %v818 = vsel %vm146, %v815, 0
    %820 = vmatpush.xpose.msra.mxu0 0.0
    %821 = vmatpush.xpose.msra.mxu0 0.0
    %822 = vmatpush.xpose.msra.mxu0 0.0
    %823 = vmatpush.xpose.msra.mxu0 0.0
    %824 = vmatpush.xpose.msra.mxu0 0.0
    %825 = vmatpush.xpose.msra.mxu0 0.0
    %826 = vmatpush.xpose.msra.mxu0 0.0
    %827 = vmatpush.xpose.msra.mxu0 0.0
    %828 = vmatpush.xpose.msra.mxu0 0.0
    %829 = vmatpush.xpose.msra.mxu0 0.0
    %830 = vmatpush.xpose.msra.mxu0 0.0
    %831 = vmatpush.xpose.msra.mxu0 0.0
    %832 = vmatpush.xpose.msra.mxu0 0.0
    %833 = vmatpush.xpose.msra.mxu0 0.0
    %834 = vmatpush.xpose.msra.mxu0 0.0
    %835 = vmatpush.xpose.msra.mxu0 %v818
    %836 = vmatmul.f32.gmra.mxu0 %v816
    %v837 = vpop.f32.mrf.mxu0
    %v838 = vadd.f32 %v654, %v837
    %839 = vdwg.mxu0
    %v840 = vsel %vm146, %v838, -inf
    %841 = vmax.xlane.f32.xlu0 %v840
    %v842 = vpop.xlane.xlu0 %841
    %v843 = vsub.f32 %v838, %v842
    %v844 = vmul.f32 %v843, 1.442695
    %v845 = vpow.pop %v844
    %v846 = vsel %vm146, %v845, 0.0
    %847 = vadd.xlane.f32.xlu0 %v846
    %v848 = vpop.xlane.xlu0 %847
    %v849 = vrcp.pop %v848
    %v850 = vmul.f32 %v848, %v849
    %v851 = vsub.f32 1.0, %v850
    %v852 = vmul.f32 %v849, %v851
    %v853 = vadd.f32 %v849, %v852
    %vm854 = vweird.f32 %v848
    %vm855 = vweird.f32 %v849
    %vm856 = vmor %vm854, %vm855
    %v857 = vsel %vm856, %v849, %v853
    %v858 = vand.u32 2147483647, %v848
    %vm859 = vcmp.eq.f32.partialorder %v858, 8.507059e+37
    %v860 = vand.u32 %v848, 2147483648
    %v861 = vor.u32 1.1754944e-38, %v860
    %v862 = vsel %vm859, %v861, %v857
    %v863 = vmul.f32 %v845, %v862
    %864 = vrot.lane.b32.xlu0 %v650, 48
    %v865 = vpop.permute.xlu0 %864
    %v868 = vsel %vm146, %v863, 0
    %870 = vmatpush.msra.mxu0 0.0
    %871 = vmatpush.msra.mxu0 0.0
    %872 = vmatpush.msra.mxu0 0.0
    %873 = vmatpush.msra.mxu0 0.0
    %874 = vmatpush.msra.mxu0 0.0
    %875 = vmatpush.msra.mxu0 0.0
    %876 = vmatpush.msra.mxu0 0.0
    %877 = vmatpush.msra.mxu0 0.0
    %878 = vmatpush.msra.mxu0 0.0
    %879 = vmatpush.msra.mxu0 0.0
    %880 = vmatpush.msra.mxu0 0.0
    %881 = vmatpush.msra.mxu0 0.0
    %882 = vmatpush.msra.mxu0 0.0
    %883 = vmatpush.msra.mxu0 0.0
    %884 = vmatpush.msra.mxu0 0.0
    %885 = vmatpush.msra.mxu0 %v865
    %886 = vmatmul.f32.gmra.mxu0 %v868
    %v887 = vpop.f32.mrf.mxu0
    %v888 = vadd.f32 0.0, %v887
    %889 = vdwg.mxu0
    %890 = vrot.lane.b32.xlu0 %v652, 104
    %v891 = vpop.permute.xlu0 %890
    %892 = vrot.lane.b32.xlu0 %v650, 72
    %v893 = vpop.permute.xlu0 %892
    %v894 = vsel %vm146, %v891, 0
    %v896 = vsel %vm146, %v893, 0
    %898 = vmatpush.xpose.msra.mxu0 0.0
    %899 = vmatpush.xpose.msra.mxu0 0.0
    %900 = vmatpush.xpose.msra.mxu0 0.0
    %901 = vmatpush.xpose.msra.mxu0 0.0
    %902 = vmatpush.xpose.msra.mxu0 0.0
    %903 = vmatpush.xpose.msra.mxu0 0.0
    %904 = vmatpush.xpose.msra.mxu0 0.0
    %905 = vmatpush.xpose.msra.mxu0 0.0
    %906 = vmatpush.xpose.msra.mxu0 0.0
    %907 = vmatpush.xpose.msra.mxu0 0.0
    %908 = vmatpush.xpose.msra.mxu0 0.0
    %909 = vmatpush.xpose.msra.mxu0 0.0
    %910 = vmatpush.xpose.msra.mxu0 0.0
    %911 = vmatpush.xpose.msra.mxu0 0.0
    %912 = vmatpush.xpose.msra.mxu0 0.0
    %913 = vmatpush.xpose.msra.mxu0 %v896
    %914 = vmatmul.f32.gmra.mxu0 %v894
    %v915 = vpop.f32.mrf.mxu0
    %v916 = vadd.f32 %v654, %v915
    %917 = vdwg.mxu0
    %v918 = vsel %vm146, %v916, -inf
    %919 = vmax.xlane.f32.xlu0 %v918
    %v920 = vpop.xlane.xlu0 %919
    %v921 = vsub.f32 %v916, %v920
    %v922 = vmul.f32 %v921, 1.442695
    %v923 = vpow.pop %v922
    %v924 = vsel %vm146, %v923, 0.0
    %925 = vadd.xlane.f32.xlu0 %v924
    %v926 = vpop.xlane.xlu0 %925
    %v927 = vrcp.pop %v926
    %v928 = vmul.f32 %v926, %v927
    %v929 = vsub.f32 1.0, %v928
    %v930 = vmul.f32 %v927, %v929
    %v931 = vadd.f32 %v927, %v930
    %vm932 = vweird.f32 %v926
    %vm933 = vweird.f32 %v927
    %vm934 = vmor %vm932, %vm933
    %v935 = vsel %vm934, %v927, %v931
    %v936 = vand.u32 2147483647, %v926
    %vm937 = vcmp.eq.f32.partialorder %v936, 8.507059e+37
    %v938 = vand.u32 %v926, 2147483648
    %v939 = vor.u32 1.1754944e-38, %v938
    %v940 = vsel %vm937, %v939, %v935
    %v941 = vmul.f32 %v923, %v940
    %942 = vrot.lane.b32.xlu0 %v650, 40
    %v943 = vpop.permute.xlu0 %942
    %v946 = vsel %vm146, %v941, 0
    %948 = vmatpush.msra.mxu0 0.0
    %949 = vmatpush.msra.mxu0 0.0
    %950 = vmatpush.msra.mxu0 0.0
    %951 = vmatpush.msra.mxu0 0.0
    %952 = vmatpush.msra.mxu0 0.0
    %953 = vmatpush.msra.mxu0 0.0
    %954 = vmatpush.msra.mxu0 0.0
    %955 = vmatpush.msra.mxu0 0.0
    %956 = vmatpush.msra.mxu0 0.0
    %957 = vmatpush.msra.mxu0 0.0
    %958 = vmatpush.msra.mxu0 0.0
    %959 = vmatpush.msra.mxu0 0.0
    %960 = vmatpush.msra.mxu0 0.0
    %961 = vmatpush.msra.mxu0 0.0
    %962 = vmatpush.msra.mxu0 0.0
    %963 = vmatpush.msra.mxu0 %v943
    %964 = vmatmul.f32.gmra.mxu0 %v946
    %v965 = vpop.f32.mrf.mxu0
    %v966 = vadd.f32 0.0, %v965
    %967 = vdwg.mxu0
    %969 = vrot.lane.b32.xlu0 %v810, 8
    %v970 = vpop.permute.xlu0 %969
    %973 = vrot.lane.b32.xlu0 %v888, 16
    %v974 = vpop.permute.xlu0 %973
    %977 = vrot.lane.b32.xlu0 %v966, 24
    %v978 = vpop.permute.xlu0 %977
    %v980 = vsel %vm146, %v732, %v970
    %v981 = vsel %vm469, %v980, %v974
    %v982 = vsel %vm471, %v981, %v978
    %v984 = vsel %vm115, %v982, 0
    %986 = vmatpush.msra.mxu0 0.0
    %987 = vmatpush.msra.mxu0 0.0
    %988 = vmatpush.msra.mxu0 0.0
    %989 = vmatpush.msra.mxu0 0.0
    %990 = vmatpush.msra.mxu0 0.0
    %991 = vmatpush.msra.mxu0 0.0
    %992 = vmatpush.msra.mxu0 0.0
    %993 = vmatpush.msra.mxu0 0.0
    %994 = vmatpush.msra.mxu0 0.0
    %995 = vmatpush.msra.mxu0 0.0
    %996 = vmatpush.msra.mxu0 0.0
    %997 = vmatpush.msra.mxu0 0.0
    %998 = vmatpush.msra.mxu0 %v88
    %999 = vmatpush.msra.mxu0 %v87
    %1000 = vmatpush.msra.mxu0 %v86
    %1001 = vmatpush.msra.mxu0 %v85
    %1002 = vmatmul.f32.gmra.mxu0 %v984
    %v1003 = vpop.f32.mrf.mxu0
    %v1004 = vadd.f32 %v474, %v1003
    %1005 = vdwg.mxu0
    %v1006 = vadd.f32 %v624, %v1004
    %v1007 = vsel %vm115, %v1006, 0.0
    %1008 = vadd.xlane.f32.xlu0 %v1007
    %v1009 = vpop.xlane.xlu0 %1008
    %v1010 = vmul.f32 %v1009, %v509
    %v1011 = vsub.f32 %v1006, %v1010
    %v1012 = vmul.f32 %v1011, %v1011
    %v1013 = vsel %vm115, %v1012, 0.0
    %1014 = vadd.xlane.f32.xlu0 %v1013
    %v1015 = vpop.xlane.xlu0 %1014
    %v1016 = vmul.f32 %v1015, %v509
    %v1017 = vadd.f32 %v1016, 1e-05
    %v1018 = vrsqrt.pop %v1017
    %v1019 = vmul.f32 %v1018, %v1017
    %v1020 = vmul.f32 %v1019, %v1018
    %v1021 = vmul.f32 0.5, %v1020
    %v1022 = vsub.f32 1.5, %v1021
    %v1023 = vmul.f32 %v1018, %v1022
    %vm1024 = vweird.f32 %v1017
    %vm1025 = vweird.f32 %v1018
    %vm1026 = vmor %vm1024, %vm1025
    %v1027 = vsel %vm1026, %v1018, %v1023
    %v1028 = vmul.f32 %v1011, %v1027
    %v1029 = vmul.f32 %v1028, %v530
    %v1030 = vadd.f32 %v1029, %v534
    %v1032 = vsel %vm115, %v1030, 0
    %1034 = vmatpush.msra.mxu0 0.0
    %1035 = vmatpush.msra.mxu0 0.0
    %1036 = vmatpush.msra.mxu0 0.0
    %1037 = vmatpush.msra.mxu0 0.0
    %1038 = vmatpush.msra.mxu0 0.0
    %1039 = vmatpush.msra.mxu0 0.0
    %1040 = vmatpush.msra.mxu0 0.0
    %1041 = vmatpush.msra.mxu0 0.0
    %1042 = vmatpush.msra.mxu0 0.0
    %1043 = vmatpush.msra.mxu0 0.0
    %1044 = vmatpush.msra.mxu0 0.0
    %1045 = vmatpush.msra.mxu0 0.0
    %1046 = vmatpush.msra.mxu0 %v95
    %1047 = vmatpush.msra.mxu0 %v94
    %1048 = vmatpush.msra.mxu0 %v93
    %1049 = vmatpush.msra.mxu0 %v92
    %1050 = vmatmul.f32.gmra.mxu0 %v1032
    %v1051 = vpop.f32.mrf.mxu0
    %v1052 = vadd.f32 %v538, %v1051
    %1053 = vdwg.mxu0
    %v1054 = vmax.f32 %v1052, 0.0
    %v1056 = vsel %vm567, %v1054, 0
    %1058 = vmatpush.msra.mxu0 0.0
    %1059 = vmatpush.msra.mxu0 0.0
    %1060 = vmatpush.msra.mxu0 0.0
    %1061 = vmatpush.msra.mxu0 0.0
    %1062 = vmatpush.msra.mxu0 0.0
    %1063 = vmatpush.msra.mxu0 0.0
    %1064 = vmatpush.msra.mxu0 0.0
    %1065 = vmatpush.msra.mxu0 0.0
    %1066 = vmatpush.msra.mxu0 %v104
    %1067 = vmatpush.msra.mxu0 %v103
    %1068 = vmatpush.msra.mxu0 %v102
    %1069 = vmatpush.msra.mxu0 %v101
    %1070 = vmatpush.msra.mxu0 %v100
    %1071 = vmatpush.msra.mxu0 %v99
    %1072 = vmatpush.msra.mxu0 %v98
    %1073 = vmatpush.msra.mxu0 %v97
    %1074 = vmatmul.f32.gmra.mxu0 %v1056
    %v1075 = vpop.f32.mrf.mxu0
    %v1076 = vadd.f32 %v565, %v1075
    %1077 = vdwg.mxu0
    %v1078 = vadd.f32 %v1030, %v1076
    %v1079 = vsel %vm115, %v1078, 0.0
    %1080 = vadd.xlane.f32.xlu0 %v1079
    %v1081 = vpop.xlane.xlu0 %1080
    %v1082 = vmul.f32 %v1081, %v509
    %v1083 = vsub.f32 %v1078, %v1082
    %v1084 = vmul.f32 %v1083, %v1083
    %v1085 = vsel %vm115, %v1084, 0.0
    %1086 = vadd.xlane.f32.xlu0 %v1085
    %v1087 = vpop.xlane.xlu0 %1086
    %v1088 = vmul.f32 %v1087, %v509
    %v1089 = vadd.f32 %v1088, 1e-05
    %v1090 = vrsqrt.pop %v1089
    %v1091 = vmul.f32 %v1090, %v1089
    %v1092 = vmul.f32 %v1091, %v1090
    %v1093 = vmul.f32 0.5, %v1092
    %v1094 = vsub.f32 1.5, %v1093
    %v1095 = vmul.f32 %v1090, %v1094
    %vm1096 = vweird.f32 %v1089
    %vm1097 = vweird.f32 %v1090
    %vm1098 = vmor %vm1096, %vm1097
    %v1099 = vsel %vm1098, %v1090, %v1095
    %v1100 = vmul.f32 %v1083, %v1099
    %v1101 = vmul.f32 %v1100, %v615
    %v1102 = vadd.f32 %v1101, %v619
    %s1103 = scalar_lea.vmem [#allocation7], 8
    %1104 = vst.msk [vmem:[%s1103] sm:$0xff] %vm115, %v1102
    // Predicated region
    $region66: #{tpu_custom_call.1} parent=1 // pred_check
      _
    $region67: #{tpu_custom_call.1} parent=1 // pred_check_branch
      %1106 = sbr.rel (0) target = $region69
    $region68: #{tpu_custom_call.1} parent=1 // pred_region
      %1108 = vsyncadd [#allocation4], 0
      %s1109 = sshll.u32 [#allocation7], 4
      %s1110 = int_to_ptr.vmem [resolvable:$true] %s1109
      %s1111 = sshll.u32 %s14, 4
      %s1112 = int_to_ptr.hbm [resolvable:$true] %s1111
      %1117 = dma.vmem_to_hbm [thread:$0]  %s1110, 256, %s1112, [#allocation4], 128, 128, 8
    $region69: #{tpu_custom_call.1} parent=1 // pred_fallthru
      _
    // Predicated region
    $region70: #{tpu_custom_call.1} parent=1 // pred_check
      _
    $region71: #{tpu_custom_call.1} parent=1 // pred_check_branch
      %1119 = sbr.rel (0) target = $region73
    $region72: #{tpu_custom_call.1} parent=1 // pred_region
      %1121 = dma.done [#allocation4], 256
    $region73: #{tpu_custom_call.1} parent=1 // pred_fallthru
      _
    %1122 = vsyncpa [#allocation3], 1
    %1123 = vsyncpa [#allocation6], 1
    %1124 = vsyncpa [#allocation4], 1

</llo_original>
